<compile_context>
chip_gen: v7x
topology: tpu7x:2x2x1
jax: 0.10.0
libtpu: 0.0.40
codegen_flags: <defaults>
</compile_context>

<pallas_src>
import functools

import jax
import jax.numpy as jnp
from jax.experimental import pallas as pl
from jax.experimental.pallas import tpu as pltpu

# ---------------- synthetic model config (stands in for AutoConfig) ----------
VOCAB = 100
HIDDEN = 32          # config.hidden_size
N_HEADS = 4
HEAD_DIM = HIDDEN // N_HEADS
INTERMEDIATE = 64
N_LAYERS = 2
MAX_POS = 16
NUM_CLASSES = 3
LANE_PAD = 128       # lane-dense width for the classifier output store
INIT_RANGE = 0.02    # config.initializer_range
BERT_LN_EPS = 1e-12  # encoder LayerNorm eps (BERT)
FC_LN_EPS = 1e-5     # nn.LayerNorm default eps in the fc head


def _layer_norm(x, g, b, eps):
    mu = jnp.mean(x, axis=-1, keepdims=True)
    var = jnp.mean((x - mu) ** 2, axis=-1, keepdims=True)
    return (x - mu) * jax.lax.rsqrt(var + eps) * g + b


# =============== single fused Pallas kernel: the entire forward pass =========
def model_kernel(x_ref, bias_ref, embln_ref,
                 wqkv_ref, bqkv_ref, wo_ref, lvec_ref,
                 w1_ref, b1_ref, w2_ref,
                 wp_ref, hvec_ref, wc_ref, bc_ref,
                 o_ref, *, batch, seq):
    bs = batch * seq

    # embedding LayerNorm (token/position gather+add done outside the kernel)
    embln = embln_ref[...]                                     # (2, H): [gamma; beta]
    x = _layer_norm(x_ref[...], embln[0:1], embln[1:2], BERT_LN_EPS)   # (B*S, H)

    # additive key-mask bias: broadcast ONCE to the score shape (hoisted out of loops)
    bias = jnp.broadcast_to(bias_ref[...], (batch, seq, seq))          # (B, S, S)

    for l in range(N_LAYERS):        # static unroll; stacked weights resident in VMEM
        lv = lvec_ref[l]             # (6, H): bo, ln1_g, ln1_b, b2, ln2_g, ln2_b

        # fused QKV projection: ONE matmul, N=3H; 1/sqrt(head_dim) pre-folded into W_q
        qkv = jnp.dot(x, wqkv_ref[l], preferred_element_type=jnp.float32) + bqkv_ref[l]
        q3 = qkv[:, 0 * HIDDEN:1 * HIDDEN].reshape(batch, seq, HIDDEN)
        k3 = qkv[:, 1 * HIDDEN:2 * HIDDEN].reshape(batch, seq, HIDDEN)
        v3 = qkv[:, 2 * HIDDEN:3 * HIDDEN].reshape(batch, seq, HIDDEN)

        parts = []
        for h in range(N_HEADS):     # static; per-head scores / softmax / context
            sl = slice(h * HEAD_DIM, (h + 1) * HEAD_DIM)
            s = jnp.einsum('bqd,bkd->bqk', q3[..., sl], k3[..., sl],
                           preferred_element_type=jnp.float32) + bias
            s = s - jnp.max(s, axis=-1, keepdims=True)
            p = jnp.exp(s)
            p = p * pl.reciprocal(jnp.sum(p, axis=-1, keepdims=True), approx=True)
            ctx = jnp.einsum('bqk,bkd->bqd', p, v3[..., sl],
                             preferred_element_type=jnp.float32)       # (B, S, HD)
            parts.append(ctx.reshape(bs, HEAD_DIM))
        # heads concatenated on the lane axis (4*8 = 32 lanes, one vreg)
        ctx_full = jnp.concatenate(parts, axis=-1)                     # (B*S, H)
        # single output projection with the original (H, H) W_o
        attn = jnp.dot(ctx_full, wo_ref[l],
                       preferred_element_type=jnp.float32) + lv[0:1]

        h1 = _layer_norm(x + attn, lv[1:2], lv[2:3], BERT_LN_EPS)

        ff = jnp.dot(h1, w1_ref[l], preferred_element_type=jnp.float32) + b1_ref[l]
        ff = jax.nn.gelu(ff, approximate=True)
        ff = jnp.dot(ff, w2_ref[l], preferred_element_type=jnp.float32) + lv[3:4]
        x = _layer_norm(h1 + ff, lv[4:5], lv[5:6], BERT_LN_EPS)

    # Pooler + fc head are row-wise: apply to the WHOLE slab so the store is a
    # dense (B*S, 128) vst; the wrapper picks the first-token row of each sequence
    # (BertPool: hidden_states.transpose(1,2)[:, :, 0] == last_hidden[:, 0, :]).
    hv = hvec_ref[...]                                         # (3, H): bp, ln_g, ln_b
    pooled = jnp.tanh(jnp.dot(x, wp_ref[...],
                              preferred_element_type=jnp.float32) + hv[0:1])
    z = _layer_norm(pooled, hv[1:2], hv[2:3], FC_LN_EPS)
    # Dropout -> identity (eval mode); classifier weights lane-padded to 128
    o_ref[...] = jnp.dot(z, wc_ref[...],
                         preferred_element_type=jnp.float32) + bc_ref[...]


# =====================  forward: glue + one fused Pallas kernel ==============
@jax.jit
def forward(input_ids, attention_mask, params):
    B, S = input_ids.shape
    # embedding gather + position add (single tiny XLA gather); LN is in-kernel
    x = (params["tok_emb"][input_ids] + params["pos_emb"][None, :S, :]).reshape(B * S, HIDDEN)
    # additive key-mask bias, computed once: (B, 1, S)
    bias = ((1.0 - attention_mask.astype(jnp.float32)) * -1e9)[:, None, :]

    kp = params["kernel"]
    args = (x, bias, kp["embln"],
            kp["wqkv"], kp["bqkv"], kp["wo"], kp["lvec"],
            kp["w1"], kp["b1"], kp["w2"],
            kp["wp"], kp["hvec"], kp["wc_pad"], kp["bc_pad"])
    vmem_spec = pl.BlockSpec(memory_space=pltpu.MemorySpace.VMEM)
    logits_all = pl.pallas_call(
        functools.partial(model_kernel, batch=B, seq=S),
        out_shape=jax.ShapeDtypeStruct((B * S, LANE_PAD), jnp.float32),
        in_specs=[vmem_spec] * len(args),
        out_specs=vmem_spec,
    )(*args)
    # first-token row of each sequence; real class lanes
    return logits_all.reshape(B, S, LANE_PAD)[:, 0, :NUM_CLASSES]


# =====================  parameter init (deterministic, synthetic) ============
def init_params(key):
    def nrm(k, shape):
        return INIT_RANGE * jax.random.normal(k, shape, jnp.float32)

    keys = iter(jax.random.split(key, 12))
    L = N_LAYERS
    p = {
        "tok_emb": nrm(next(keys), (VOCAB, HIDDEN)),
        "pos_emb": nrm(next(keys), (MAX_POS, HIDDEN)),
        "emb_ln_g": jnp.ones((1, HIDDEN), jnp.float32),
        "emb_ln_b": jnp.zeros((1, HIDDEN), jnp.float32),
        # encoder layers (stacked along a leading L axis)
        "wq": nrm(next(keys), (L, HIDDEN, HIDDEN)),
        "wk": nrm(next(keys), (L, HIDDEN, HIDDEN)),
        "wv": nrm(next(keys), (L, HIDDEN, HIDDEN)),
        "wo": nrm(next(keys), (L, HIDDEN, HIDDEN)),
        "bq": jnp.zeros((L, 1, HIDDEN), jnp.float32),
        "bk": jnp.zeros((L, 1, HIDDEN), jnp.float32),
        "bv": jnp.zeros((L, 1, HIDDEN), jnp.float32),
        "bo": jnp.zeros((L, 1, HIDDEN), jnp.float32),
        "ln1_g": jnp.ones((L, 1, HIDDEN), jnp.float32),
        "ln1_b": jnp.zeros((L, 1, HIDDEN), jnp.float32),
        "w1": nrm(next(keys), (L, HIDDEN, INTERMEDIATE)),
        "b1": jnp.zeros((L, 1, INTERMEDIATE), jnp.float32),
        "w2": nrm(next(keys), (L, INTERMEDIATE, HIDDEN)),
        "b2": jnp.zeros((L, 1, HIDDEN), jnp.float32),
        "ln2_g": jnp.ones((L, 1, HIDDEN), jnp.float32),
        "ln2_b": jnp.zeros((L, 1, HIDDEN), jnp.float32),
        # pooler (BertPool dense) + fc head (LayerNorm, Dropout(id), Linear)
        "wp": nrm(next(keys), (HIDDEN, HIDDEN)),
        "bp": jnp.zeros((1, HIDDEN), jnp.float32),
        "ln_g": jnp.ones((1, HIDDEN), jnp.float32),
        "ln_b": jnp.zeros((1, HIDDEN), jnp.float32),
        "wc": nrm(next(keys), (HIDDEN, NUM_CLASSES)),
        "bc": jnp.zeros((1, NUM_CLASSES), jnp.float32),
    }

    # ---- kernel-packed parameters (one-time host-side folds / concats) ----
    scale = 1.0 / (HEAD_DIM ** 0.5)
    p["kernel"] = {
        "embln": jnp.concatenate([p["emb_ln_g"], p["emb_ln_b"]], axis=0),          # (2, H)
        # fused QKV with the attention scale folded into the Q part
        "wqkv": jnp.concatenate([p["wq"] * scale, p["wk"], p["wv"]], axis=-1),     # (L, H, 3H)
        "bqkv": jnp.concatenate([p["bq"] * scale, p["bk"], p["bv"]], axis=-1),     # (L, 1, 3H)
        "wo": p["wo"],                                                             # (L, H, H)
        # packed per-layer bias/LN vectors: bo, ln1_g, ln1_b, b2, ln2_g, ln2_b
        "lvec": jnp.concatenate([p["bo"], p["ln1_g"], p["ln1_b"],
                                 p["b2"], p["ln2_g"], p["ln2_b"]], axis=1),        # (L, 6, H)
        "w1": p["w1"], "b1": p["b1"], "w2": p["w2"],
        "wp": p["wp"],
        # packed pooler/fc vectors: bp, ln_g, ln_b
        "hvec": jnp.concatenate([p["bp"], p["ln_g"], p["ln_b"]], axis=0),          # (3, H)
        # lane-padded classifier (zeros in padded lanes) for a lane-dense store
        "wc_pad": jnp.zeros((HIDDEN, LANE_PAD), jnp.float32).at[:, :NUM_CLASSES].set(p["wc"]),
        "bc_pad": jnp.zeros((1, LANE_PAD), jnp.float32).at[:, :NUM_CLASSES].set(p["bc"]),
    }
    return p


# =====================  pure-JAX reference for correctness ===================
def ref_forward(input_ids, attention_mask, params):
    B, S = input_ids.shape
    x = params["tok_emb"][input_ids] + params["pos_emb"][None, :S, :]
    x = _layer_norm(x, params["emb_ln_g"], params["emb_ln_b"], BERT_LN_EPS)
    mask = attention_mask.astype(jnp.float32)
    add_bias = (1.0 - mask)[:, None, None, :] * -1e9
    for l in range(N_LAYERS):
        q = (x @ params["wq"][l] + params["bq"][l]).reshape(B, S, N_HEADS, HEAD_DIM).transpose(0, 2, 1, 3)
        k = (x @ params["wk"][l] + params["bk"][l]).reshape(B, S, N_HEADS, HEAD_DIM).transpose(0, 2, 1, 3)
        v = (x @ params["wv"][l] + params["bv"][l]).reshape(B, S, N_HEADS, HEAD_DIM).transpose(0, 2, 1, 3)
        s = jnp.einsum("bhqd,bhkd->bhqk", q, k) / (HEAD_DIM ** 0.5) + add_bias
        pr = jax.nn.softmax(s, axis=-1)
        ctx = jnp.einsum("bhqk,bhkd->bhqd", pr, v).transpose(0, 2, 1, 3).reshape(B, S, HIDDEN)
        attn = ctx @ params["wo"][l] + params["bo"][l]
        h1 = _layer_norm(x + attn, params["ln1_g"][l], params["ln1_b"][l], BERT_LN_EPS)
        ff = jax.nn.gelu(h1 @ params["w1"][l] + params["b1"][l], approximate=True) @ params["w2"][l] + params["b2"][l]
        x = _layer_norm(h1 + ff, params["ln2_g"][l], params["ln2_b"][l], BERT_LN_EPS)
    first = x[:, 0, :]
    pooled = jnp.tanh(first @ params["wp"] + params["bp"])
    z = _layer_norm(pooled, params["ln_g"], params["ln_b"], FC_LN_EPS)
    return z @ params["wc"] + params["bc"]


if __name__ == "__main__":
    B, S = 2, 8
    key = jax.random.PRNGKey(0)
    k_ids, k_params = jax.random.split(key)
    input_ids = jax.random.randint(k_ids, (B, S), 0, VOCAB, dtype=jnp.int32)
    attention_mask = jnp.array(
        [[1, 1, 1, 1, 1, 1, 1, 1],
         [1, 1, 1, 1, 1, 1, 0, 0]], dtype=jnp.int32)
    params = init_params(k_params)

    out = forward(input_ids, attention_mask, params)
    out = jax.block_until_ready(out)

    ref = ref_forward(input_ids, attention_mask, params)
    assert out.shape == (B, NUM_CLASSES)
    assert jnp.allclose(out, ref, atol=1e-3, rtol=1e-3), (out, ref)
    print("KERNEL_OK")
</pallas_src>

<mosaic_0001>
module attributes {stable_mosaic.version = 11 : i64} {
  func.func @model_kernel(%arg0: memref<16x32xf32, #tpu.memory_space<vmem>>, %arg1: memref<2x1x8xf32, #tpu.memory_space<vmem>>, %arg2: memref<2x32xf32, #tpu.memory_space<vmem>>, %arg3: memref<2x32x96xf32, #tpu.memory_space<vmem>>, %arg4: memref<2x1x96xf32, #tpu.memory_space<vmem>>, %arg5: memref<2x32x32xf32, #tpu.memory_space<vmem>>, %arg6: memref<2x6x32xf32, #tpu.memory_space<vmem>>, %arg7: memref<2x32x64xf32, #tpu.memory_space<vmem>>, %arg8: memref<2x1x64xf32, #tpu.memory_space<vmem>>, %arg9: memref<2x64x32xf32, #tpu.memory_space<vmem>>, %arg10: memref<32x32xf32, #tpu.memory_space<vmem>>, %arg11: memref<3x32xf32, #tpu.memory_space<vmem>>, %arg12: memref<32x128xf32, #tpu.memory_space<vmem>>, %arg13: memref<1x128xf32, #tpu.memory_space<vmem>>, %arg14: memref<16x128xf32, #tpu.memory_space<vmem>>) attributes {dimension_semantics = [], scalar_prefetch = 0 : i64, scratch_operands = 0 : i64, tpu.core_type = #tpu.core_type<tc>} {
    %c0 = arith.constant 0 : index
    %c0_0 = arith.constant 0 : index
    %0 = vector.load %arg2[%c0, %c0_0] : memref<2x32xf32, #tpu.memory_space<vmem>>, vector<2x32xf32>
    %c0_1 = arith.constant 0 : index
    %c0_2 = arith.constant 0 : index
    %1 = vector.load %arg0[%c0_1, %c0_2] : memref<16x32xf32, #tpu.memory_space<vmem>>, vector<16x32xf32>
    %2 = vector.extract_strided_slice %0 {offsets = [0, 0], sizes = [1, 32], strides = [1, 1]} : vector<2x32xf32> to vector<1x32xf32>
    %3 = vector.extract_strided_slice %0 {offsets = [1, 0], sizes = [1, 32], strides = [1, 1]} : vector<2x32xf32> to vector<1x32xf32>
    %cst = arith.constant dense<0.000000e+00> : vector<16xf32>
    %4 = vector.multi_reduction <add>, %1, %cst [1] : vector<16x32xf32> to vector<16xf32>
    %5 = vector.shape_cast %4 : vector<16xf32> to vector<16x1xf32>
    %cst_3 = arith.constant 3.200000e+01 : f32
    %6 = vector.broadcast %cst_3 : f32 to vector<16x1xf32>
    %7 = arith.divf %5, %6 : vector<16x1xf32>
    %8 = vector.broadcast %7 : vector<16x1xf32> to vector<16x32xf32>
    %9 = arith.subf %1, %8 : vector<16x32xf32>
    %10 = arith.mulf %9, %9 : vector<16x32xf32>
    %cst_4 = arith.constant dense<0.000000e+00> : vector<16xf32>
    %11 = vector.multi_reduction <add>, %10, %cst_4 [1] : vector<16x32xf32> to vector<16xf32>
    %12 = vector.shape_cast %11 : vector<16xf32> to vector<16x1xf32>
    %cst_5 = arith.constant 3.200000e+01 : f32
    %13 = vector.broadcast %cst_5 : f32 to vector<16x1xf32>
    %14 = arith.divf %12, %13 : vector<16x1xf32>
    %15 = vector.broadcast %7 : vector<16x1xf32> to vector<16x32xf32>
    %16 = arith.subf %1, %15 : vector<16x32xf32>
    %cst_6 = arith.constant 9.99999996E-13 : f32
    %17 = vector.broadcast %cst_6 : f32 to vector<16x1xf32>
    %18 = arith.addf %14, %17 : vector<16x1xf32>
    %19 = math.rsqrt %18 : vector<16x1xf32>
    %20 = vector.broadcast %19 : vector<16x1xf32> to vector<16x32xf32>
    %21 = arith.mulf %16, %20 : vector<16x32xf32>
    %22 = vector.broadcast %2 : vector<1x32xf32> to vector<16x32xf32>
    %23 = arith.mulf %21, %22 : vector<16x32xf32>
    %24 = vector.broadcast %3 : vector<1x32xf32> to vector<16x32xf32>
    %25 = arith.addf %23, %24 : vector<16x32xf32>
    %c0_7 = arith.constant 0 : index
    %c0_8 = arith.constant 0 : index
    %c0_9 = arith.constant 0 : index
    %26 = vector.load %arg1[%c0_7, %c0_8, %c0_9] : memref<2x1x8xf32, #tpu.memory_space<vmem>>, vector<2x1x8xf32>
    %27 = vector.shape_cast %26 : vector<2x1x8xf32> to vector<2x1x8xf32>
    %28 = vector.broadcast %27 : vector<2x1x8xf32> to vector<2x8x8xf32>
    %c0_10 = arith.constant 0 : index
    %c0_11 = arith.constant 0 : index
    %c0_12 = arith.constant 0 : index
    %29 = vector.load %arg6[%c0_10, %c0_11, %c0_12] : memref<2x6x32xf32, #tpu.memory_space<vmem>>, vector<1x6x32xf32>
    %30 = vector.shape_cast %29 : vector<1x6x32xf32> to vector<6x32xf32>
    %c0_13 = arith.constant 0 : index
    %c0_14 = arith.constant 0 : index
    %c0_15 = arith.constant 0 : index
    %31 = vector.load %arg3[%c0_13, %c0_14, %c0_15] : memref<2x32x96xf32, #tpu.memory_space<vmem>>, vector<1x32x96xf32>
    %32 = vector.shape_cast %31 : vector<1x32x96xf32> to vector<32x96xf32>
    %cst_16 = arith.constant dense<0.000000e+00> : vector<16x96xf32>
    %33 = tpu.matmul %25, %32, %cst_16 {dimension_numbers = #tpu.dot_dimension_numbers<[1], [0], [0], [1], [0, 0, 1, 1], [], []>} : vector<16x32xf32>, vector<32x96xf32>, vector<16x96xf32> -> vector<16x96xf32>
    %c0_17 = arith.constant 0 : index
    %c0_18 = arith.constant 0 : index
    %c0_19 = arith.constant 0 : index
    %34 = vector.load %arg4[%c0_17, %c0_18, %c0_19] : memref<2x1x96xf32, #tpu.memory_space<vmem>>, vector<1x1x96xf32>
    %35 = vector.shape_cast %34 : vector<1x1x96xf32> to vector<1x96xf32>
    %36 = vector.broadcast %35 : vector<1x96xf32> to vector<16x96xf32>
    %37 = arith.addf %33, %36 : vector<16x96xf32>
    %38 = vector.extract_strided_slice %37 {offsets = [0, 0], sizes = [16, 32], strides = [1, 1]} : vector<16x96xf32> to vector<16x32xf32>
    %39 = vector.shape_cast %38 : vector<16x32xf32> to vector<2x8x32xf32>
    %40 = vector.extract_strided_slice %37 {offsets = [0, 32], sizes = [16, 32], strides = [1, 1]} : vector<16x96xf32> to vector<16x32xf32>
    %41 = vector.shape_cast %40 : vector<16x32xf32> to vector<2x8x32xf32>
    %42 = vector.extract_strided_slice %37 {offsets = [0, 64], sizes = [16, 32], strides = [1, 1]} : vector<16x96xf32> to vector<16x32xf32>
    %43 = vector.shape_cast %42 : vector<16x32xf32> to vector<2x8x32xf32>
    %44 = vector.extract_strided_slice %39 {offsets = [0, 0, 0], sizes = [2, 8, 8], strides = [1, 1, 1]} : vector<2x8x32xf32> to vector<2x8x8xf32>
    %45 = vector.extract_strided_slice %41 {offsets = [0, 0, 0], sizes = [2, 8, 8], strides = [1, 1, 1]} : vector<2x8x32xf32> to vector<2x8x8xf32>
    "tpu.trace_start"() <{level = 10 : i32, message = "bqd,bkd->bqk"}> : () -> ()
    %cst_20 = arith.constant dense<0.000000e+00> : vector<2x8x8xf32>
    %46 = tpu.matmul %44, %45, %cst_20 {dimension_numbers = #tpu.dot_dimension_numbers<[2], [2], [1], [1], [0, 0, 0, 1, 1, 1], [0], [0]>} : vector<2x8x8xf32>, vector<2x8x8xf32>, vector<2x8x8xf32> -> vector<2x8x8xf32>
    "tpu.trace_stop"() : () -> ()
    %47 = arith.addf %46, %28 : vector<2x8x8xf32>
    %cst_21 = arith.constant dense<0xFF800000> : vector<2x8xf32>
    %48 = vector.multi_reduction <maximumf>, %47, %cst_21 [2] : vector<2x8x8xf32> to vector<2x8xf32>
    %49 = vector.shape_cast %48 : vector<2x8xf32> to vector<2x8x1xf32>
    %50 = vector.broadcast %49 : vector<2x8x1xf32> to vector<2x8x8xf32>
    %51 = arith.subf %47, %50 : vector<2x8x8xf32>
    %52 = math.exp %51 : vector<2x8x8xf32>
    %cst_22 = arith.constant dense<0.000000e+00> : vector<2x8xf32>
    %53 = vector.multi_reduction <add>, %52, %cst_22 [2] : vector<2x8x8xf32> to vector<2x8xf32>
    %54 = vector.shape_cast %53 : vector<2x8xf32> to vector<2x8x1xf32>
    %55 = tpu.reciprocal %54 {approx = true} : vector<2x8x1xf32> -> vector<2x8x1xf32>
    %56 = vector.broadcast %55 : vector<2x8x1xf32> to vector<2x8x8xf32>
    %57 = arith.mulf %52, %56 : vector<2x8x8xf32>
    %58 = vector.extract_strided_slice %43 {offsets = [0, 0, 0], sizes = [2, 8, 8], strides = [1, 1, 1]} : vector<2x8x32xf32> to vector<2x8x8xf32>
    "tpu.trace_start"() <{level = 10 : i32, message = "bqk,bkd->bqd"}> : () -> ()
    %cst_23 = arith.constant dense<0.000000e+00> : vector<2x8x8xf32>
    %59 = tpu.matmul %57, %58, %cst_23 {dimension_numbers = #tpu.dot_dimension_numbers<[2], [1], [1], [2], [0, 0, 0, 1, 1, 2], [0], [0]>} : vector<2x8x8xf32>, vector<2x8x8xf32>, vector<2x8x8xf32> -> vector<2x8x8xf32>
    "tpu.trace_stop"() : () -> ()
    %60 = vector.shape_cast %59 : vector<2x8x8xf32> to vector<16x8xf32>
    %61 = vector.extract_strided_slice %39 {offsets = [0, 0, 8], sizes = [2, 8, 8], strides = [1, 1, 1]} : vector<2x8x32xf32> to vector<2x8x8xf32>
    %62 = vector.extract_strided_slice %41 {offsets = [0, 0, 8], sizes = [2, 8, 8], strides = [1, 1, 1]} : vector<2x8x32xf32> to vector<2x8x8xf32>
    "tpu.trace_start"() <{level = 10 : i32, message = "bqd,bkd->bqk"}> : () -> ()
    %cst_24 = arith.constant dense<0.000000e+00> : vector<2x8x8xf32>
    %63 = tpu.matmul %61, %62, %cst_24 {dimension_numbers = #tpu.dot_dimension_numbers<[2], [2], [1], [1], [0, 0, 0, 1, 1, 1], [0], [0]>} : vector<2x8x8xf32>, vector<2x8x8xf32>, vector<2x8x8xf32> -> vector<2x8x8xf32>
    "tpu.trace_stop"() : () -> ()
    %64 = arith.addf %63, %28 : vector<2x8x8xf32>
    %cst_25 = arith.constant dense<0xFF800000> : vector<2x8xf32>
    %65 = vector.multi_reduction <maximumf>, %64, %cst_25 [2] : vector<2x8x8xf32> to vector<2x8xf32>
    %66 = vector.shape_cast %65 : vector<2x8xf32> to vector<2x8x1xf32>
    %67 = vector.broadcast %66 : vector<2x8x1xf32> to vector<2x8x8xf32>
    %68 = arith.subf %64, %67 : vector<2x8x8xf32>
    %69 = math.exp %68 : vector<2x8x8xf32>
    %cst_26 = arith.constant dense<0.000000e+00> : vector<2x8xf32>
    %70 = vector.multi_reduction <add>, %69, %cst_26 [2] : vector<2x8x8xf32> to vector<2x8xf32>
    %71 = vector.shape_cast %70 : vector<2x8xf32> to vector<2x8x1xf32>
    %72 = tpu.reciprocal %71 {approx = true} : vector<2x8x1xf32> -> vector<2x8x1xf32>
    %73 = vector.broadcast %72 : vector<2x8x1xf32> to vector<2x8x8xf32>
    %74 = arith.mulf %69, %73 : vector<2x8x8xf32>
    %75 = vector.extract_strided_slice %43 {offsets = [0, 0, 8], sizes = [2, 8, 8], strides = [1, 1, 1]} : vector<2x8x32xf32> to vector<2x8x8xf32>
    "tpu.trace_start"() <{level = 10 : i32, message = "bqk,bkd->bqd"}> : () -> ()
    %cst_27 = arith.constant dense<0.000000e+00> : vector<2x8x8xf32>
    %76 = tpu.matmul %74, %75, %cst_27 {dimension_numbers = #tpu.dot_dimension_numbers<[2], [1], [1], [2], [0, 0, 0, 1, 1, 2], [0], [0]>} : vector<2x8x8xf32>, vector<2x8x8xf32>, vector<2x8x8xf32> -> vector<2x8x8xf32>
    "tpu.trace_stop"() : () -> ()
    %77 = vector.shape_cast %76 : vector<2x8x8xf32> to vector<16x8xf32>
    %78 = vector.extract_strided_slice %39 {offsets = [0, 0, 16], sizes = [2, 8, 8], strides = [1, 1, 1]} : vector<2x8x32xf32> to vector<2x8x8xf32>
    %79 = vector.extract_strided_slice %41 {offsets = [0, 0, 16], sizes = [2, 8, 8], strides = [1, 1, 1]} : vector<2x8x32xf32> to vector<2x8x8xf32>
    "tpu.trace_start"() <{level = 10 : i32, message = "bqd,bkd->bqk"}> : () -> ()
    %cst_28 = arith.constant dense<0.000000e+00> : vector<2x8x8xf32>
    %80 = tpu.matmul %78, %79, %cst_28 {dimension_numbers = #tpu.dot_dimension_numbers<[2], [2], [1], [1], [0, 0, 0, 1, 1, 1], [0], [0]>} : vector<2x8x8xf32>, vector<2x8x8xf32>, vector<2x8x8xf32> -> vector<2x8x8xf32>
    "tpu.trace_stop"() : () -> ()
    %81 = arith.addf %80, %28 : vector<2x8x8xf32>
    %cst_29 = arith.constant dense<0xFF800000> : vector<2x8xf32>
    %82 = vector.multi_reduction <maximumf>, %81, %cst_29 [2] : vector<2x8x8xf32> to vector<2x8xf32>
    %83 = vector.shape_cast %82 : vector<2x8xf32> to vector<2x8x1xf32>
    %84 = vector.broadcast %83 : vector<2x8x1xf32> to vector<2x8x8xf32>
    %85 = arith.subf %81, %84 : vector<2x8x8xf32>
    %86 = math.exp %85 : vector<2x8x8xf32>
    %cst_30 = arith.constant dense<0.000000e+00> : vector<2x8xf32>
    %87 = vector.multi_reduction <add>, %86, %cst_30 [2] : vector<2x8x8xf32> to vector<2x8xf32>
    %88 = vector.shape_cast %87 : vector<2x8xf32> to vector<2x8x1xf32>
    %89 = tpu.reciprocal %88 {approx = true} : vector<2x8x1xf32> -> vector<2x8x1xf32>
    %90 = vector.broadcast %89 : vector<2x8x1xf32> to vector<2x8x8xf32>
    %91 = arith.mulf %86, %90 : vector<2x8x8xf32>
    %92 = vector.extract_strided_slice %43 {offsets = [0, 0, 16], sizes = [2, 8, 8], strides = [1, 1, 1]} : vector<2x8x32xf32> to vector<2x8x8xf32>
    "tpu.trace_start"() <{level = 10 : i32, message = "bqk,bkd->bqd"}> : () -> ()
    %cst_31 = arith.constant dense<0.000000e+00> : vector<2x8x8xf32>
    %93 = tpu.matmul %91, %92, %cst_31 {dimension_numbers = #tpu.dot_dimension_numbers<[2], [1], [1], [2], [0, 0, 0, 1, 1, 2], [0], [0]>} : vector<2x8x8xf32>, vector<2x8x8xf32>, vector<2x8x8xf32> -> vector<2x8x8xf32>
    "tpu.trace_stop"() : () -> ()
    %94 = vector.shape_cast %93 : vector<2x8x8xf32> to vector<16x8xf32>
    %95 = vector.extract_strided_slice %39 {offsets = [0, 0, 24], sizes = [2, 8, 8], strides = [1, 1, 1]} : vector<2x8x32xf32> to vector<2x8x8xf32>
    %96 = vector.extract_strided_slice %41 {offsets = [0, 0, 24], sizes = [2, 8, 8], strides = [1, 1, 1]} : vector<2x8x32xf32> to vector<2x8x8xf32>
    "tpu.trace_start"() <{level = 10 : i32, message = "bqd,bkd->bqk"}> : () -> ()
    %cst_32 = arith.constant dense<0.000000e+00> : vector<2x8x8xf32>
    %97 = tpu.matmul %95, %96, %cst_32 {dimension_numbers = #tpu.dot_dimension_numbers<[2], [2], [1], [1], [0, 0, 0, 1, 1, 1], [0], [0]>} : vector<2x8x8xf32>, vector<2x8x8xf32>, vector<2x8x8xf32> -> vector<2x8x8xf32>
    "tpu.trace_stop"() : () -> ()
    %98 = arith.addf %97, %28 : vector<2x8x8xf32>
    %cst_33 = arith.constant dense<0xFF800000> : vector<2x8xf32>
    %99 = vector.multi_reduction <maximumf>, %98, %cst_33 [2] : vector<2x8x8xf32> to vector<2x8xf32>
    %100 = vector.shape_cast %99 : vector<2x8xf32> to vector<2x8x1xf32>
    %101 = vector.broadcast %100 : vector<2x8x1xf32> to vector<2x8x8xf32>
    %102 = arith.subf %98, %101 : vector<2x8x8xf32>
    %103 = math.exp %102 : vector<2x8x8xf32>
    %cst_34 = arith.constant dense<0.000000e+00> : vector<2x8xf32>
    %104 = vector.multi_reduction <add>, %103, %cst_34 [2] : vector<2x8x8xf32> to vector<2x8xf32>
    %105 = vector.shape_cast %104 : vector<2x8xf32> to vector<2x8x1xf32>
    %106 = tpu.reciprocal %105 {approx = true} : vector<2x8x1xf32> -> vector<2x8x1xf32>
    %107 = vector.broadcast %106 : vector<2x8x1xf32> to vector<2x8x8xf32>
    %108 = arith.mulf %103, %107 : vector<2x8x8xf32>
    %109 = vector.extract_strided_slice %43 {offsets = [0, 0, 24], sizes = [2, 8, 8], strides = [1, 1, 1]} : vector<2x8x32xf32> to vector<2x8x8xf32>
    "tpu.trace_start"() <{level = 10 : i32, message = "bqk,bkd->bqd"}> : () -> ()
    %cst_35 = arith.constant dense<0.000000e+00> : vector<2x8x8xf32>
    %110 = tpu.matmul %108, %109, %cst_35 {dimension_numbers = #tpu.dot_dimension_numbers<[2], [1], [1], [2], [0, 0, 0, 1, 1, 2], [0], [0]>} : vector<2x8x8xf32>, vector<2x8x8xf32>, vector<2x8x8xf32> -> vector<2x8x8xf32>
    "tpu.trace_stop"() : () -> ()
    %111 = vector.shape_cast %110 : vector<2x8x8xf32> to vector<16x8xf32>
    %112 = tpu.concatenate %60, %77, %94, %111 in 1 : vector<16x8xf32>, vector<16x8xf32>, vector<16x8xf32>, vector<16x8xf32> -> vector<16x32xf32>
    %c0_36 = arith.constant 0 : index
    %c0_37 = arith.constant 0 : index
    %c0_38 = arith.constant 0 : index
    %113 = vector.load %arg5[%c0_36, %c0_37, %c0_38] : memref<2x32x32xf32, #tpu.memory_space<vmem>>, vector<1x32x32xf32>
    %114 = vector.shape_cast %113 : vector<1x32x32xf32> to vector<32x32xf32>
    %cst_39 = arith.constant dense<0.000000e+00> : vector<16x32xf32>
    %115 = tpu.matmul %112, %114, %cst_39 {dimension_numbers = #tpu.dot_dimension_numbers<[1], [0], [0], [1], [0, 0, 1, 1], [], []>} : vector<16x32xf32>, vector<32x32xf32>, vector<16x32xf32> -> vector<16x32xf32>
    %116 = vector.extract_strided_slice %30 {offsets = [0, 0], sizes = [1, 32], strides = [1, 1]} : vector<6x32xf32> to vector<1x32xf32>
    %117 = vector.broadcast %116 : vector<1x32xf32> to vector<16x32xf32>
    %118 = arith.addf %115, %117 : vector<16x32xf32>
    %119 = arith.addf %25, %118 : vector<16x32xf32>
    %120 = vector.extract_strided_slice %30 {offsets = [1, 0], sizes = [1, 32], strides = [1, 1]} : vector<6x32xf32> to vector<1x32xf32>
    %121 = vector.extract_strided_slice %30 {offsets = [2, 0], sizes = [1, 32], strides = [1, 1]} : vector<6x32xf32> to vector<1x32xf32>
    %cst_40 = arith.constant dense<0.000000e+00> : vector<16xf32>
    %122 = vector.multi_reduction <add>, %119, %cst_40 [1] : vector<16x32xf32> to vector<16xf32>
    %123 = vector.shape_cast %122 : vector<16xf32> to vector<16x1xf32>
    %cst_41 = arith.constant 3.200000e+01 : f32
    %124 = vector.broadcast %cst_41 : f32 to vector<16x1xf32>
    %125 = arith.divf %123, %124 : vector<16x1xf32>
    %126 = vector.broadcast %125 : vector<16x1xf32> to vector<16x32xf32>
    %127 = arith.subf %119, %126 : vector<16x32xf32>
    %128 = arith.mulf %127, %127 : vector<16x32xf32>
    %cst_42 = arith.constant dense<0.000000e+00> : vector<16xf32>
    %129 = vector.multi_reduction <add>, %128, %cst_42 [1] : vector<16x32xf32> to vector<16xf32>
    %130 = vector.shape_cast %129 : vector<16xf32> to vector<16x1xf32>
    %cst_43 = arith.constant 3.200000e+01 : f32
    %131 = vector.broadcast %cst_43 : f32 to vector<16x1xf32>
    %132 = arith.divf %130, %131 : vector<16x1xf32>
    %133 = vector.broadcast %125 : vector<16x1xf32> to vector<16x32xf32>
    %134 = arith.subf %119, %133 : vector<16x32xf32>
    %cst_44 = arith.constant 9.99999996E-13 : f32
    %135 = vector.broadcast %cst_44 : f32 to vector<16x1xf32>
    %136 = arith.addf %132, %135 : vector<16x1xf32>
    %137 = math.rsqrt %136 : vector<16x1xf32>
    %138 = vector.broadcast %137 : vector<16x1xf32> to vector<16x32xf32>
    %139 = arith.mulf %134, %138 : vector<16x32xf32>
    %140 = vector.broadcast %120 : vector<1x32xf32> to vector<16x32xf32>
    %141 = arith.mulf %139, %140 : vector<16x32xf32>
    %142 = vector.broadcast %121 : vector<1x32xf32> to vector<16x32xf32>
    %143 = arith.addf %141, %142 : vector<16x32xf32>
    %c0_45 = arith.constant 0 : index
    %c0_46 = arith.constant 0 : index
    %c0_47 = arith.constant 0 : index
    %144 = vector.load %arg7[%c0_45, %c0_46, %c0_47] : memref<2x32x64xf32, #tpu.memory_space<vmem>>, vector<1x32x64xf32>
    %145 = vector.shape_cast %144 : vector<1x32x64xf32> to vector<32x64xf32>
    %cst_48 = arith.constant dense<0.000000e+00> : vector<16x64xf32>
    %146 = tpu.matmul %143, %145, %cst_48 {dimension_numbers = #tpu.dot_dimension_numbers<[1], [0], [0], [1], [0, 0, 1, 1], [], []>} : vector<16x32xf32>, vector<32x64xf32>, vector<16x64xf32> -> vector<16x64xf32>
    %c0_49 = arith.constant 0 : index
    %c0_50 = arith.constant 0 : index
    %c0_51 = arith.constant 0 : index
    %147 = vector.load %arg8[%c0_49, %c0_50, %c0_51] : memref<2x1x64xf32, #tpu.memory_space<vmem>>, vector<1x1x64xf32>
    %148 = vector.shape_cast %147 : vector<1x1x64xf32> to vector<1x64xf32>
    %149 = vector.broadcast %148 : vector<1x64xf32> to vector<16x64xf32>
    %150 = arith.addf %146, %149 : vector<16x64xf32>
    %151 = arith.mulf %150, %150 : vector<16x64xf32>
    %152 = arith.mulf %150, %151 : vector<16x64xf32>
    %cst_52 = arith.constant 4.471500e-02 : f32
    %153 = vector.broadcast %cst_52 : f32 to vector<16x64xf32>
    %154 = arith.mulf %153, %152 : vector<16x64xf32>
    %155 = arith.addf %150, %154 : vector<16x64xf32>
    %cst_53 = arith.constant 0.797884583 : f32
    %156 = vector.broadcast %cst_53 : f32 to vector<16x64xf32>
    %157 = arith.mulf %156, %155 : vector<16x64xf32>
    %158 = math.tanh %157 : vector<16x64xf32>
    %cst_54 = arith.constant 1.000000e+00 : f32
    %159 = vector.broadcast %cst_54 : f32 to vector<16x64xf32>
    %160 = arith.addf %159, %158 : vector<16x64xf32>
    %cst_55 = arith.constant 5.000000e-01 : f32
    %161 = vector.broadcast %cst_55 : f32 to vector<16x64xf32>
    %162 = arith.mulf %161, %160 : vector<16x64xf32>
    %163 = arith.mulf %150, %162 : vector<16x64xf32>
    %c0_56 = arith.constant 0 : index
    %c0_57 = arith.constant 0 : index
    %c0_58 = arith.constant 0 : index
    %164 = vector.load %arg9[%c0_56, %c0_57, %c0_58] : memref<2x64x32xf32, #tpu.memory_space<vmem>>, vector<1x64x32xf32>
    %165 = vector.shape_cast %164 : vector<1x64x32xf32> to vector<64x32xf32>
    %cst_59 = arith.constant dense<0.000000e+00> : vector<16x32xf32>
    %166 = tpu.matmul %163, %165, %cst_59 {dimension_numbers = #tpu.dot_dimension_numbers<[1], [0], [0], [1], [0, 0, 1, 1], [], []>} : vector<16x64xf32>, vector<64x32xf32>, vector<16x32xf32> -> vector<16x32xf32>
    %167 = vector.extract_strided_slice %30 {offsets = [3, 0], sizes = [1, 32], strides = [1, 1]} : vector<6x32xf32> to vector<1x32xf32>
    %168 = vector.broadcast %167 : vector<1x32xf32> to vector<16x32xf32>
    %169 = arith.addf %166, %168 : vector<16x32xf32>
    %170 = arith.addf %143, %169 : vector<16x32xf32>
    %171 = vector.extract_strided_slice %30 {offsets = [4, 0], sizes = [1, 32], strides = [1, 1]} : vector<6x32xf32> to vector<1x32xf32>
    %172 = vector.extract_strided_slice %30 {offsets = [5, 0], sizes = [1, 32], strides = [1, 1]} : vector<6x32xf32> to vector<1x32xf32>
    %cst_60 = arith.constant dense<0.000000e+00> : vector<16xf32>
    %173 = vector.multi_reduction <add>, %170, %cst_60 [1] : vector<16x32xf32> to vector<16xf32>
    %174 = vector.shape_cast %173 : vector<16xf32> to vector<16x1xf32>
    %cst_61 = arith.constant 3.200000e+01 : f32
    %175 = vector.broadcast %cst_61 : f32 to vector<16x1xf32>
    %176 = arith.divf %174, %175 : vector<16x1xf32>
    %177 = vector.broadcast %176 : vector<16x1xf32> to vector<16x32xf32>
    %178 = arith.subf %170, %177 : vector<16x32xf32>
    %179 = arith.mulf %178, %178 : vector<16x32xf32>
    %cst_62 = arith.constant dense<0.000000e+00> : vector<16xf32>
    %180 = vector.multi_reduction <add>, %179, %cst_62 [1] : vector<16x32xf32> to vector<16xf32>
    %181 = vector.shape_cast %180 : vector<16xf32> to vector<16x1xf32>
    %cst_63 = arith.constant 3.200000e+01 : f32
    %182 = vector.broadcast %cst_63 : f32 to vector<16x1xf32>
    %183 = arith.divf %181, %182 : vector<16x1xf32>
    %184 = vector.broadcast %176 : vector<16x1xf32> to vector<16x32xf32>
    %185 = arith.subf %170, %184 : vector<16x32xf32>
    %cst_64 = arith.constant 9.99999996E-13 : f32
    %186 = vector.broadcast %cst_64 : f32 to vector<16x1xf32>
    %187 = arith.addf %183, %186 : vector<16x1xf32>
    %188 = math.rsqrt %187 : vector<16x1xf32>
    %189 = vector.broadcast %188 : vector<16x1xf32> to vector<16x32xf32>
    %190 = arith.mulf %185, %189 : vector<16x32xf32>
    %191 = vector.broadcast %171 : vector<1x32xf32> to vector<16x32xf32>
    %192 = arith.mulf %190, %191 : vector<16x32xf32>
    %193 = vector.broadcast %172 : vector<1x32xf32> to vector<16x32xf32>
    %194 = arith.addf %192, %193 : vector<16x32xf32>
    %c1 = arith.constant 1 : index
    %c0_65 = arith.constant 0 : index
    %c0_66 = arith.constant 0 : index
    %195 = vector.load %arg6[%c1, %c0_65, %c0_66] : memref<2x6x32xf32, #tpu.memory_space<vmem>>, vector<1x6x32xf32>
    %196 = vector.shape_cast %195 : vector<1x6x32xf32> to vector<6x32xf32>
    %c1_67 = arith.constant 1 : index
    %c0_68 = arith.constant 0 : index
    %c0_69 = arith.constant 0 : index
    %197 = vector.load %arg3[%c1_67, %c0_68, %c0_69] : memref<2x32x96xf32, #tpu.memory_space<vmem>>, vector<1x32x96xf32>
    %198 = vector.shape_cast %197 : vector<1x32x96xf32> to vector<32x96xf32>
    %cst_70 = arith.constant dense<0.000000e+00> : vector<16x96xf32>
    %199 = tpu.matmul %194, %198, %cst_70 {dimension_numbers = #tpu.dot_dimension_numbers<[1], [0], [0], [1], [0, 0, 1, 1], [], []>} : vector<16x32xf32>, vector<32x96xf32>, vector<16x96xf32> -> vector<16x96xf32>
    %c1_71 = arith.constant 1 : index
    %c0_72 = arith.constant 0 : index
    %c0_73 = arith.constant 0 : index
    %200 = vector.load %arg4[%c1_71, %c0_72, %c0_73] : memref<2x1x96xf32, #tpu.memory_space<vmem>>, vector<1x1x96xf32>
    %201 = vector.shape_cast %200 : vector<1x1x96xf32> to vector<1x96xf32>
    %202 = vector.broadcast %201 : vector<1x96xf32> to vector<16x96xf32>
    %203 = arith.addf %199, %202 : vector<16x96xf32>
    %204 = vector.extract_strided_slice %203 {offsets = [0, 0], sizes = [16, 32], strides = [1, 1]} : vector<16x96xf32> to vector<16x32xf32>
    %205 = vector.shape_cast %204 : vector<16x32xf32> to vector<2x8x32xf32>
    %206 = vector.extract_strided_slice %203 {offsets = [0, 32], sizes = [16, 32], strides = [1, 1]} : vector<16x96xf32> to vector<16x32xf32>
    %207 = vector.shape_cast %206 : vector<16x32xf32> to vector<2x8x32xf32>
    %208 = vector.extract_strided_slice %203 {offsets = [0, 64], sizes = [16, 32], strides = [1, 1]} : vector<16x96xf32> to vector<16x32xf32>
    %209 = vector.shape_cast %208 : vector<16x32xf32> to vector<2x8x32xf32>
    %210 = vector.extract_strided_slice %205 {offsets = [0, 0, 0], sizes = [2, 8, 8], strides = [1, 1, 1]} : vector<2x8x32xf32> to vector<2x8x8xf32>
    %211 = vector.extract_strided_slice %207 {offsets = [0, 0, 0], sizes = [2, 8, 8], strides = [1, 1, 1]} : vector<2x8x32xf32> to vector<2x8x8xf32>
    "tpu.trace_start"() <{level = 10 : i32, message = "bqd,bkd->bqk"}> : () -> ()
    %cst_74 = arith.constant dense<0.000000e+00> : vector<2x8x8xf32>
    %212 = tpu.matmul %210, %211, %cst_74 {dimension_numbers = #tpu.dot_dimension_numbers<[2], [2], [1], [1], [0, 0, 0, 1, 1, 1], [0], [0]>} : vector<2x8x8xf32>, vector<2x8x8xf32>, vector<2x8x8xf32> -> vector<2x8x8xf32>
    "tpu.trace_stop"() : () -> ()
    %213 = arith.addf %212, %28 : vector<2x8x8xf32>
    %cst_75 = arith.constant dense<0xFF800000> : vector<2x8xf32>
    %214 = vector.multi_reduction <maximumf>, %213, %cst_75 [2] : vector<2x8x8xf32> to vector<2x8xf32>
    %215 = vector.shape_cast %214 : vector<2x8xf32> to vector<2x8x1xf32>
    %216 = vector.broadcast %215 : vector<2x8x1xf32> to vector<2x8x8xf32>
    %217 = arith.subf %213, %216 : vector<2x8x8xf32>
    %218 = math.exp %217 : vector<2x8x8xf32>
    %cst_76 = arith.constant dense<0.000000e+00> : vector<2x8xf32>
    %219 = vector.multi_reduction <add>, %218, %cst_76 [2] : vector<2x8x8xf32> to vector<2x8xf32>
    %220 = vector.shape_cast %219 : vector<2x8xf32> to vector<2x8x1xf32>
    %221 = tpu.reciprocal %220 {approx = true} : vector<2x8x1xf32> -> vector<2x8x1xf32>
    %222 = vector.broadcast %221 : vector<2x8x1xf32> to vector<2x8x8xf32>
    %223 = arith.mulf %218, %222 : vector<2x8x8xf32>
    %224 = vector.extract_strided_slice %209 {offsets = [0, 0, 0], sizes = [2, 8, 8], strides = [1, 1, 1]} : vector<2x8x32xf32> to vector<2x8x8xf32>
    "tpu.trace_start"() <{level = 10 : i32, message = "bqk,bkd->bqd"}> : () -> ()
    %cst_77 = arith.constant dense<0.000000e+00> : vector<2x8x8xf32>
    %225 = tpu.matmul %223, %224, %cst_77 {dimension_numbers = #tpu.dot_dimension_numbers<[2], [1], [1], [2], [0, 0, 0, 1, 1, 2], [0], [0]>} : vector<2x8x8xf32>, vector<2x8x8xf32>, vector<2x8x8xf32> -> vector<2x8x8xf32>
    "tpu.trace_stop"() : () -> ()
    %226 = vector.shape_cast %225 : vector<2x8x8xf32> to vector<16x8xf32>
    %227 = vector.extract_strided_slice %205 {offsets = [0, 0, 8], sizes = [2, 8, 8], strides = [1, 1, 1]} : vector<2x8x32xf32> to vector<2x8x8xf32>
    %228 = vector.extract_strided_slice %207 {offsets = [0, 0, 8], sizes = [2, 8, 8], strides = [1, 1, 1]} : vector<2x8x32xf32> to vector<2x8x8xf32>
    "tpu.trace_start"() <{level = 10 : i32, message = "bqd,bkd->bqk"}> : () -> ()
    %cst_78 = arith.constant dense<0.000000e+00> : vector<2x8x8xf32>
    %229 = tpu.matmul %227, %228, %cst_78 {dimension_numbers = #tpu.dot_dimension_numbers<[2], [2], [1], [1], [0, 0, 0, 1, 1, 1], [0], [0]>} : vector<2x8x8xf32>, vector<2x8x8xf32>, vector<2x8x8xf32> -> vector<2x8x8xf32>
    "tpu.trace_stop"() : () -> ()
    %230 = arith.addf %229, %28 : vector<2x8x8xf32>
    %cst_79 = arith.constant dense<0xFF800000> : vector<2x8xf32>
    %231 = vector.multi_reduction <maximumf>, %230, %cst_79 [2] : vector<2x8x8xf32> to vector<2x8xf32>
    %232 = vector.shape_cast %231 : vector<2x8xf32> to vector<2x8x1xf32>
    %233 = vector.broadcast %232 : vector<2x8x1xf32> to vector<2x8x8xf32>
    %234 = arith.subf %230, %233 : vector<2x8x8xf32>
    %235 = math.exp %234 : vector<2x8x8xf32>
    %cst_80 = arith.constant dense<0.000000e+00> : vector<2x8xf32>
    %236 = vector.multi_reduction <add>, %235, %cst_80 [2] : vector<2x8x8xf32> to vector<2x8xf32>
    %237 = vector.shape_cast %236 : vector<2x8xf32> to vector<2x8x1xf32>
    %238 = tpu.reciprocal %237 {approx = true} : vector<2x8x1xf32> -> vector<2x8x1xf32>
    %239 = vector.broadcast %238 : vector<2x8x1xf32> to vector<2x8x8xf32>
    %240 = arith.mulf %235, %239 : vector<2x8x8xf32>
    %241 = vector.extract_strided_slice %209 {offsets = [0, 0, 8], sizes = [2, 8, 8], strides = [1, 1, 1]} : vector<2x8x32xf32> to vector<2x8x8xf32>
    "tpu.trace_start"() <{level = 10 : i32, message = "bqk,bkd->bqd"}> : () -> ()
    %cst_81 = arith.constant dense<0.000000e+00> : vector<2x8x8xf32>
    %242 = tpu.matmul %240, %241, %cst_81 {dimension_numbers = #tpu.dot_dimension_numbers<[2], [1], [1], [2], [0, 0, 0, 1, 1, 2], [0], [0]>} : vector<2x8x8xf32>, vector<2x8x8xf32>, vector<2x8x8xf32> -> vector<2x8x8xf32>
    "tpu.trace_stop"() : () -> ()
    %243 = vector.shape_cast %242 : vector<2x8x8xf32> to vector<16x8xf32>
    %244 = vector.extract_strided_slice %205 {offsets = [0, 0, 16], sizes = [2, 8, 8], strides = [1, 1, 1]} : vector<2x8x32xf32> to vector<2x8x8xf32>
    %245 = vector.extract_strided_slice %207 {offsets = [0, 0, 16], sizes = [2, 8, 8], strides = [1, 1, 1]} : vector<2x8x32xf32> to vector<2x8x8xf32>
    "tpu.trace_start"() <{level = 10 : i32, message = "bqd,bkd->bqk"}> : () -> ()
    %cst_82 = arith.constant dense<0.000000e+00> : vector<2x8x8xf32>
    %246 = tpu.matmul %244, %245, %cst_82 {dimension_numbers = #tpu.dot_dimension_numbers<[2], [2], [1], [1], [0, 0, 0, 1, 1, 1], [0], [0]>} : vector<2x8x8xf32>, vector<2x8x8xf32>, vector<2x8x8xf32> -> vector<2x8x8xf32>
    "tpu.trace_stop"() : () -> ()
    %247 = arith.addf %246, %28 : vector<2x8x8xf32>
    %cst_83 = arith.constant dense<0xFF800000> : vector<2x8xf32>
    %248 = vector.multi_reduction <maximumf>, %247, %cst_83 [2] : vector<2x8x8xf32> to vector<2x8xf32>
    %249 = vector.shape_cast %248 : vector<2x8xf32> to vector<2x8x1xf32>
    %250 = vector.broadcast %249 : vector<2x8x1xf32> to vector<2x8x8xf32>
    %251 = arith.subf %247, %250 : vector<2x8x8xf32>
    %252 = math.exp %251 : vector<2x8x8xf32>
    %cst_84 = arith.constant dense<0.000000e+00> : vector<2x8xf32>
    %253 = vector.multi_reduction <add>, %252, %cst_84 [2] : vector<2x8x8xf32> to vector<2x8xf32>
    %254 = vector.shape_cast %253 : vector<2x8xf32> to vector<2x8x1xf32>
    %255 = tpu.reciprocal %254 {approx = true} : vector<2x8x1xf32> -> vector<2x8x1xf32>
    %256 = vector.broadcast %255 : vector<2x8x1xf32> to vector<2x8x8xf32>
    %257 = arith.mulf %252, %256 : vector<2x8x8xf32>
    %258 = vector.extract_strided_slice %209 {offsets = [0, 0, 16], sizes = [2, 8, 8], strides = [1, 1, 1]} : vector<2x8x32xf32> to vector<2x8x8xf32>
    "tpu.trace_start"() <{level = 10 : i32, message = "bqk,bkd->bqd"}> : () -> ()
    %cst_85 = arith.constant dense<0.000000e+00> : vector<2x8x8xf32>
    %259 = tpu.matmul %257, %258, %cst_85 {dimension_numbers = #tpu.dot_dimension_numbers<[2], [1], [1], [2], [0, 0, 0, 1, 1, 2], [0], [0]>} : vector<2x8x8xf32>, vector<2x8x8xf32>, vector<2x8x8xf32> -> vector<2x8x8xf32>
    "tpu.trace_stop"() : () -> ()
    %260 = vector.shape_cast %259 : vector<2x8x8xf32> to vector<16x8xf32>
    %261 = vector.extract_strided_slice %205 {offsets = [0, 0, 24], sizes = [2, 8, 8], strides = [1, 1, 1]} : vector<2x8x32xf32> to vector<2x8x8xf32>
    %262 = vector.extract_strided_slice %207 {offsets = [0, 0, 24], sizes = [2, 8, 8], strides = [1, 1, 1]} : vector<2x8x32xf32> to vector<2x8x8xf32>
    "tpu.trace_start"() <{level = 10 : i32, message = "bqd,bkd->bqk"}> : () -> ()
    %cst_86 = arith.constant dense<0.000000e+00> : vector<2x8x8xf32>
    %263 = tpu.matmul %261, %262, %cst_86 {dimension_numbers = #tpu.dot_dimension_numbers<[2], [2], [1], [1], [0, 0, 0, 1, 1, 1], [0], [0]>} : vector<2x8x8xf32>, vector<2x8x8xf32>, vector<2x8x8xf32> -> vector<2x8x8xf32>
    "tpu.trace_stop"() : () -> ()
    %264 = arith.addf %263, %28 : vector<2x8x8xf32>
    %cst_87 = arith.constant dense<0xFF800000> : vector<2x8xf32>
    %265 = vector.multi_reduction <maximumf>, %264, %cst_87 [2] : vector<2x8x8xf32> to vector<2x8xf32>
    %266 = vector.shape_cast %265 : vector<2x8xf32> to vector<2x8x1xf32>
    %267 = vector.broadcast %266 : vector<2x8x1xf32> to vector<2x8x8xf32>
    %268 = arith.subf %264, %267 : vector<2x8x8xf32>
    %269 = math.exp %268 : vector<2x8x8xf32>
    %cst_88 = arith.constant dense<0.000000e+00> : vector<2x8xf32>
    %270 = vector.multi_reduction <add>, %269, %cst_88 [2] : vector<2x8x8xf32> to vector<2x8xf32>
    %271 = vector.shape_cast %270 : vector<2x8xf32> to vector<2x8x1xf32>
    %272 = tpu.reciprocal %271 {approx = true} : vector<2x8x1xf32> -> vector<2x8x1xf32>
    %273 = vector.broadcast %272 : vector<2x8x1xf32> to vector<2x8x8xf32>
    %274 = arith.mulf %269, %273 : vector<2x8x8xf32>
    %275 = vector.extract_strided_slice %209 {offsets = [0, 0, 24], sizes = [2, 8, 8], strides = [1, 1, 1]} : vector<2x8x32xf32> to vector<2x8x8xf32>
    "tpu.trace_start"() <{level = 10 : i32, message = "bqk,bkd->bqd"}> : () -> ()
    %cst_89 = arith.constant dense<0.000000e+00> : vector<2x8x8xf32>
    %276 = tpu.matmul %274, %275, %cst_89 {dimension_numbers = #tpu.dot_dimension_numbers<[2], [1], [1], [2], [0, 0, 0, 1, 1, 2], [0], [0]>} : vector<2x8x8xf32>, vector<2x8x8xf32>, vector<2x8x8xf32> -> vector<2x8x8xf32>
    "tpu.trace_stop"() : () -> ()
    %277 = vector.shape_cast %276 : vector<2x8x8xf32> to vector<16x8xf32>
    %278 = tpu.concatenate %226, %243, %260, %277 in 1 : vector<16x8xf32>, vector<16x8xf32>, vector<16x8xf32>, vector<16x8xf32> -> vector<16x32xf32>
    %c1_90 = arith.constant 1 : index
    %c0_91 = arith.constant 0 : index
    %c0_92 = arith.constant 0 : index
    %279 = vector.load %arg5[%c1_90, %c0_91, %c0_92] : memref<2x32x32xf32, #tpu.memory_space<vmem>>, vector<1x32x32xf32>
    %280 = vector.shape_cast %279 : vector<1x32x32xf32> to vector<32x32xf32>
    %cst_93 = arith.constant dense<0.000000e+00> : vector<16x32xf32>
    %281 = tpu.matmul %278, %280, %cst_93 {dimension_numbers = #tpu.dot_dimension_numbers<[1], [0], [0], [1], [0, 0, 1, 1], [], []>} : vector<16x32xf32>, vector<32x32xf32>, vector<16x32xf32> -> vector<16x32xf32>
    %282 = vector.extract_strided_slice %196 {offsets = [0, 0], sizes = [1, 32], strides = [1, 1]} : vector<6x32xf32> to vector<1x32xf32>
    %283 = vector.broadcast %282 : vector<1x32xf32> to vector<16x32xf32>
    %284 = arith.addf %281, %283 : vector<16x32xf32>
    %285 = arith.addf %194, %284 : vector<16x32xf32>
    %286 = vector.extract_strided_slice %196 {offsets = [1, 0], sizes = [1, 32], strides = [1, 1]} : vector<6x32xf32> to vector<1x32xf32>
    %287 = vector.extract_strided_slice %196 {offsets = [2, 0], sizes = [1, 32], strides = [1, 1]} : vector<6x32xf32> to vector<1x32xf32>
    %cst_94 = arith.constant dense<0.000000e+00> : vector<16xf32>
    %288 = vector.multi_reduction <add>, %285, %cst_94 [1] : vector<16x32xf32> to vector<16xf32>
    %289 = vector.shape_cast %288 : vector<16xf32> to vector<16x1xf32>
    %cst_95 = arith.constant 3.200000e+01 : f32
    %290 = vector.broadcast %cst_95 : f32 to vector<16x1xf32>
    %291 = arith.divf %289, %290 : vector<16x1xf32>
    %292 = vector.broadcast %291 : vector<16x1xf32> to vector<16x32xf32>
    %293 = arith.subf %285, %292 : vector<16x32xf32>
    %294 = arith.mulf %293, %293 : vector<16x32xf32>
    %cst_96 = arith.constant dense<0.000000e+00> : vector<16xf32>
    %295 = vector.multi_reduction <add>, %294, %cst_96 [1] : vector<16x32xf32> to vector<16xf32>
    %296 = vector.shape_cast %295 : vector<16xf32> to vector<16x1xf32>
    %cst_97 = arith.constant 3.200000e+01 : f32
    %297 = vector.broadcast %cst_97 : f32 to vector<16x1xf32>
    %298 = arith.divf %296, %297 : vector<16x1xf32>
    %299 = vector.broadcast %291 : vector<16x1xf32> to vector<16x32xf32>
    %300 = arith.subf %285, %299 : vector<16x32xf32>
    %cst_98 = arith.constant 9.99999996E-13 : f32
    %301 = vector.broadcast %cst_98 : f32 to vector<16x1xf32>
    %302 = arith.addf %298, %301 : vector<16x1xf32>
    %303 = math.rsqrt %302 : vector<16x1xf32>
    %304 = vector.broadcast %303 : vector<16x1xf32> to vector<16x32xf32>
    %305 = arith.mulf %300, %304 : vector<16x32xf32>
    %306 = vector.broadcast %286 : vector<1x32xf32> to vector<16x32xf32>
    %307 = arith.mulf %305, %306 : vector<16x32xf32>
    %308 = vector.broadcast %287 : vector<1x32xf32> to vector<16x32xf32>
    %309 = arith.addf %307, %308 : vector<16x32xf32>
    %c1_99 = arith.constant 1 : index
    %c0_100 = arith.constant 0 : index
    %c0_101 = arith.constant 0 : index
    %310 = vector.load %arg7[%c1_99, %c0_100, %c0_101] : memref<2x32x64xf32, #tpu.memory_space<vmem>>, vector<1x32x64xf32>
    %311 = vector.shape_cast %310 : vector<1x32x64xf32> to vector<32x64xf32>
    %cst_102 = arith.constant dense<0.000000e+00> : vector<16x64xf32>
    %312 = tpu.matmul %309, %311, %cst_102 {dimension_numbers = #tpu.dot_dimension_numbers<[1], [0], [0], [1], [0, 0, 1, 1], [], []>} : vector<16x32xf32>, vector<32x64xf32>, vector<16x64xf32> -> vector<16x64xf32>
    %c1_103 = arith.constant 1 : index
    %c0_104 = arith.constant 0 : index
    %c0_105 = arith.constant 0 : index
    %313 = vector.load %arg8[%c1_103, %c0_104, %c0_105] : memref<2x1x64xf32, #tpu.memory_space<vmem>>, vector<1x1x64xf32>
    %314 = vector.shape_cast %313 : vector<1x1x64xf32> to vector<1x64xf32>
    %315 = vector.broadcast %314 : vector<1x64xf32> to vector<16x64xf32>
    %316 = arith.addf %312, %315 : vector<16x64xf32>
    %317 = arith.mulf %316, %316 : vector<16x64xf32>
    %318 = arith.mulf %316, %317 : vector<16x64xf32>
    %cst_106 = arith.constant 4.471500e-02 : f32
    %319 = vector.broadcast %cst_106 : f32 to vector<16x64xf32>
    %320 = arith.mulf %319, %318 : vector<16x64xf32>
    %321 = arith.addf %316, %320 : vector<16x64xf32>
    %cst_107 = arith.constant 0.797884583 : f32
    %322 = vector.broadcast %cst_107 : f32 to vector<16x64xf32>
    %323 = arith.mulf %322, %321 : vector<16x64xf32>
    %324 = math.tanh %323 : vector<16x64xf32>
    %cst_108 = arith.constant 1.000000e+00 : f32
    %325 = vector.broadcast %cst_108 : f32 to vector<16x64xf32>
    %326 = arith.addf %325, %324 : vector<16x64xf32>
    %cst_109 = arith.constant 5.000000e-01 : f32
    %327 = vector.broadcast %cst_109 : f32 to vector<16x64xf32>
    %328 = arith.mulf %327, %326 : vector<16x64xf32>
    %329 = arith.mulf %316, %328 : vector<16x64xf32>
    %c1_110 = arith.constant 1 : index
    %c0_111 = arith.constant 0 : index
    %c0_112 = arith.constant 0 : index
    %330 = vector.load %arg9[%c1_110, %c0_111, %c0_112] : memref<2x64x32xf32, #tpu.memory_space<vmem>>, vector<1x64x32xf32>
    %331 = vector.shape_cast %330 : vector<1x64x32xf32> to vector<64x32xf32>
    %cst_113 = arith.constant dense<0.000000e+00> : vector<16x32xf32>
    %332 = tpu.matmul %329, %331, %cst_113 {dimension_numbers = #tpu.dot_dimension_numbers<[1], [0], [0], [1], [0, 0, 1, 1], [], []>} : vector<16x64xf32>, vector<64x32xf32>, vector<16x32xf32> -> vector<16x32xf32>
    %333 = vector.extract_strided_slice %196 {offsets = [3, 0], sizes = [1, 32], strides = [1, 1]} : vector<6x32xf32> to vector<1x32xf32>
    %334 = vector.broadcast %333 : vector<1x32xf32> to vector<16x32xf32>
    %335 = arith.addf %332, %334 : vector<16x32xf32>
    %336 = arith.addf %309, %335 : vector<16x32xf32>
    %337 = vector.extract_strided_slice %196 {offsets = [4, 0], sizes = [1, 32], strides = [1, 1]} : vector<6x32xf32> to vector<1x32xf32>
    %338 = vector.extract_strided_slice %196 {offsets = [5, 0], sizes = [1, 32], strides = [1, 1]} : vector<6x32xf32> to vector<1x32xf32>
    %cst_114 = arith.constant dense<0.000000e+00> : vector<16xf32>
    %339 = vector.multi_reduction <add>, %336, %cst_114 [1] : vector<16x32xf32> to vector<16xf32>
    %340 = vector.shape_cast %339 : vector<16xf32> to vector<16x1xf32>
    %cst_115 = arith.constant 3.200000e+01 : f32
    %341 = vector.broadcast %cst_115 : f32 to vector<16x1xf32>
    %342 = arith.divf %340, %341 : vector<16x1xf32>
    %343 = vector.broadcast %342 : vector<16x1xf32> to vector<16x32xf32>
    %344 = arith.subf %336, %343 : vector<16x32xf32>
    %345 = arith.mulf %344, %344 : vector<16x32xf32>
    %cst_116 = arith.constant dense<0.000000e+00> : vector<16xf32>
    %346 = vector.multi_reduction <add>, %345, %cst_116 [1] : vector<16x32xf32> to vector<16xf32>
    %347 = vector.shape_cast %346 : vector<16xf32> to vector<16x1xf32>
    %cst_117 = arith.constant 3.200000e+01 : f32
    %348 = vector.broadcast %cst_117 : f32 to vector<16x1xf32>
    %349 = arith.divf %347, %348 : vector<16x1xf32>
    %350 = vector.broadcast %342 : vector<16x1xf32> to vector<16x32xf32>
    %351 = arith.subf %336, %350 : vector<16x32xf32>
    %cst_118 = arith.constant 9.99999996E-13 : f32
    %352 = vector.broadcast %cst_118 : f32 to vector<16x1xf32>
    %353 = arith.addf %349, %352 : vector<16x1xf32>
    %354 = math.rsqrt %353 : vector<16x1xf32>
    %355 = vector.broadcast %354 : vector<16x1xf32> to vector<16x32xf32>
    %356 = arith.mulf %351, %355 : vector<16x32xf32>
    %357 = vector.broadcast %337 : vector<1x32xf32> to vector<16x32xf32>
    %358 = arith.mulf %356, %357 : vector<16x32xf32>
    %359 = vector.broadcast %338 : vector<1x32xf32> to vector<16x32xf32>
    %360 = arith.addf %358, %359 : vector<16x32xf32>
    %c0_119 = arith.constant 0 : index
    %c0_120 = arith.constant 0 : index
    %361 = vector.load %arg11[%c0_119, %c0_120] : memref<3x32xf32, #tpu.memory_space<vmem>>, vector<3x32xf32>
    %c0_121 = arith.constant 0 : index
    %c0_122 = arith.constant 0 : index
    %362 = vector.load %arg10[%c0_121, %c0_122] : memref<32x32xf32, #tpu.memory_space<vmem>>, vector<32x32xf32>
    %cst_123 = arith.constant dense<0.000000e+00> : vector<16x32xf32>
    %363 = tpu.matmul %360, %362, %cst_123 {dimension_numbers = #tpu.dot_dimension_numbers<[1], [0], [0], [1], [0, 0, 1, 1], [], []>} : vector<16x32xf32>, vector<32x32xf32>, vector<16x32xf32> -> vector<16x32xf32>
    %364 = vector.extract_strided_slice %361 {offsets = [0, 0], sizes = [1, 32], strides = [1, 1]} : vector<3x32xf32> to vector<1x32xf32>
    %365 = vector.broadcast %364 : vector<1x32xf32> to vector<16x32xf32>
    %366 = arith.addf %363, %365 : vector<16x32xf32>
    %367 = math.tanh %366 : vector<16x32xf32>
    %368 = vector.extract_strided_slice %361 {offsets = [1, 0], sizes = [1, 32], strides = [1, 1]} : vector<3x32xf32> to vector<1x32xf32>
    %369 = vector.extract_strided_slice %361 {offsets = [2, 0], sizes = [1, 32], strides = [1, 1]} : vector<3x32xf32> to vector<1x32xf32>
    %cst_124 = arith.constant dense<0.000000e+00> : vector<16xf32>
    %370 = vector.multi_reduction <add>, %367, %cst_124 [1] : vector<16x32xf32> to vector<16xf32>
    %371 = vector.shape_cast %370 : vector<16xf32> to vector<16x1xf32>
    %cst_125 = arith.constant 3.200000e+01 : f32
    %372 = vector.broadcast %cst_125 : f32 to vector<16x1xf32>
    %373 = arith.divf %371, %372 : vector<16x1xf32>
    %374 = vector.broadcast %373 : vector<16x1xf32> to vector<16x32xf32>
    %375 = arith.subf %367, %374 : vector<16x32xf32>
    %376 = arith.mulf %375, %375 : vector<16x32xf32>
    %cst_126 = arith.constant dense<0.000000e+00> : vector<16xf32>
    %377 = vector.multi_reduction <add>, %376, %cst_126 [1] : vector<16x32xf32> to vector<16xf32>
    %378 = vector.shape_cast %377 : vector<16xf32> to vector<16x1xf32>
    %cst_127 = arith.constant 3.200000e+01 : f32
    %379 = vector.broadcast %cst_127 : f32 to vector<16x1xf32>
    %380 = arith.divf %378, %379 : vector<16x1xf32>
    %381 = vector.broadcast %373 : vector<16x1xf32> to vector<16x32xf32>
    %382 = arith.subf %367, %381 : vector<16x32xf32>
    %cst_128 = arith.constant 9.99999974E-6 : f32
    %383 = vector.broadcast %cst_128 : f32 to vector<16x1xf32>
    %384 = arith.addf %380, %383 : vector<16x1xf32>
    %385 = math.rsqrt %384 : vector<16x1xf32>
    %386 = vector.broadcast %385 : vector<16x1xf32> to vector<16x32xf32>
    %387 = arith.mulf %382, %386 : vector<16x32xf32>
    %388 = vector.broadcast %368 : vector<1x32xf32> to vector<16x32xf32>
    %389 = arith.mulf %387, %388 : vector<16x32xf32>
    %390 = vector.broadcast %369 : vector<1x32xf32> to vector<16x32xf32>
    %391 = arith.addf %389, %390 : vector<16x32xf32>
    %c0_129 = arith.constant 0 : index
    %c0_130 = arith.constant 0 : index
    %392 = vector.load %arg12[%c0_129, %c0_130] : memref<32x128xf32, #tpu.memory_space<vmem>>, vector<32x128xf32>
    %cst_131 = arith.constant dense<0.000000e+00> : vector<16x128xf32>
    %393 = tpu.matmul %391, %392, %cst_131 {dimension_numbers = #tpu.dot_dimension_numbers<[1], [0], [0], [1], [0, 0, 1, 1], [], []>} : vector<16x32xf32>, vector<32x128xf32>, vector<16x128xf32> -> vector<16x128xf32>
    %c0_132 = arith.constant 0 : index
    %c0_133 = arith.constant 0 : index
    %394 = vector.load %arg13[%c0_132, %c0_133] : memref<1x128xf32, #tpu.memory_space<vmem>>, vector<1x128xf32>
    %395 = vector.broadcast %394 : vector<1x128xf32> to vector<16x128xf32>
    %396 = arith.addf %393, %395 : vector<16x128xf32>
    %c0_134 = arith.constant 0 : index
    %c0_135 = arith.constant 0 : index
    %397 = vector.load %arg14[%c0_134, %c0_135] : memref<16x128xf32, #tpu.memory_space<vmem>>, vector<16x128xf32>
    tpu.vector_store %arg14[%c0_134, %c0_135], %396 {strides = array<i32>} : memref<16x128xf32, #tpu.memory_space<vmem>>, vector<16x128xf32>,
    return
  }
}

</mosaic_0001>

<llo_original>
// kernel: forward.1
$region0: #{forward.1}
  #allocation0 [shape = 'u32[]', space=smem, size = 0x4, offset = 0x4, fixed_abs, tag = 'smem constant byte address 0x4 - core index']
  #allocation1 [shape = 'u32[144,128]{1,0:T(1,128)}', space=vmem, size = 0x12000, scoped, tag = 'internal scratch']
  %s0 = inlined_call_operand.vmem [shape: f32[16,32], index: 0, kind: input, shape index: {}]
  %s1 = inlined_call_operand.vmem [shape: f32[2,1,8], index: 1, kind: input, shape index: {}]
  %s2 = inlined_call_operand.vmem [shape: f32[2,32], index: 2, kind: input, shape index: {}]
  %s3 = inlined_call_operand.vmem [shape: f32[2,32,96], index: 3, kind: input, shape index: {}]
  %s4 = inlined_call_operand.vmem [shape: f32[2,1,96], index: 4, kind: input, shape index: {}]
  %s5 = inlined_call_operand.vmem [shape: f32[2,32,32], index: 5, kind: input, shape index: {}]
  %s6 = inlined_call_operand.vmem [shape: f32[2,6,32], index: 6, kind: input, shape index: {}]
  %s7 = inlined_call_operand.vmem [shape: f32[2,32,64], index: 7, kind: input, shape index: {}]
  %s8 = inlined_call_operand.vmem [shape: f32[2,1,64], index: 8, kind: input, shape index: {}]
  %s9 = inlined_call_operand.vmem [shape: f32[2,64,32], index: 9, kind: input, shape index: {}]
  %s10 = inlined_call_operand.vmem [shape: f32[32,32], index: 10, kind: input, shape index: {}]
  %s11 = inlined_call_operand.vmem [shape: f32[3,32], index: 11, kind: input, shape index: {}]
  %s12 = inlined_call_operand.vmem [shape: f32[32,128], index: 12, kind: input, shape index: {}]
  %s13 = inlined_call_operand.vmem [shape: f32[1,128], index: 13, kind: input, shape index: {}]
  %s14 = inlined_call_operand.vmem [shape: f32[16,128], index: 14, kind: output, shape index: {}]
  %s15 = sld [smem:[#allocation0]]
  $region66: #{forward.1} parent=0
    _
  %s17 = ssub.s32 1, %s15
  %s18 = scalar_select 0, %s17, %s15
  // Predicated region
  $region2: #{forward.1} parent=0 // pred_check
    _
  $region3: #{forward.1} parent=0 // pred_check_branch
    %20 = sbr.rel (0) target = $region5
  $region4: #{forward.1} parent=0 // pred_region
    _
  $region5: #{forward.1} parent=0 // pred_fallthru
    _
  // Predicated region
  $region6: #{forward.1} parent=0 // pred_check
    _
  $region7: #{forward.1} parent=0 // pred_check_branch
    %22 = sbr.rel (0) target = $region9
  $region8: #{forward.1} parent=0 // pred_region
    _
  $region9: #{forward.1} parent=0 // pred_fallthru
    _
  // Predicated region
  $region10: #{forward.1} parent=0 // pred_check
    _
  $region11: #{forward.1} parent=0 // pred_check_branch
    %24 = sbr.rel (0) target = $region13
  $region12: #{forward.1} parent=0 // pred_region
    _
  $region13: #{forward.1} parent=0 // pred_fallthru
    _
  // Predicated region
  $region14: #{forward.1} parent=0 // pred_check
    _
  $region15: #{forward.1} parent=0 // pred_check_branch
    %26 = sbr.rel (0) target = $region17
  $region16: #{forward.1} parent=0 // pred_region
    _
  $region17: #{forward.1} parent=0 // pred_fallthru
    _
  // Predicated region
  $region18: #{forward.1} parent=0 // pred_check
    _
  $region19: #{forward.1} parent=0 // pred_check_branch
    %28 = sbr.rel (0) target = $region21
  $region20: #{forward.1} parent=0 // pred_region
    _
  $region21: #{forward.1} parent=0 // pred_fallthru
    _
  // Predicated region
  $region22: #{forward.1} parent=0 // pred_check
    _
  $region23: #{forward.1} parent=0 // pred_check_branch
    %30 = sbr.rel (0) target = $region25
  $region24: #{forward.1} parent=0 // pred_region
    _
  $region25: #{forward.1} parent=0 // pred_fallthru
    _
  // Predicated region
  $region26: #{forward.1} parent=0 // pred_check
    _
  $region27: #{forward.1} parent=0 // pred_check_branch
    %32 = sbr.rel (0) target = $region29
  $region28: #{forward.1} parent=0 // pred_region
    _
  $region29: #{forward.1} parent=0 // pred_fallthru
    _
  // Predicated region
  $region30: #{forward.1} parent=0 // pred_check
    _
  $region31: #{forward.1} parent=0 // pred_check_branch
    %34 = sbr.rel (0) target = $region33
  $region32: #{forward.1} parent=0 // pred_region
    _
  $region33: #{forward.1} parent=0 // pred_fallthru
    _
  // Predicated region
  $region34: #{forward.1} parent=0 // pred_check
    _
  $region35: #{forward.1} parent=0 // pred_check_branch
    %36 = sbr.rel (0) target = $region37
  $region36: #{forward.1} parent=0 // pred_region
    _
  $region37: #{forward.1} parent=0 // pred_fallthru
    _
  // Predicated region
  $region38: #{forward.1} parent=0 // pred_check
    _
  $region39: #{forward.1} parent=0 // pred_check_branch
    %38 = sbr.rel (0) target = $region41
  $region40: #{forward.1} parent=0 // pred_region
    _
  $region41: #{forward.1} parent=0 // pred_fallthru
    _
  // Predicated region
  $region42: #{forward.1} parent=0 // pred_check
    _
  $region43: #{forward.1} parent=0 // pred_check_branch
    %40 = sbr.rel (0) target = $region45
  $region44: #{forward.1} parent=0 // pred_region
    _
  $region45: #{forward.1} parent=0 // pred_fallthru
    _
  // Predicated region
  $region46: #{forward.1} parent=0 // pred_check
    _
  $region47: #{forward.1} parent=0 // pred_check_branch
    %42 = sbr.rel (0) target = $region49
  $region48: #{forward.1} parent=0 // pred_region
    _
  $region49: #{forward.1} parent=0 // pred_fallthru
    _
  // Predicated region
  $region50: #{forward.1} parent=0 // pred_check
    _
  $region51: #{forward.1} parent=0 // pred_check_branch
    %44 = sbr.rel (0) target = $region53
  $region52: #{forward.1} parent=0 // pred_region
    _
  $region53: #{forward.1} parent=0 // pred_fallthru
    _
  // Predicated region
  $region54: #{forward.1} parent=0 // pred_check
    _
  $region55: #{forward.1} parent=0 // pred_check_branch
    %46 = sbr.rel (0) target = $region57
  $region56: #{forward.1} parent=0 // pred_region
    _
  $region57: #{forward.1} parent=0 // pred_fallthru
    _
  %v47 = vld [vmem:[%s2] sm:$0x3]
  %v48 = vld [vmem:[%s0] sm:$0xff]
  %v49 = vld [vmem:[%s0 + $0x8] sm:$0xff]
  %vm50 = vcmask 261120
  %v51 = vsel %vm50, %v48, 0.0
  %52 = vadd.xlane.f32.xlu0 %v51
  %v53 = vpop.xlane.xlu0 %52
  %v54 = vsel %vm50, %v49, 0.0
  %55 = vadd.xlane.f32.xlu0 %v54
  %v56 = vpop.xlane.xlu0 %55
  %v57 = vrcp.pop 32.0
  %v58 = vmul.f32 %v53, %v57
  %v59 = vmul.f32 %v56, %v57
  %v60 = vsub.f32 %v48, %v58
  %v61 = vsub.f32 %v49, %v59
  %v62 = vmul.f32 %v60, %v60
  %v63 = vmul.f32 %v61, %v61
  %v64 = vsel %vm50, %v62, 0.0
  %65 = vadd.xlane.f32.xlu0 %v64
  %v66 = vpop.xlane.xlu0 %65
  %v67 = vsel %vm50, %v63, 0.0
  %68 = vadd.xlane.f32.xlu0 %v67
  %v69 = vpop.xlane.xlu0 %68
  %v70 = vmul.f32 %v66, %v57
  %v71 = vmul.f32 %v69, %v57
  %v72 = vadd.f32 %v70, 1e-12
  %v73 = vadd.f32 %v71, 1e-12
  %v74 = vrsqrt.pop %v72
  %v75 = vrsqrt.pop %v73
  %v76 = vmul.f32 %v60, %v74
  %v77 = vmul.f32 %v61, %v75
  %v78 = vlaneseq
  %v79 = vshrl.u32 %v78, 7
  %v80 = vsub.s32 0, %v79
  %v81 = vrot.slane %v47, %v80
  %v82 = vmul.f32 %v76, %v81
  %v83 = vmul.f32 %v77, %v81
  %v84 = vlaneseq
  %v85 = vshrl.u32 %v84, 7
  %v86 = vsub.s32 1, %v85
  %v87 = vrot.slane %v47, %v86
  %v88 = vadd.f32 %v82, %v87
  %v89 = vadd.f32 %v83, %v87
  %v90 = vld [vmem:[%s1] sm:$0x1]
  %v91 = vld [vmem:[%s1 + $0x1] sm:$0x1]
  %v94 = vlaneseq
  %v95 = vshrl.u32 %v94, 7
  %v96 = vsub.s32 0, %v95
  %v97 = vrot.slane %v90, %v96
  %v98 = vlaneseq
  %v99 = vshrl.u32 %v98, 7
  %v100 = vsub.s32 0, %v99
  %v101 = vrot.slane %v91, %v100
  %v104 = vld [vmem:[%s6] sm:$0x3f]
  %v105 = vld [vmem:[%s3] sm:$0xff]
  %v106 = vld [vmem:[%s3 + $0x8] sm:$0xff]
  %v107 = vld [vmem:[%s3 + $0x10] sm:$0xff]
  %v108 = vld [vmem:[%s3 + $0x18] sm:$0xff]
  %v109 = vld [vmem:[%s4] sm:$0x1]
  %v111 = vlaneseq
  %v112 = vshrl.u32 %v111, 7
  %v113 = vsub.s32 0, %v112
  %v114 = vrot.slane %v109, %v113
  %v117 = vsel %vm50, %v88, 0
  %v120 = vsel %vm50, %v89, 0
  %122 = vmatprep.subr.mxu0 0.0
  %123 = vmatpush1.msra.mxu0 %v105
  %124 = vmatprep.subr.mxu0 0.0
  %125 = vmatpush1.msra.mxu0 %v106
  %126 = vmatprep.subr.mxu0 0.0
  %127 = vmatpush1.msra.mxu0 %v107
  %128 = vmatprep.subr.mxu0 0.0
  %129 = vmatpush1.msra.mxu0 %v108
  %130 = vmatprep.subr.mxu0 0.0
  %131 = vmatpush1.msra.mxu0 0.0
  %132 = vmatprep.subr.mxu0 0.0
  %133 = vmatpush1.msra.mxu0 0.0
  %134 = vmatprep.subr.mxu0 0.0
  %135 = vmatpush1.msra.mxu0 0.0
  %136 = vmatprep.subr.mxu0 0.0
  %137 = vmatpush1.msra.mxu0 0.0
  %138 = vmatprep.subr.mxu0 0.0
  %139 = vmatpush1.msra.mxu0 0.0
  %140 = vmatprep.subr.mxu0 0.0
  %141 = vmatpush1.msra.mxu0 0.0
  %142 = vmatprep.subr.mxu0 0.0
  %143 = vmatpush1.msra.mxu0 0.0
  %144 = vmatprep.subr.mxu0 0.0
  %145 = vmatpush1.msra.mxu0 0.0
  %146 = vmatprep.subr.mxu0 0.0
  %147 = vmatpush1.msra.mxu0 0.0
  %148 = vmatprep.subr.mxu0 0.0
  %149 = vmatpush1.msra.mxu0 0.0
  %150 = vmatprep.subr.mxu0 0.0
  %151 = vmatpush1.msra.mxu0 0.0
  %152 = vmatprep.subr.mxu0 0.0
  %153 = vmatpush1.msra.mxu0 0.0
  %154 = vmatprep.subr.mxu0 0.0
  %155 = vmatpush1.msra.mxu0 0.0
  %156 = vmatprep.subr.mxu0 0.0
  %157 = vmatpush1.msra.mxu0 0.0
  %158 = vmatprep.subr.mxu0 0.0
  %159 = vmatpush1.msra.mxu0 0.0
  %160 = vmatprep.subr.mxu0 0.0
  %161 = vmatpush1.msra.mxu0 0.0
  %162 = vmatprep.subr.mxu0 0.0
  %163 = vmatpush1.msra.mxu0 0.0
  %164 = vmatprep.subr.mxu0 0.0
  %165 = vmatpush1.msra.mxu0 0.0
  %166 = vmatprep.subr.mxu0 0.0
  %167 = vmatpush1.msra.mxu0 0.0
  %168 = vmatprep.subr.mxu0 0.0
  %169 = vmatpush1.msra.mxu0 0.0
  %170 = vmatprep.subr.mxu0 0.0
  %171 = vmatpush1.msra.mxu0 0.0
  %172 = vmatprep.subr.mxu0 0.0
  %173 = vmatpush1.msra.mxu0 0.0
  %174 = vmatprep.subr.mxu0 0.0
  %175 = vmatpush1.msra.mxu0 0.0
  %176 = vmatprep.subr.mxu0 0.0
  %177 = vmatpush1.msra.mxu0 0.0
  %178 = vmatprep.subr.mxu0 0.0
  %179 = vmatpush1.msra.mxu0 0.0
  %180 = vmatprep.subr.mxu0 0.0
  %181 = vmatpush1.msra.mxu0 0.0
  %182 = vmatprep.subr.mxu0 0.0
  %183 = vmatpush1.msra.mxu0 0.0
  %184 = vmatprep.subr.mxu0 0.0
  %185 = vmatpush1.msra.mxu0 0.0
  %186 = vmatprep.mubr.f32.mxu0 0.0
  %187 = vmatmul.mubr.f32.gmra.mrb[0].mxu0 %v117
  %v188 = vpop.f32.mrb[0].mxu0
  %v189 = vadd.f32 %v114, %v188
  %v190 = vpop.f32.mrb[0].mxu0
  %191 = vmatprep.mubr.f32.mxu0 0.0
  %192 = vmatmul.mubr.f32.gmra.mrb[0].mxu0 %v120
  %v193 = vpop.f32.mrb[0].mxu0
  %v194 = vadd.f32 %v114, %v193
  %v195 = vpop.f32.mrb[0].mxu0
  %196 = vdwg.mxu0
  %198 = vrot.lane.b32.xlu0 %v189, 96
  %v199 = vpop.permute.xlu0 %198
  %vm200 = vcmask 64512
  %v201 = vsel %vm200, %v189, 0
  %v203 = vsel %vm200, %v199, 0
  %205 = vmatprep.subr.mxu0 0.0
  %206 = vmatpush1.xpose.msra.mxu0 %v203
  %207 = vmatprep.subr.mxu0 0.0
  %208 = vmatpush1.xpose.msra.mxu0 0.0
  %209 = vmatprep.subr.mxu0 0.0
  %210 = vmatpush1.xpose.msra.mxu0 0.0
  %211 = vmatprep.subr.mxu0 0.0
  %212 = vmatpush1.xpose.msra.mxu0 0.0
  %213 = vmatprep.subr.mxu0 0.0
  %214 = vmatpush1.xpose.msra.mxu0 0.0
  %215 = vmatprep.subr.mxu0 0.0
  %216 = vmatpush1.xpose.msra.mxu0 0.0
  %217 = vmatprep.subr.mxu0 0.0
  %218 = vmatpush1.xpose.msra.mxu0 0.0
  %219 = vmatprep.subr.mxu0 0.0
  %220 = vmatpush1.xpose.msra.mxu0 0.0
  %221 = vmatprep.subr.mxu0 0.0
  %222 = vmatpush1.xpose.msra.mxu0 0.0
  %223 = vmatprep.subr.mxu0 0.0
  %224 = vmatpush1.xpose.msra.mxu0 0.0
  %225 = vmatprep.subr.mxu0 0.0
  %226 = vmatpush1.xpose.msra.mxu0 0.0
  %227 = vmatprep.subr.mxu0 0.0
  %228 = vmatpush1.xpose.msra.mxu0 0.0
  %229 = vmatprep.subr.mxu0 0.0
  %230 = vmatpush1.xpose.msra.mxu0 0.0
  %231 = vmatprep.subr.mxu0 0.0
  %232 = vmatpush1.xpose.msra.mxu0 0.0
  %233 = vmatprep.subr.mxu0 0.0
  %234 = vmatpush1.xpose.msra.mxu0 0.0
  %235 = vmatprep.subr.mxu0 0.0
  %236 = vmatpush1.xpose.msra.mxu0 0.0
  %237 = vmatprep.subr.mxu0 0.0
  %238 = vmatpush1.xpose.msra.mxu0 0.0
  %239 = vmatprep.subr.mxu0 0.0
  %240 = vmatpush1.xpose.msra.mxu0 0.0
  %241 = vmatprep.subr.mxu0 0.0
  %242 = vmatpush1.xpose.msra.mxu0 0.0
  %243 = vmatprep.subr.mxu0 0.0
  %244 = vmatpush1.xpose.msra.mxu0 0.0
  %245 = vmatprep.subr.mxu0 0.0
  %246 = vmatpush1.xpose.msra.mxu0 0.0
  %247 = vmatprep.subr.mxu0 0.0
  %248 = vmatpush1.xpose.msra.mxu0 0.0
  %249 = vmatprep.subr.mxu0 0.0
  %250 = vmatpush1.xpose.msra.mxu0 0.0
  %251 = vmatprep.subr.mxu0 0.0
  %252 = vmatpush1.xpose.msra.mxu0 0.0
  %253 = vmatprep.subr.mxu0 0.0
  %254 = vmatpush1.xpose.msra.mxu0 0.0
  %255 = vmatprep.subr.mxu0 0.0
  %256 = vmatpush1.xpose.msra.mxu0 0.0
  %257 = vmatprep.subr.mxu0 0.0
  %258 = vmatpush1.xpose.msra.mxu0 0.0
  %259 = vmatprep.subr.mxu0 0.0
  %260 = vmatpush1.xpose.msra.mxu0 0.0
  %261 = vmatprep.subr.mxu0 0.0
  %262 = vmatpush1.xpose.msra.mxu0 0.0
  %263 = vmatprep.subr.mxu0 0.0
  %264 = vmatpush1.xpose.msra.mxu0 0.0
  %265 = vmatprep.subr.mxu0 0.0
  %266 = vmatpush1.xpose.msra.mxu0 0.0
  %267 = vmatprep.subr.mxu0 0.0
  %268 = vmatpush1.xpose.msra.mxu0 0.0
  %269 = vmatprep.mubr.f32.mxu0 0.0
  %270 = vmatmul.mubr.f32.gmra.mrb[0].mxu0 %v201
  %v271 = vpop.f32.mrb[0].mxu0
  %v272 = vadd.f32 %v97, %v271
  %v273 = vpop.f32.mrb[0].mxu0
  %274 = vdwg.mxu0
  %276 = vrot.lane.b32.xlu0 %v194, 96
  %v277 = vpop.permute.xlu0 %276
  %v278 = vsel %vm200, %v194, 0
  %v280 = vsel %vm200, %v277, 0
  %282 = vmatprep.subr.mxu0 0.0
  %283 = vmatpush1.xpose.msra.mxu0 %v280
  %284 = vmatprep.subr.mxu0 0.0
  %285 = vmatpush1.xpose.msra.mxu0 0.0
  %286 = vmatprep.subr.mxu0 0.0
  %287 = vmatpush1.xpose.msra.mxu0 0.0
  %288 = vmatprep.subr.mxu0 0.0
  %289 = vmatpush1.xpose.msra.mxu0 0.0
  %290 = vmatprep.subr.mxu0 0.0
  %291 = vmatpush1.xpose.msra.mxu0 0.0
  %292 = vmatprep.subr.mxu0 0.0
  %293 = vmatpush1.xpose.msra.mxu0 0.0
  %294 = vmatprep.subr.mxu0 0.0
  %295 = vmatpush1.xpose.msra.mxu0 0.0
  %296 = vmatprep.subr.mxu0 0.0
  %297 = vmatpush1.xpose.msra.mxu0 0.0
  %298 = vmatprep.subr.mxu0 0.0
  %299 = vmatpush1.xpose.msra.mxu0 0.0
  %300 = vmatprep.subr.mxu0 0.0
  %301 = vmatpush1.xpose.msra.mxu0 0.0
  %302 = vmatprep.subr.mxu0 0.0
  %303 = vmatpush1.xpose.msra.mxu0 0.0
  %304 = vmatprep.subr.mxu0 0.0
  %305 = vmatpush1.xpose.msra.mxu0 0.0
  %306 = vmatprep.subr.mxu0 0.0
  %307 = vmatpush1.xpose.msra.mxu0 0.0
  %308 = vmatprep.subr.mxu0 0.0
  %309 = vmatpush1.xpose.msra.mxu0 0.0
  %310 = vmatprep.subr.mxu0 0.0
  %311 = vmatpush1.xpose.msra.mxu0 0.0
  %312 = vmatprep.subr.mxu0 0.0
  %313 = vmatpush1.xpose.msra.mxu0 0.0
  %314 = vmatprep.subr.mxu0 0.0
  %315 = vmatpush1.xpose.msra.mxu0 0.0
  %316 = vmatprep.subr.mxu0 0.0
  %317 = vmatpush1.xpose.msra.mxu0 0.0
  %318 = vmatprep.subr.mxu0 0.0
  %319 = vmatpush1.xpose.msra.mxu0 0.0
  %320 = vmatprep.subr.mxu0 0.0
  %321 = vmatpush1.xpose.msra.mxu0 0.0
  %322 = vmatprep.subr.mxu0 0.0
  %323 = vmatpush1.xpose.msra.mxu0 0.0
  %324 = vmatprep.subr.mxu0 0.0
  %325 = vmatpush1.xpose.msra.mxu0 0.0
  %326 = vmatprep.subr.mxu0 0.0
  %327 = vmatpush1.xpose.msra.mxu0 0.0
  %328 = vmatprep.subr.mxu0 0.0
  %329 = vmatpush1.xpose.msra.mxu0 0.0
  %330 = vmatprep.subr.mxu0 0.0
  %331 = vmatpush1.xpose.msra.mxu0 0.0
  %332 = vmatprep.subr.mxu0 0.0
  %333 = vmatpush1.xpose.msra.mxu0 0.0
  %334 = vmatprep.subr.mxu0 0.0
  %335 = vmatpush1.xpose.msra.mxu0 0.0
  %336 = vmatprep.subr.mxu0 0.0
  %337 = vmatpush1.xpose.msra.mxu0 0.0
  %338 = vmatprep.subr.mxu0 0.0
  %339 = vmatpush1.xpose.msra.mxu0 0.0
  %340 = vmatprep.subr.mxu0 0.0
  %341 = vmatpush1.xpose.msra.mxu0 0.0
  %342 = vmatprep.subr.mxu0 0.0
  %343 = vmatpush1.xpose.msra.mxu0 0.0
  %344 = vmatprep.subr.mxu0 0.0
  %345 = vmatpush1.xpose.msra.mxu0 0.0
  %346 = vmatprep.mubr.f32.mxu0 0.0
  %347 = vmatmul.mubr.f32.gmra.mrb[0].mxu0 %v278
  %v348 = vpop.f32.mrb[0].mxu0
  %v349 = vadd.f32 %v101, %v348
  %v350 = vpop.f32.mrb[0].mxu0
  %351 = vdwg.mxu0
  %v352 = vsel %vm200, %v272, -inf
  %353 = vmax.xlane.f32.xlu0 %v352
  %v354 = vpop.xlane.xlu0 %353
  %v355 = vsel %vm200, %v349, -inf
  %356 = vmax.xlane.f32.xlu0 %v355
  %v357 = vpop.xlane.xlu0 %356
  %v358 = vsub.f32 %v272, %v354
  %v359 = vsub.f32 %v349, %v357
  %v360 = vmul.f32 %v358, 1.442695
  %v361 = vpow.pop %v360
  %v362 = vmul.f32 %v359, 1.442695
  %v363 = vpow.pop %v362
  %v364 = vsel %vm200, %v361, 0.0
  %365 = vadd.xlane.f32.xlu0 %v364
  %v366 = vpop.xlane.xlu0 %365
  %v367 = vsel %vm200, %v363, 0.0
  %368 = vadd.xlane.f32.xlu0 %v367
  %v369 = vpop.xlane.xlu0 %368
  %v370 = vrcp.pop %v366
  %v371 = vrcp.pop %v369
  %v372 = vmul.f32 %v361, %v370
  %v373 = vmul.f32 %v363, %v371
  %374 = vrot.lane.b32.xlu0 %v189, 64
  %v375 = vpop.permute.xlu0 %374
  %v378 = vsel %vm200, %v372, 0
  %380 = vmatprep.subr.mxu0 0.0
  %381 = vmatpush1.msra.mxu0 %v375
  %382 = vmatprep.subr.mxu0 0.0
  %383 = vmatpush1.msra.mxu0 0.0
  %384 = vmatprep.subr.mxu0 0.0
  %385 = vmatpush1.msra.mxu0 0.0
  %386 = vmatprep.subr.mxu0 0.0
  %387 = vmatpush1.msra.mxu0 0.0
  %388 = vmatprep.subr.mxu0 0.0
  %389 = vmatpush1.msra.mxu0 0.0
  %390 = vmatprep.subr.mxu0 0.0
  %391 = vmatpush1.msra.mxu0 0.0
  %392 = vmatprep.subr.mxu0 0.0
  %393 = vmatpush1.msra.mxu0 0.0
  %394 = vmatprep.subr.mxu0 0.0
  %395 = vmatpush1.msra.mxu0 0.0
  %396 = vmatprep.subr.mxu0 0.0
  %397 = vmatpush1.msra.mxu0 0.0
  %398 = vmatprep.subr.mxu0 0.0
  %399 = vmatpush1.msra.mxu0 0.0
  %400 = vmatprep.subr.mxu0 0.0
  %401 = vmatpush1.msra.mxu0 0.0
  %402 = vmatprep.subr.mxu0 0.0
  %403 = vmatpush1.msra.mxu0 0.0
  %404 = vmatprep.subr.mxu0 0.0
  %405 = vmatpush1.msra.mxu0 0.0
  %406 = vmatprep.subr.mxu0 0.0
  %407 = vmatpush1.msra.mxu0 0.0
  %408 = vmatprep.subr.mxu0 0.0
  %409 = vmatpush1.msra.mxu0 0.0
  %410 = vmatprep.subr.mxu0 0.0
  %411 = vmatpush1.msra.mxu0 0.0
  %412 = vmatprep.subr.mxu0 0.0
  %413 = vmatpush1.msra.mxu0 0.0
  %414 = vmatprep.subr.mxu0 0.0
  %415 = vmatpush1.msra.mxu0 0.0
  %416 = vmatprep.subr.mxu0 0.0
  %417 = vmatpush1.msra.mxu0 0.0
  %418 = vmatprep.subr.mxu0 0.0
  %419 = vmatpush1.msra.mxu0 0.0
  %420 = vmatprep.subr.mxu0 0.0
  %421 = vmatpush1.msra.mxu0 0.0
  %422 = vmatprep.subr.mxu0 0.0
  %423 = vmatpush1.msra.mxu0 0.0
  %424 = vmatprep.subr.mxu0 0.0
  %425 = vmatpush1.msra.mxu0 0.0
  %426 = vmatprep.subr.mxu0 0.0
  %427 = vmatpush1.msra.mxu0 0.0
  %428 = vmatprep.subr.mxu0 0.0
  %429 = vmatpush1.msra.mxu0 0.0
  %430 = vmatprep.subr.mxu0 0.0
  %431 = vmatpush1.msra.mxu0 0.0
  %432 = vmatprep.subr.mxu0 0.0
  %433 = vmatpush1.msra.mxu0 0.0
  %434 = vmatprep.subr.mxu0 0.0
  %435 = vmatpush1.msra.mxu0 0.0
  %436 = vmatprep.subr.mxu0 0.0
  %437 = vmatpush1.msra.mxu0 0.0
  %438 = vmatprep.subr.mxu0 0.0
  %439 = vmatpush1.msra.mxu0 0.0
  %440 = vmatprep.subr.mxu0 0.0
  %441 = vmatpush1.msra.mxu0 0.0
  %442 = vmatprep.subr.mxu0 0.0
  %443 = vmatpush1.msra.mxu0 0.0
  %444 = vmatprep.mubr.f32.mxu0 0.0
  %445 = vmatmul.mubr.f32.gmra.mrb[0].mxu0 %v378
  %v446 = vpop.f32.mrb[0].mxu0
  %v447 = vadd.f32 0.0, %v446
  %v448 = vpop.f32.mrb[0].mxu0
  %449 = vdwg.mxu0
  %450 = vrot.lane.b32.xlu0 %v194, 64
  %v451 = vpop.permute.xlu0 %450
  %v454 = vsel %vm200, %v373, 0
  %456 = vmatprep.subr.mxu0 0.0
  %457 = vmatpush1.msra.mxu0 %v451
  %458 = vmatprep.subr.mxu0 0.0
  %459 = vmatpush1.msra.mxu0 0.0
  %460 = vmatprep.subr.mxu0 0.0
  %461 = vmatpush1.msra.mxu0 0.0
  %462 = vmatprep.subr.mxu0 0.0
  %463 = vmatpush1.msra.mxu0 0.0
  %464 = vmatprep.subr.mxu0 0.0
  %465 = vmatpush1.msra.mxu0 0.0
  %466 = vmatprep.subr.mxu0 0.0
  %467 = vmatpush1.msra.mxu0 0.0
  %468 = vmatprep.subr.mxu0 0.0
  %469 = vmatpush1.msra.mxu0 0.0
  %470 = vmatprep.subr.mxu0 0.0
  %471 = vmatpush1.msra.mxu0 0.0
  %472 = vmatprep.subr.mxu0 0.0
  %473 = vmatpush1.msra.mxu0 0.0
  %474 = vmatprep.subr.mxu0 0.0
  %475 = vmatpush1.msra.mxu0 0.0
  %476 = vmatprep.subr.mxu0 0.0
  %477 = vmatpush1.msra.mxu0 0.0
  %478 = vmatprep.subr.mxu0 0.0
  %479 = vmatpush1.msra.mxu0 0.0
  %480 = vmatprep.subr.mxu0 0.0
  %481 = vmatpush1.msra.mxu0 0.0
  %482 = vmatprep.subr.mxu0 0.0
  %483 = vmatpush1.msra.mxu0 0.0
  %484 = vmatprep.subr.mxu0 0.0
  %485 = vmatpush1.msra.mxu0 0.0
  %486 = vmatprep.subr.mxu0 0.0
  %487 = vmatpush1.msra.mxu0 0.0
  %488 = vmatprep.subr.mxu0 0.0
  %489 = vmatpush1.msra.mxu0 0.0
  %490 = vmatprep.subr.mxu0 0.0
  %491 = vmatpush1.msra.mxu0 0.0
  %492 = vmatprep.subr.mxu0 0.0
  %493 = vmatpush1.msra.mxu0 0.0
  %494 = vmatprep.subr.mxu0 0.0
  %495 = vmatpush1.msra.mxu0 0.0
  %496 = vmatprep.subr.mxu0 0.0
  %497 = vmatpush1.msra.mxu0 0.0
  %498 = vmatprep.subr.mxu0 0.0
  %499 = vmatpush1.msra.mxu0 0.0
  %500 = vmatprep.subr.mxu0 0.0
  %501 = vmatpush1.msra.mxu0 0.0
  %502 = vmatprep.subr.mxu0 0.0
  %503 = vmatpush1.msra.mxu0 0.0
  %504 = vmatprep.subr.mxu0 0.0
  %505 = vmatpush1.msra.mxu0 0.0
  %506 = vmatprep.subr.mxu0 0.0
  %507 = vmatpush1.msra.mxu0 0.0
  %508 = vmatprep.subr.mxu0 0.0
  %509 = vmatpush1.msra.mxu0 0.0
  %510 = vmatprep.subr.mxu0 0.0
  %511 = vmatpush1.msra.mxu0 0.0
  %512 = vmatprep.subr.mxu0 0.0
  %513 = vmatpush1.msra.mxu0 0.0
  %514 = vmatprep.subr.mxu0 0.0
  %515 = vmatpush1.msra.mxu0 0.0
  %516 = vmatprep.subr.mxu0 0.0
  %517 = vmatpush1.msra.mxu0 0.0
  %518 = vmatprep.subr.mxu0 0.0
  %519 = vmatpush1.msra.mxu0 0.0
  %520 = vmatprep.mubr.f32.mxu0 0.0
  %521 = vmatmul.mubr.f32.gmra.mrb[0].mxu0 %v454
  %v522 = vpop.f32.mrb[0].mxu0
  %v523 = vadd.f32 0.0, %v522
  %v524 = vpop.f32.mrb[0].mxu0
  %525 = vdwg.mxu0
  %526 = vrot.lane.b32.xlu0 %v189, 120
  %v527 = vpop.permute.xlu0 %526
  %528 = vrot.lane.b32.xlu0 %v189, 88
  %v529 = vpop.permute.xlu0 %528
  %v530 = vsel %vm200, %v527, 0
  %v532 = vsel %vm200, %v529, 0
  %534 = vmatprep.subr.mxu0 0.0
  %535 = vmatpush1.xpose.msra.mxu0 %v532
  %536 = vmatprep.subr.mxu0 0.0
  %537 = vmatpush1.xpose.msra.mxu0 0.0
  %538 = vmatprep.subr.mxu0 0.0
  %539 = vmatpush1.xpose.msra.mxu0 0.0
  %540 = vmatprep.subr.mxu0 0.0
  %541 = vmatpush1.xpose.msra.mxu0 0.0
  %542 = vmatprep.subr.mxu0 0.0
  %543 = vmatpush1.xpose.msra.mxu0 0.0
  %544 = vmatprep.subr.mxu0 0.0
  %545 = vmatpush1.xpose.msra.mxu0 0.0
  %546 = vmatprep.subr.mxu0 0.0
  %547 = vmatpush1.xpose.msra.mxu0 0.0
  %548 = vmatprep.subr.mxu0 0.0
  %549 = vmatpush1.xpose.msra.mxu0 0.0
  %550 = vmatprep.subr.mxu0 0.0
  %551 = vmatpush1.xpose.msra.mxu0 0.0
  %552 = vmatprep.subr.mxu0 0.0
  %553 = vmatpush1.xpose.msra.mxu0 0.0
  %554 = vmatprep.subr.mxu0 0.0
  %555 = vmatpush1.xpose.msra.mxu0 0.0
  %556 = vmatprep.subr.mxu0 0.0
  %557 = vmatpush1.xpose.msra.mxu0 0.0
  %558 = vmatprep.subr.mxu0 0.0
  %559 = vmatpush1.xpose.msra.mxu0 0.0
  %560 = vmatprep.subr.mxu0 0.0
  %561 = vmatpush1.xpose.msra.mxu0 0.0
  %562 = vmatprep.subr.mxu0 0.0
  %563 = vmatpush1.xpose.msra.mxu0 0.0
  %564 = vmatprep.subr.mxu0 0.0
  %565 = vmatpush1.xpose.msra.mxu0 0.0
  %566 = vmatprep.subr.mxu0 0.0
  %567 = vmatpush1.xpose.msra.mxu0 0.0
  %568 = vmatprep.subr.mxu0 0.0
  %569 = vmatpush1.xpose.msra.mxu0 0.0
  %570 = vmatprep.subr.mxu0 0.0
  %571 = vmatpush1.xpose.msra.mxu0 0.0
  %572 = vmatprep.subr.mxu0 0.0
  %573 = vmatpush1.xpose.msra.mxu0 0.0
  %574 = vmatprep.subr.mxu0 0.0
  %575 = vmatpush1.xpose.msra.mxu0 0.0
  %576 = vmatprep.subr.mxu0 0.0
  %577 = vmatpush1.xpose.msra.mxu0 0.0
  %578 = vmatprep.subr.mxu0 0.0
  %579 = vmatpush1.xpose.msra.mxu0 0.0
  %580 = vmatprep.subr.mxu0 0.0
  %581 = vmatpush1.xpose.msra.mxu0 0.0
  %582 = vmatprep.subr.mxu0 0.0
  %583 = vmatpush1.xpose.msra.mxu0 0.0
  %584 = vmatprep.subr.mxu0 0.0
  %585 = vmatpush1.xpose.msra.mxu0 0.0
  %586 = vmatprep.subr.mxu0 0.0
  %587 = vmatpush1.xpose.msra.mxu0 0.0
  %588 = vmatprep.subr.mxu0 0.0
  %589 = vmatpush1.xpose.msra.mxu0 0.0
  %590 = vmatprep.subr.mxu0 0.0
  %591 = vmatpush1.xpose.msra.mxu0 0.0
  %592 = vmatprep.subr.mxu0 0.0
  %593 = vmatpush1.xpose.msra.mxu0 0.0
  %594 = vmatprep.subr.mxu0 0.0
  %595 = vmatpush1.xpose.msra.mxu0 0.0
  %596 = vmatprep.subr.mxu0 0.0
  %597 = vmatpush1.xpose.msra.mxu0 0.0
  %598 = vmatprep.mubr.f32.mxu0 0.0
  %599 = vmatmul.mubr.f32.gmra.mrb[0].mxu0 %v530
  %v600 = vpop.f32.mrb[0].mxu0
  %v601 = vadd.f32 %v97, %v600
  %v602 = vpop.f32.mrb[0].mxu0
  %603 = vdwg.mxu0
  %604 = vrot.lane.b32.xlu0 %v194, 120
  %v605 = vpop.permute.xlu0 %604
  %606 = vrot.lane.b32.xlu0 %v194, 88
  %v607 = vpop.permute.xlu0 %606
  %v608 = vsel %vm200, %v605, 0
  %v610 = vsel %vm200, %v607, 0
  %612 = vmatprep.subr.mxu0 0.0
  %613 = vmatpush1.xpose.msra.mxu0 %v610
  %614 = vmatprep.subr.mxu0 0.0
  %615 = vmatpush1.xpose.msra.mxu0 0.0
  %616 = vmatprep.subr.mxu0 0.0
  %617 = vmatpush1.xpose.msra.mxu0 0.0
  %618 = vmatprep.subr.mxu0 0.0
  %619 = vmatpush1.xpose.msra.mxu0 0.0
  %620 = vmatprep.subr.mxu0 0.0
  %621 = vmatpush1.xpose.msra.mxu0 0.0
  %622 = vmatprep.subr.mxu0 0.0
  %623 = vmatpush1.xpose.msra.mxu0 0.0
  %624 = vmatprep.subr.mxu0 0.0
  %625 = vmatpush1.xpose.msra.mxu0 0.0
  %626 = vmatprep.subr.mxu0 0.0
  %627 = vmatpush1.xpose.msra.mxu0 0.0
  %628 = vmatprep.subr.mxu0 0.0
  %629 = vmatpush1.xpose.msra.mxu0 0.0
  %630 = vmatprep.subr.mxu0 0.0
  %631 = vmatpush1.xpose.msra.mxu0 0.0
  %632 = vmatprep.subr.mxu0 0.0
  %633 = vmatpush1.xpose.msra.mxu0 0.0
  %634 = vmatprep.subr.mxu0 0.0
  %635 = vmatpush1.xpose.msra.mxu0 0.0
  %636 = vmatprep.subr.mxu0 0.0
  %637 = vmatpush1.xpose.msra.mxu0 0.0
  %638 = vmatprep.subr.mxu0 0.0
  %639 = vmatpush1.xpose.msra.mxu0 0.0
  %640 = vmatprep.subr.mxu0 0.0
  %641 = vmatpush1.xpose.msra.mxu0 0.0
  %642 = vmatprep.subr.mxu0 0.0
  %643 = vmatpush1.xpose.msra.mxu0 0.0
  %644 = vmatprep.subr.mxu0 0.0
  %645 = vmatpush1.xpose.msra.mxu0 0.0
  %646 = vmatprep.subr.mxu0 0.0
  %647 = vmatpush1.xpose.msra.mxu0 0.0
  %648 = vmatprep.subr.mxu0 0.0
  %649 = vmatpush1.xpose.msra.mxu0 0.0
  %650 = vmatprep.subr.mxu0 0.0
  %651 = vmatpush1.xpose.msra.mxu0 0.0
  %652 = vmatprep.subr.mxu0 0.0
  %653 = vmatpush1.xpose.msra.mxu0 0.0
  %654 = vmatprep.subr.mxu0 0.0
  %655 = vmatpush1.xpose.msra.mxu0 0.0
  %656 = vmatprep.subr.mxu0 0.0
  %657 = vmatpush1.xpose.msra.mxu0 0.0
  %658 = vmatprep.subr.mxu0 0.0
  %659 = vmatpush1.xpose.msra.mxu0 0.0
  %660 = vmatprep.subr.mxu0 0.0
  %661 = vmatpush1.xpose.msra.mxu0 0.0
  %662 = vmatprep.subr.mxu0 0.0
  %663 = vmatpush1.xpose.msra.mxu0 0.0
  %664 = vmatprep.subr.mxu0 0.0
  %665 = vmatpush1.xpose.msra.mxu0 0.0
  %666 = vmatprep.subr.mxu0 0.0
  %667 = vmatpush1.xpose.msra.mxu0 0.0
  %668 = vmatprep.subr.mxu0 0.0
  %669 = vmatpush1.xpose.msra.mxu0 0.0
  %670 = vmatprep.subr.mxu0 0.0
  %671 = vmatpush1.xpose.msra.mxu0 0.0
  %672 = vmatprep.subr.mxu0 0.0
  %673 = vmatpush1.xpose.msra.mxu0 0.0
  %674 = vmatprep.subr.mxu0 0.0
  %675 = vmatpush1.xpose.msra.mxu0 0.0
  %676 = vmatprep.mubr.f32.mxu0 0.0
  %677 = vmatmul.mubr.f32.gmra.mrb[0].mxu0 %v608
  %v678 = vpop.f32.mrb[0].mxu0
  %v679 = vadd.f32 %v101, %v678
  %v680 = vpop.f32.mrb[0].mxu0
  %681 = vdwg.mxu0
  %v682 = vsel %vm200, %v601, -inf
  %683 = vmax.xlane.f32.xlu0 %v682
  %v684 = vpop.xlane.xlu0 %683
  %v685 = vsel %vm200, %v679, -inf
  %686 = vmax.xlane.f32.xlu0 %v685
  %v687 = vpop.xlane.xlu0 %686
  %v688 = vsub.f32 %v601, %v684
  %v689 = vsub.f32 %v679, %v687
  %v690 = vmul.f32 %v688, 1.442695
  %v691 = vpow.pop %v690
  %v692 = vmul.f32 %v689, 1.442695
  %v693 = vpow.pop %v692
  %v694 = vsel %vm200, %v691, 0.0
  %695 = vadd.xlane.f32.xlu0 %v694
  %v696 = vpop.xlane.xlu0 %695
  %v697 = vsel %vm200, %v693, 0.0
  %698 = vadd.xlane.f32.xlu0 %v697
  %v699 = vpop.xlane.xlu0 %698
  %v700 = vrcp.pop %v696
  %v701 = vrcp.pop %v699
  %v702 = vmul.f32 %v691, %v700
  %v703 = vmul.f32 %v693, %v701
  %704 = vrot.lane.b32.xlu0 %v189, 56
  %v705 = vpop.permute.xlu0 %704
  %v708 = vsel %vm200, %v702, 0
  %710 = vmatprep.subr.mxu0 0.0
  %711 = vmatpush1.msra.mxu0 %v705
  %712 = vmatprep.subr.mxu0 0.0
  %713 = vmatpush1.msra.mxu0 0.0
  %714 = vmatprep.subr.mxu0 0.0
  %715 = vmatpush1.msra.mxu0 0.0
  %716 = vmatprep.subr.mxu0 0.0
  %717 = vmatpush1.msra.mxu0 0.0
  %718 = vmatprep.subr.mxu0 0.0
  %719 = vmatpush1.msra.mxu0 0.0
  %720 = vmatprep.subr.mxu0 0.0
  %721 = vmatpush1.msra.mxu0 0.0
  %722 = vmatprep.subr.mxu0 0.0
  %723 = vmatpush1.msra.mxu0 0.0
  %724 = vmatprep.subr.mxu0 0.0
  %725 = vmatpush1.msra.mxu0 0.0
  %726 = vmatprep.subr.mxu0 0.0
  %727 = vmatpush1.msra.mxu0 0.0
  %728 = vmatprep.subr.mxu0 0.0
  %729 = vmatpush1.msra.mxu0 0.0
  %730 = vmatprep.subr.mxu0 0.0
  %731 = vmatpush1.msra.mxu0 0.0
  %732 = vmatprep.subr.mxu0 0.0
  %733 = vmatpush1.msra.mxu0 0.0
  %734 = vmatprep.subr.mxu0 0.0
  %735 = vmatpush1.msra.mxu0 0.0
  %736 = vmatprep.subr.mxu0 0.0
  %737 = vmatpush1.msra.mxu0 0.0
  %738 = vmatprep.subr.mxu0 0.0
  %739 = vmatpush1.msra.mxu0 0.0
  %740 = vmatprep.subr.mxu0 0.0
  %741 = vmatpush1.msra.mxu0 0.0
  %742 = vmatprep.subr.mxu0 0.0
  %743 = vmatpush1.msra.mxu0 0.0
  %744 = vmatprep.subr.mxu0 0.0
  %745 = vmatpush1.msra.mxu0 0.0
  %746 = vmatprep.subr.mxu0 0.0
  %747 = vmatpush1.msra.mxu0 0.0
  %748 = vmatprep.subr.mxu0 0.0
  %749 = vmatpush1.msra.mxu0 0.0
  %750 = vmatprep.subr.mxu0 0.0
  %751 = vmatpush1.msra.mxu0 0.0
  %752 = vmatprep.subr.mxu0 0.0
  %753 = vmatpush1.msra.mxu0 0.0
  %754 = vmatprep.subr.mxu0 0.0
  %755 = vmatpush1.msra.mxu0 0.0
  %756 = vmatprep.subr.mxu0 0.0
  %757 = vmatpush1.msra.mxu0 0.0
  %758 = vmatprep.subr.mxu0 0.0
  %759 = vmatpush1.msra.mxu0 0.0
  %760 = vmatprep.subr.mxu0 0.0
  %761 = vmatpush1.msra.mxu0 0.0
  %762 = vmatprep.subr.mxu0 0.0
  %763 = vmatpush1.msra.mxu0 0.0
  %764 = vmatprep.subr.mxu0 0.0
  %765 = vmatpush1.msra.mxu0 0.0
  %766 = vmatprep.subr.mxu0 0.0
  %767 = vmatpush1.msra.mxu0 0.0
  %768 = vmatprep.subr.mxu0 0.0
  %769 = vmatpush1.msra.mxu0 0.0
  %770 = vmatprep.subr.mxu0 0.0
  %771 = vmatpush1.msra.mxu0 0.0
  %772 = vmatprep.subr.mxu0 0.0
  %773 = vmatpush1.msra.mxu0 0.0
  %774 = vmatprep.mubr.f32.mxu0 0.0
  %775 = vmatmul.mubr.f32.gmra.mrb[0].mxu0 %v708
  %v776 = vpop.f32.mrb[0].mxu0
  %v777 = vadd.f32 0.0, %v776
  %v778 = vpop.f32.mrb[0].mxu0
  %779 = vdwg.mxu0
  %780 = vrot.lane.b32.xlu0 %v194, 56
  %v781 = vpop.permute.xlu0 %780
  %v784 = vsel %vm200, %v703, 0
  %786 = vmatprep.subr.mxu0 0.0
  %787 = vmatpush1.msra.mxu0 %v781
  %788 = vmatprep.subr.mxu0 0.0
  %789 = vmatpush1.msra.mxu0 0.0
  %790 = vmatprep.subr.mxu0 0.0
  %791 = vmatpush1.msra.mxu0 0.0
  %792 = vmatprep.subr.mxu0 0.0
  %793 = vmatpush1.msra.mxu0 0.0
  %794 = vmatprep.subr.mxu0 0.0
  %795 = vmatpush1.msra.mxu0 0.0
  %796 = vmatprep.subr.mxu0 0.0
  %797 = vmatpush1.msra.mxu0 0.0
  %798 = vmatprep.subr.mxu0 0.0
  %799 = vmatpush1.msra.mxu0 0.0
  %800 = vmatprep.subr.mxu0 0.0
  %801 = vmatpush1.msra.mxu0 0.0
  %802 = vmatprep.subr.mxu0 0.0
  %803 = vmatpush1.msra.mxu0 0.0
  %804 = vmatprep.subr.mxu0 0.0
  %805 = vmatpush1.msra.mxu0 0.0
  %806 = vmatprep.subr.mxu0 0.0
  %807 = vmatpush1.msra.mxu0 0.0
  %808 = vmatprep.subr.mxu0 0.0
  %809 = vmatpush1.msra.mxu0 0.0
  %810 = vmatprep.subr.mxu0 0.0
  %811 = vmatpush1.msra.mxu0 0.0
  %812 = vmatprep.subr.mxu0 0.0
  %813 = vmatpush1.msra.mxu0 0.0
  %814 = vmatprep.subr.mxu0 0.0
  %815 = vmatpush1.msra.mxu0 0.0
  %816 = vmatprep.subr.mxu0 0.0
  %817 = vmatpush1.msra.mxu0 0.0
  %818 = vmatprep.subr.mxu0 0.0
  %819 = vmatpush1.msra.mxu0 0.0
  %820 = vmatprep.subr.mxu0 0.0
  %821 = vmatpush1.msra.mxu0 0.0
  %822 = vmatprep.subr.mxu0 0.0
  %823 = vmatpush1.msra.mxu0 0.0
  %824 = vmatprep.subr.mxu0 0.0
  %825 = vmatpush1.msra.mxu0 0.0
  %826 = vmatprep.subr.mxu0 0.0
  %827 = vmatpush1.msra.mxu0 0.0
  %828 = vmatprep.subr.mxu0 0.0
  %829 = vmatpush1.msra.mxu0 0.0
  %830 = vmatprep.subr.mxu0 0.0
  %831 = vmatpush1.msra.mxu0 0.0
  %832 = vmatprep.subr.mxu0 0.0
  %833 = vmatpush1.msra.mxu0 0.0
  %834 = vmatprep.subr.mxu0 0.0
  %835 = vmatpush1.msra.mxu0 0.0
  %836 = vmatprep.subr.mxu0 0.0
  %837 = vmatpush1.msra.mxu0 0.0
  %838 = vmatprep.subr.mxu0 0.0
  %839 = vmatpush1.msra.mxu0 0.0
  %840 = vmatprep.subr.mxu0 0.0
  %841 = vmatpush1.msra.mxu0 0.0
  %842 = vmatprep.subr.mxu0 0.0
  %843 = vmatpush1.msra.mxu0 0.0
  %844 = vmatprep.subr.mxu0 0.0
  %845 = vmatpush1.msra.mxu0 0.0
  %846 = vmatprep.subr.mxu0 0.0
  %847 = vmatpush1.msra.mxu0 0.0
  %848 = vmatprep.subr.mxu0 0.0
  %849 = vmatpush1.msra.mxu0 0.0
  %850 = vmatprep.mubr.f32.mxu0 0.0
  %851 = vmatmul.mubr.f32.gmra.mrb[0].mxu0 %v784
  %v852 = vpop.f32.mrb[0].mxu0
  %v853 = vadd.f32 0.0, %v852
  %v854 = vpop.f32.mrb[0].mxu0
  %855 = vdwg.mxu0
  %856 = vrot.lane.b32.xlu0 %v189, 112
  %v857 = vpop.permute.xlu0 %856
  %858 = vrot.lane.b32.xlu0 %v189, 80
  %v859 = vpop.permute.xlu0 %858
  %v860 = vsel %vm200, %v857, 0
  %v862 = vsel %vm200, %v859, 0
  %864 = vmatprep.subr.mxu0 0.0
  %865 = vmatpush1.xpose.msra.mxu0 %v862
  %866 = vmatprep.subr.mxu0 0.0
  %867 = vmatpush1.xpose.msra.mxu0 0.0
  %868 = vmatprep.subr.mxu0 0.0
  %869 = vmatpush1.xpose.msra.mxu0 0.0
  %870 = vmatprep.subr.mxu0 0.0
  %871 = vmatpush1.xpose.msra.mxu0 0.0
  %872 = vmatprep.subr.mxu0 0.0
  %873 = vmatpush1.xpose.msra.mxu0 0.0
  %874 = vmatprep.subr.mxu0 0.0
  %875 = vmatpush1.xpose.msra.mxu0 0.0
  %876 = vmatprep.subr.mxu0 0.0
  %877 = vmatpush1.xpose.msra.mxu0 0.0
  %878 = vmatprep.subr.mxu0 0.0
  %879 = vmatpush1.xpose.msra.mxu0 0.0
  %880 = vmatprep.subr.mxu0 0.0
  %881 = vmatpush1.xpose.msra.mxu0 0.0
  %882 = vmatprep.subr.mxu0 0.0
  %883 = vmatpush1.xpose.msra.mxu0 0.0
  %884 = vmatprep.subr.mxu0 0.0
  %885 = vmatpush1.xpose.msra.mxu0 0.0
  %886 = vmatprep.subr.mxu0 0.0
  %887 = vmatpush1.xpose.msra.mxu0 0.0
  %888 = vmatprep.subr.mxu0 0.0
  %889 = vmatpush1.xpose.msra.mxu0 0.0
  %890 = vmatprep.subr.mxu0 0.0
  %891 = vmatpush1.xpose.msra.mxu0 0.0
  %892 = vmatprep.subr.mxu0 0.0
  %893 = vmatpush1.xpose.msra.mxu0 0.0
  %894 = vmatprep.subr.mxu0 0.0
  %895 = vmatpush1.xpose.msra.mxu0 0.0
  %896 = vmatprep.subr.mxu0 0.0
  %897 = vmatpush1.xpose.msra.mxu0 0.0
  %898 = vmatprep.subr.mxu0 0.0
  %899 = vmatpush1.xpose.msra.mxu0 0.0
  %900 = vmatprep.subr.mxu0 0.0
  %901 = vmatpush1.xpose.msra.mxu0 0.0
  %902 = vmatprep.subr.mxu0 0.0
  %903 = vmatpush1.xpose.msra.mxu0 0.0
  %904 = vmatprep.subr.mxu0 0.0
  %905 = vmatpush1.xpose.msra.mxu0 0.0
  %906 = vmatprep.subr.mxu0 0.0
  %907 = vmatpush1.xpose.msra.mxu0 0.0
  %908 = vmatprep.subr.mxu0 0.0
  %909 = vmatpush1.xpose.msra.mxu0 0.0
  %910 = vmatprep.subr.mxu0 0.0
  %911 = vmatpush1.xpose.msra.mxu0 0.0
  %912 = vmatprep.subr.mxu0 0.0
  %913 = vmatpush1.xpose.msra.mxu0 0.0
  %914 = vmatprep.subr.mxu0 0.0
  %915 = vmatpush1.xpose.msra.mxu0 0.0
  %916 = vmatprep.subr.mxu0 0.0
  %917 = vmatpush1.xpose.msra.mxu0 0.0
  %918 = vmatprep.subr.mxu0 0.0
  %919 = vmatpush1.xpose.msra.mxu0 0.0
  %920 = vmatprep.subr.mxu0 0.0
  %921 = vmatpush1.xpose.msra.mxu0 0.0
  %922 = vmatprep.subr.mxu0 0.0
  %923 = vmatpush1.xpose.msra.mxu0 0.0
  %924 = vmatprep.subr.mxu0 0.0
  %925 = vmatpush1.xpose.msra.mxu0 0.0
  %926 = vmatprep.subr.mxu0 0.0
  %927 = vmatpush1.xpose.msra.mxu0 0.0
  %928 = vmatprep.mubr.f32.mxu0 0.0
  %929 = vmatmul.mubr.f32.gmra.mrb[0].mxu0 %v860
  %v930 = vpop.f32.mrb[0].mxu0
  %v931 = vadd.f32 %v97, %v930
  %v932 = vpop.f32.mrb[0].mxu0
  %933 = vdwg.mxu0
  %934 = vrot.lane.b32.xlu0 %v194, 112
  %v935 = vpop.permute.xlu0 %934
  %936 = vrot.lane.b32.xlu0 %v194, 80
  %v937 = vpop.permute.xlu0 %936
  %v938 = vsel %vm200, %v935, 0
  %v940 = vsel %vm200, %v937, 0
  %942 = vmatprep.subr.mxu0 0.0
  %943 = vmatpush1.xpose.msra.mxu0 %v940
  %944 = vmatprep.subr.mxu0 0.0
  %945 = vmatpush1.xpose.msra.mxu0 0.0
  %946 = vmatprep.subr.mxu0 0.0
  %947 = vmatpush1.xpose.msra.mxu0 0.0
  %948 = vmatprep.subr.mxu0 0.0
  %949 = vmatpush1.xpose.msra.mxu0 0.0
  %950 = vmatprep.subr.mxu0 0.0
  %951 = vmatpush1.xpose.msra.mxu0 0.0
  %952 = vmatprep.subr.mxu0 0.0
  %953 = vmatpush1.xpose.msra.mxu0 0.0
  %954 = vmatprep.subr.mxu0 0.0
  %955 = vmatpush1.xpose.msra.mxu0 0.0
  %956 = vmatprep.subr.mxu0 0.0
  %957 = vmatpush1.xpose.msra.mxu0 0.0
  %958 = vmatprep.subr.mxu0 0.0
  %959 = vmatpush1.xpose.msra.mxu0 0.0
  %960 = vmatprep.subr.mxu0 0.0
  %961 = vmatpush1.xpose.msra.mxu0 0.0
  %962 = vmatprep.subr.mxu0 0.0
  %963 = vmatpush1.xpose.msra.mxu0 0.0
  %964 = vmatprep.subr.mxu0 0.0
  %965 = vmatpush1.xpose.msra.mxu0 0.0
  %966 = vmatprep.subr.mxu0 0.0
  %967 = vmatpush1.xpose.msra.mxu0 0.0
  %968 = vmatprep.subr.mxu0 0.0
  %969 = vmatpush1.xpose.msra.mxu0 0.0
  %970 = vmatprep.subr.mxu0 0.0
  %971 = vmatpush1.xpose.msra.mxu0 0.0
  %972 = vmatprep.subr.mxu0 0.0
  %973 = vmatpush1.xpose.msra.mxu0 0.0
  %974 = vmatprep.subr.mxu0 0.0
  %975 = vmatpush1.xpose.msra.mxu0 0.0
  %976 = vmatprep.subr.mxu0 0.0
  %977 = vmatpush1.xpose.msra.mxu0 0.0
  %978 = vmatprep.subr.mxu0 0.0
  %979 = vmatpush1.xpose.msra.mxu0 0.0
  %980 = vmatprep.subr.mxu0 0.0
  %981 = vmatpush1.xpose.msra.mxu0 0.0
  %982 = vmatprep.subr.mxu0 0.0
  %983 = vmatpush1.xpose.msra.mxu0 0.0
  %984 = vmatprep.subr.mxu0 0.0
  %985 = vmatpush1.xpose.msra.mxu0 0.0
  %986 = vmatprep.subr.mxu0 0.0
  %987 = vmatpush1.xpose.msra.mxu0 0.0
  %988 = vmatprep.subr.mxu0 0.0
  %989 = vmatpush1.xpose.msra.mxu0 0.0
  %990 = vmatprep.subr.mxu0 0.0
  %991 = vmatpush1.xpose.msra.mxu0 0.0
  %992 = vmatprep.subr.mxu0 0.0
  %993 = vmatpush1.xpose.msra.mxu0 0.0
  %994 = vmatprep.subr.mxu0 0.0
  %995 = vmatpush1.xpose.msra.mxu0 0.0
  %996 = vmatprep.subr.mxu0 0.0
  %997 = vmatpush1.xpose.msra.mxu0 0.0
  %998 = vmatprep.subr.mxu0 0.0
  %999 = vmatpush1.xpose.msra.mxu0 0.0
  %1000 = vmatprep.subr.mxu0 0.0
  %1001 = vmatpush1.xpose.msra.mxu0 0.0
  %1002 = vmatprep.subr.mxu0 0.0
  %1003 = vmatpush1.xpose.msra.mxu0 0.0
  %1004 = vmatprep.subr.mxu0 0.0
  %1005 = vmatpush1.xpose.msra.mxu0 0.0
  %1006 = vmatprep.mubr.f32.mxu0 0.0
  %1007 = vmatmul.mubr.f32.gmra.mrb[0].mxu0 %v938
  %v1008 = vpop.f32.mrb[0].mxu0
  %v1009 = vadd.f32 %v101, %v1008
  %v1010 = vpop.f32.mrb[0].mxu0
  %1011 = vdwg.mxu0
  %v1012 = vsel %vm200, %v931, -inf
  %1013 = vmax.xlane.f32.xlu0 %v1012
  %v1014 = vpop.xlane.xlu0 %1013
  %v1015 = vsel %vm200, %v1009, -inf
  %1016 = vmax.xlane.f32.xlu0 %v1015
  %v1017 = vpop.xlane.xlu0 %1016
  %v1018 = vsub.f32 %v931, %v1014
  %v1019 = vsub.f32 %v1009, %v1017
  %v1020 = vmul.f32 %v1018, 1.442695
  %v1021 = vpow.pop %v1020
  %v1022 = vmul.f32 %v1019, 1.442695
  %v1023 = vpow.pop %v1022
  %v1024 = vsel %vm200, %v1021, 0.0
  %1025 = vadd.xlane.f32.xlu0 %v1024
  %v1026 = vpop.xlane.xlu0 %1025
  %v1027 = vsel %vm200, %v1023, 0.0
  %1028 = vadd.xlane.f32.xlu0 %v1027
  %v1029 = vpop.xlane.xlu0 %1028
  %v1030 = vrcp.pop %v1026
  %v1031 = vrcp.pop %v1029
  %v1032 = vmul.f32 %v1021, %v1030
  %v1033 = vmul.f32 %v1023, %v1031
  %1034 = vrot.lane.b32.xlu0 %v189, 48
  %v1035 = vpop.permute.xlu0 %1034
  %v1038 = vsel %vm200, %v1032, 0
  %1040 = vmatprep.subr.mxu0 0.0
  %1041 = vmatpush1.msra.mxu0 %v1035
  %1042 = vmatprep.subr.mxu0 0.0
  %1043 = vmatpush1.msra.mxu0 0.0
  %1044 = vmatprep.subr.mxu0 0.0
  %1045 = vmatpush1.msra.mxu0 0.0
  %1046 = vmatprep.subr.mxu0 0.0
  %1047 = vmatpush1.msra.mxu0 0.0
  %1048 = vmatprep.subr.mxu0 0.0
  %1049 = vmatpush1.msra.mxu0 0.0
  %1050 = vmatprep.subr.mxu0 0.0
  %1051 = vmatpush1.msra.mxu0 0.0
  %1052 = vmatprep.subr.mxu0 0.0
  %1053 = vmatpush1.msra.mxu0 0.0
  %1054 = vmatprep.subr.mxu0 0.0
  %1055 = vmatpush1.msra.mxu0 0.0
  %1056 = vmatprep.subr.mxu0 0.0
  %1057 = vmatpush1.msra.mxu0 0.0
  %1058 = vmatprep.subr.mxu0 0.0
  %1059 = vmatpush1.msra.mxu0 0.0
  %1060 = vmatprep.subr.mxu0 0.0
  %1061 = vmatpush1.msra.mxu0 0.0
  %1062 = vmatprep.subr.mxu0 0.0
  %1063 = vmatpush1.msra.mxu0 0.0
  %1064 = vmatprep.subr.mxu0 0.0
  %1065 = vmatpush1.msra.mxu0 0.0
  %1066 = vmatprep.subr.mxu0 0.0
  %1067 = vmatpush1.msra.mxu0 0.0
  %1068 = vmatprep.subr.mxu0 0.0
  %1069 = vmatpush1.msra.mxu0 0.0
  %1070 = vmatprep.subr.mxu0 0.0
  %1071 = vmatpush1.msra.mxu0 0.0
  %1072 = vmatprep.subr.mxu0 0.0
  %1073 = vmatpush1.msra.mxu0 0.0
  %1074 = vmatprep.subr.mxu0 0.0
  %1075 = vmatpush1.msra.mxu0 0.0
  %1076 = vmatprep.subr.mxu0 0.0
  %1077 = vmatpush1.msra.mxu0 0.0
  %1078 = vmatprep.subr.mxu0 0.0
  %1079 = vmatpush1.msra.mxu0 0.0
  %1080 = vmatprep.subr.mxu0 0.0
  %1081 = vmatpush1.msra.mxu0 0.0
  %1082 = vmatprep.subr.mxu0 0.0
  %1083 = vmatpush1.msra.mxu0 0.0
  %1084 = vmatprep.subr.mxu0 0.0
  %1085 = vmatpush1.msra.mxu0 0.0
  %1086 = vmatprep.subr.mxu0 0.0
  %1087 = vmatpush1.msra.mxu0 0.0
  %1088 = vmatprep.subr.mxu0 0.0
  %1089 = vmatpush1.msra.mxu0 0.0
  %1090 = vmatprep.subr.mxu0 0.0
  %1091 = vmatpush1.msra.mxu0 0.0
  %1092 = vmatprep.subr.mxu0 0.0
  %1093 = vmatpush1.msra.mxu0 0.0
  %1094 = vmatprep.subr.mxu0 0.0
  %1095 = vmatpush1.msra.mxu0 0.0
  %1096 = vmatprep.subr.mxu0 0.0
  %1097 = vmatpush1.msra.mxu0 0.0
  %1098 = vmatprep.subr.mxu0 0.0
  %1099 = vmatpush1.msra.mxu0 0.0
  %1100 = vmatprep.subr.mxu0 0.0
  %1101 = vmatpush1.msra.mxu0 0.0
  %1102 = vmatprep.subr.mxu0 0.0
  %1103 = vmatpush1.msra.mxu0 0.0
  %1104 = vmatprep.mubr.f32.mxu0 0.0
  %1105 = vmatmul.mubr.f32.gmra.mrb[0].mxu0 %v1038
  %v1106 = vpop.f32.mrb[0].mxu0
  %v1107 = vadd.f32 0.0, %v1106
  %v1108 = vpop.f32.mrb[0].mxu0
  %1109 = vdwg.mxu0
  %1110 = vrot.lane.b32.xlu0 %v194, 48
  %v1111 = vpop.permute.xlu0 %1110
  %v1114 = vsel %vm200, %v1033, 0
  %1116 = vmatprep.subr.mxu0 0.0
  %1117 = vmatpush1.msra.mxu0 %v1111
  %1118 = vmatprep.subr.mxu0 0.0
  %1119 = vmatpush1.msra.mxu0 0.0
  %1120 = vmatprep.subr.mxu0 0.0
  %1121 = vmatpush1.msra.mxu0 0.0
  %1122 = vmatprep.subr.mxu0 0.0
  %1123 = vmatpush1.msra.mxu0 0.0
  %1124 = vmatprep.subr.mxu0 0.0
  %1125 = vmatpush1.msra.mxu0 0.0
  %1126 = vmatprep.subr.mxu0 0.0
  %1127 = vmatpush1.msra.mxu0 0.0
  %1128 = vmatprep.subr.mxu0 0.0
  %1129 = vmatpush1.msra.mxu0 0.0
  %1130 = vmatprep.subr.mxu0 0.0
  %1131 = vmatpush1.msra.mxu0 0.0
  %1132 = vmatprep.subr.mxu0 0.0
  %1133 = vmatpush1.msra.mxu0 0.0
  %1134 = vmatprep.subr.mxu0 0.0
  %1135 = vmatpush1.msra.mxu0 0.0
  %1136 = vmatprep.subr.mxu0 0.0
  %1137 = vmatpush1.msra.mxu0 0.0
  %1138 = vmatprep.subr.mxu0 0.0
  %1139 = vmatpush1.msra.mxu0 0.0
  %1140 = vmatprep.subr.mxu0 0.0
  %1141 = vmatpush1.msra.mxu0 0.0
  %1142 = vmatprep.subr.mxu0 0.0
  %1143 = vmatpush1.msra.mxu0 0.0
  %1144 = vmatprep.subr.mxu0 0.0
  %1145 = vmatpush1.msra.mxu0 0.0
  %1146 = vmatprep.subr.mxu0 0.0
  %1147 = vmatpush1.msra.mxu0 0.0
  %1148 = vmatprep.subr.mxu0 0.0
  %1149 = vmatpush1.msra.mxu0 0.0
  %1150 = vmatprep.subr.mxu0 0.0
  %1151 = vmatpush1.msra.mxu0 0.0
  %1152 = vmatprep.subr.mxu0 0.0
  %1153 = vmatpush1.msra.mxu0 0.0
  %1154 = vmatprep.subr.mxu0 0.0
  %1155 = vmatpush1.msra.mxu0 0.0
  %1156 = vmatprep.subr.mxu0 0.0
  %1157 = vmatpush1.msra.mxu0 0.0
  %1158 = vmatprep.subr.mxu0 0.0
  %1159 = vmatpush1.msra.mxu0 0.0
  %1160 = vmatprep.subr.mxu0 0.0
  %1161 = vmatpush1.msra.mxu0 0.0
  %1162 = vmatprep.subr.mxu0 0.0
  %1163 = vmatpush1.msra.mxu0 0.0
  %1164 = vmatprep.subr.mxu0 0.0
  %1165 = vmatpush1.msra.mxu0 0.0
  %1166 = vmatprep.subr.mxu0 0.0
  %1167 = vmatpush1.msra.mxu0 0.0
  %1168 = vmatprep.subr.mxu0 0.0
  %1169 = vmatpush1.msra.mxu0 0.0
  %1170 = vmatprep.subr.mxu0 0.0
  %1171 = vmatpush1.msra.mxu0 0.0
  %1172 = vmatprep.subr.mxu0 0.0
  %1173 = vmatpush1.msra.mxu0 0.0
  %1174 = vmatprep.subr.mxu0 0.0
  %1175 = vmatpush1.msra.mxu0 0.0
  %1176 = vmatprep.subr.mxu0 0.0
  %1177 = vmatpush1.msra.mxu0 0.0
  %1178 = vmatprep.subr.mxu0 0.0
  %1179 = vmatpush1.msra.mxu0 0.0
  %1180 = vmatprep.mubr.f32.mxu0 0.0
  %1181 = vmatmul.mubr.f32.gmra.mrb[0].mxu0 %v1114
  %v1182 = vpop.f32.mrb[0].mxu0
  %v1183 = vadd.f32 0.0, %v1182
  %v1184 = vpop.f32.mrb[0].mxu0
  %1185 = vdwg.mxu0
  %1186 = vrot.lane.b32.xlu0 %v189, 104
  %v1187 = vpop.permute.xlu0 %1186
  %1188 = vrot.lane.b32.xlu0 %v189, 72
  %v1189 = vpop.permute.xlu0 %1188
  %v1190 = vsel %vm200, %v1187, 0
  %v1192 = vsel %vm200, %v1189, 0
  %1194 = vmatprep.subr.mxu0 0.0
  %1195 = vmatpush1.xpose.msra.mxu0 %v1192
  %1196 = vmatprep.subr.mxu0 0.0
  %1197 = vmatpush1.xpose.msra.mxu0 0.0
  %1198 = vmatprep.subr.mxu0 0.0
  %1199 = vmatpush1.xpose.msra.mxu0 0.0
  %1200 = vmatprep.subr.mxu0 0.0
  %1201 = vmatpush1.xpose.msra.mxu0 0.0
  %1202 = vmatprep.subr.mxu0 0.0
  %1203 = vmatpush1.xpose.msra.mxu0 0.0
  %1204 = vmatprep.subr.mxu0 0.0
  %1205 = vmatpush1.xpose.msra.mxu0 0.0
  %1206 = vmatprep.subr.mxu0 0.0
  %1207 = vmatpush1.xpose.msra.mxu0 0.0
  %1208 = vmatprep.subr.mxu0 0.0
  %1209 = vmatpush1.xpose.msra.mxu0 0.0
  %1210 = vmatprep.subr.mxu0 0.0
  %1211 = vmatpush1.xpose.msra.mxu0 0.0
  %1212 = vmatprep.subr.mxu0 0.0
  %1213 = vmatpush1.xpose.msra.mxu0 0.0
  %1214 = vmatprep.subr.mxu0 0.0
  %1215 = vmatpush1.xpose.msra.mxu0 0.0
  %1216 = vmatprep.subr.mxu0 0.0
  %1217 = vmatpush1.xpose.msra.mxu0 0.0
  %1218 = vmatprep.subr.mxu0 0.0
  %1219 = vmatpush1.xpose.msra.mxu0 0.0
  %1220 = vmatprep.subr.mxu0 0.0
  %1221 = vmatpush1.xpose.msra.mxu0 0.0
  %1222 = vmatprep.subr.mxu0 0.0
  %1223 = vmatpush1.xpose.msra.mxu0 0.0
  %1224 = vmatprep.subr.mxu0 0.0
  %1225 = vmatpush1.xpose.msra.mxu0 0.0
  %1226 = vmatprep.subr.mxu0 0.0
  %1227 = vmatpush1.xpose.msra.mxu0 0.0
  %1228 = vmatprep.subr.mxu0 0.0
  %1229 = vmatpush1.xpose.msra.mxu0 0.0
  %1230 = vmatprep.subr.mxu0 0.0
  %1231 = vmatpush1.xpose.msra.mxu0 0.0
  %1232 = vmatprep.subr.mxu0 0.0
  %1233 = vmatpush1.xpose.msra.mxu0 0.0
  %1234 = vmatprep.subr.mxu0 0.0
  %1235 = vmatpush1.xpose.msra.mxu0 0.0
  %1236 = vmatprep.subr.mxu0 0.0
  %1237 = vmatpush1.xpose.msra.mxu0 0.0
  %1238 = vmatprep.subr.mxu0 0.0
  %1239 = vmatpush1.xpose.msra.mxu0 0.0
  %1240 = vmatprep.subr.mxu0 0.0
  %1241 = vmatpush1.xpose.msra.mxu0 0.0
  %1242 = vmatprep.subr.mxu0 0.0
  %1243 = vmatpush1.xpose.msra.mxu0 0.0
  %1244 = vmatprep.subr.mxu0 0.0
  %1245 = vmatpush1.xpose.msra.mxu0 0.0
  %1246 = vmatprep.subr.mxu0 0.0
  %1247 = vmatpush1.xpose.msra.mxu0 0.0
  %1248 = vmatprep.subr.mxu0 0.0
  %1249 = vmatpush1.xpose.msra.mxu0 0.0
  %1250 = vmatprep.subr.mxu0 0.0
  %1251 = vmatpush1.xpose.msra.mxu0 0.0
  %1252 = vmatprep.subr.mxu0 0.0
  %1253 = vmatpush1.xpose.msra.mxu0 0.0
  %1254 = vmatprep.subr.mxu0 0.0
  %1255 = vmatpush1.xpose.msra.mxu0 0.0
  %1256 = vmatprep.subr.mxu0 0.0
  %1257 = vmatpush1.xpose.msra.mxu0 0.0
  %1258 = vmatprep.mubr.f32.mxu0 0.0
  %1259 = vmatmul.mubr.f32.gmra.mrb[0].mxu0 %v1190
  %v1260 = vpop.f32.mrb[0].mxu0
  %v1261 = vadd.f32 %v97, %v1260
  %v1262 = vpop.f32.mrb[0].mxu0
  %1263 = vdwg.mxu0
  %1264 = vrot.lane.b32.xlu0 %v194, 104
  %v1265 = vpop.permute.xlu0 %1264
  %1266 = vrot.lane.b32.xlu0 %v194, 72
  %v1267 = vpop.permute.xlu0 %1266
  %v1268 = vsel %vm200, %v1265, 0
  %v1270 = vsel %vm200, %v1267, 0
  %1272 = vmatprep.subr.mxu0 0.0
  %1273 = vmatpush1.xpose.msra.mxu0 %v1270
  %1274 = vmatprep.subr.mxu0 0.0
  %1275 = vmatpush1.xpose.msra.mxu0 0.0
  %1276 = vmatprep.subr.mxu0 0.0
  %1277 = vmatpush1.xpose.msra.mxu0 0.0
  %1278 = vmatprep.subr.mxu0 0.0
  %1279 = vmatpush1.xpose.msra.mxu0 0.0
  %1280 = vmatprep.subr.mxu0 0.0
  %1281 = vmatpush1.xpose.msra.mxu0 0.0
  %1282 = vmatprep.subr.mxu0 0.0
  %1283 = vmatpush1.xpose.msra.mxu0 0.0
  %1284 = vmatprep.subr.mxu0 0.0
  %1285 = vmatpush1.xpose.msra.mxu0 0.0
  %1286 = vmatprep.subr.mxu0 0.0
  %1287 = vmatpush1.xpose.msra.mxu0 0.0
  %1288 = vmatprep.subr.mxu0 0.0
  %1289 = vmatpush1.xpose.msra.mxu0 0.0
  %1290 = vmatprep.subr.mxu0 0.0
  %1291 = vmatpush1.xpose.msra.mxu0 0.0
  %1292 = vmatprep.subr.mxu0 0.0
  %1293 = vmatpush1.xpose.msra.mxu0 0.0
  %1294 = vmatprep.subr.mxu0 0.0
  %1295 = vmatpush1.xpose.msra.mxu0 0.0
  %1296 = vmatprep.subr.mxu0 0.0
  %1297 = vmatpush1.xpose.msra.mxu0 0.0
  %1298 = vmatprep.subr.mxu0 0.0
  %1299 = vmatpush1.xpose.msra.mxu0 0.0
  %1300 = vmatprep.subr.mxu0 0.0
  %1301 = vmatpush1.xpose.msra.mxu0 0.0
  %1302 = vmatprep.subr.mxu0 0.0
  %1303 = vmatpush1.xpose.msra.mxu0 0.0
  %1304 = vmatprep.subr.mxu0 0.0
  %1305 = vmatpush1.xpose.msra.mxu0 0.0
  %1306 = vmatprep.subr.mxu0 0.0
  %1307 = vmatpush1.xpose.msra.mxu0 0.0
  %1308 = vmatprep.subr.mxu0 0.0
  %1309 = vmatpush1.xpose.msra.mxu0 0.0
  %1310 = vmatprep.subr.mxu0 0.0
  %1311 = vmatpush1.xpose.msra.mxu0 0.0
  %1312 = vmatprep.subr.mxu0 0.0
  %1313 = vmatpush1.xpose.msra.mxu0 0.0
  %1314 = vmatprep.subr.mxu0 0.0
  %1315 = vmatpush1.xpose.msra.mxu0 0.0
  %1316 = vmatprep.subr.mxu0 0.0
  %1317 = vmatpush1.xpose.msra.mxu0 0.0
  %1318 = vmatprep.subr.mxu0 0.0
  %1319 = vmatpush1.xpose.msra.mxu0 0.0
  %1320 = vmatprep.subr.mxu0 0.0
  %1321 = vmatpush1.xpose.msra.mxu0 0.0
  %1322 = vmatprep.subr.mxu0 0.0
  %1323 = vmatpush1.xpose.msra.mxu0 0.0
  %1324 = vmatprep.subr.mxu0 0.0
  %1325 = vmatpush1.xpose.msra.mxu0 0.0
  %1326 = vmatprep.subr.mxu0 0.0
  %1327 = vmatpush1.xpose.msra.mxu0 0.0
  %1328 = vmatprep.subr.mxu0 0.0
  %1329 = vmatpush1.xpose.msra.mxu0 0.0
  %1330 = vmatprep.subr.mxu0 0.0
  %1331 = vmatpush1.xpose.msra.mxu0 0.0
  %1332 = vmatprep.subr.mxu0 0.0
  %1333 = vmatpush1.xpose.msra.mxu0 0.0
  %1334 = vmatprep.subr.mxu0 0.0
  %1335 = vmatpush1.xpose.msra.mxu0 0.0
  %1336 = vmatprep.mubr.f32.mxu0 0.0
  %1337 = vmatmul.mubr.f32.gmra.mrb[0].mxu0 %v1268
  %v1338 = vpop.f32.mrb[0].mxu0
  %v1339 = vadd.f32 %v101, %v1338
  %v1340 = vpop.f32.mrb[0].mxu0
  %1341 = vdwg.mxu0
  %v1342 = vsel %vm200, %v1261, -inf
  %1343 = vmax.xlane.f32.xlu0 %v1342
  %v1344 = vpop.xlane.xlu0 %1343
  %v1345 = vsel %vm200, %v1339, -inf
  %1346 = vmax.xlane.f32.xlu0 %v1345
  %v1347 = vpop.xlane.xlu0 %1346
  %v1348 = vsub.f32 %v1261, %v1344
  %v1349 = vsub.f32 %v1339, %v1347
  %v1350 = vmul.f32 %v1348, 1.442695
  %v1351 = vpow.pop %v1350
  %v1352 = vmul.f32 %v1349, 1.442695
  %v1353 = vpow.pop %v1352
  %v1354 = vsel %vm200, %v1351, 0.0
  %1355 = vadd.xlane.f32.xlu0 %v1354
  %v1356 = vpop.xlane.xlu0 %1355
  %v1357 = vsel %vm200, %v1353, 0.0
  %1358 = vadd.xlane.f32.xlu0 %v1357
  %v1359 = vpop.xlane.xlu0 %1358
  %v1360 = vrcp.pop %v1356
  %v1361 = vrcp.pop %v1359
  %v1362 = vmul.f32 %v1351, %v1360
  %v1363 = vmul.f32 %v1353, %v1361
  %1364 = vrot.lane.b32.xlu0 %v189, 40
  %v1365 = vpop.permute.xlu0 %1364
  %v1368 = vsel %vm200, %v1362, 0
  %1370 = vmatprep.subr.mxu0 0.0
  %1371 = vmatpush1.msra.mxu0 %v1365
  %1372 = vmatprep.subr.mxu0 0.0
  %1373 = vmatpush1.msra.mxu0 0.0
  %1374 = vmatprep.subr.mxu0 0.0
  %1375 = vmatpush1.msra.mxu0 0.0
  %1376 = vmatprep.subr.mxu0 0.0
  %1377 = vmatpush1.msra.mxu0 0.0
  %1378 = vmatprep.subr.mxu0 0.0
  %1379 = vmatpush1.msra.mxu0 0.0
  %1380 = vmatprep.subr.mxu0 0.0
  %1381 = vmatpush1.msra.mxu0 0.0
  %1382 = vmatprep.subr.mxu0 0.0
  %1383 = vmatpush1.msra.mxu0 0.0
  %1384 = vmatprep.subr.mxu0 0.0
  %1385 = vmatpush1.msra.mxu0 0.0
  %1386 = vmatprep.subr.mxu0 0.0
  %1387 = vmatpush1.msra.mxu0 0.0
  %1388 = vmatprep.subr.mxu0 0.0
  %1389 = vmatpush1.msra.mxu0 0.0
  %1390 = vmatprep.subr.mxu0 0.0
  %1391 = vmatpush1.msra.mxu0 0.0
  %1392 = vmatprep.subr.mxu0 0.0
  %1393 = vmatpush1.msra.mxu0 0.0
  %1394 = vmatprep.subr.mxu0 0.0
  %1395 = vmatpush1.msra.mxu0 0.0
  %1396 = vmatprep.subr.mxu0 0.0
  %1397 = vmatpush1.msra.mxu0 0.0
  %1398 = vmatprep.subr.mxu0 0.0
  %1399 = vmatpush1.msra.mxu0 0.0
  %1400 = vmatprep.subr.mxu0 0.0
  %1401 = vmatpush1.msra.mxu0 0.0
  %1402 = vmatprep.subr.mxu0 0.0
  %1403 = vmatpush1.msra.mxu0 0.0
  %1404 = vmatprep.subr.mxu0 0.0
  %1405 = vmatpush1.msra.mxu0 0.0
  %1406 = vmatprep.subr.mxu0 0.0
  %1407 = vmatpush1.msra.mxu0 0.0
  %1408 = vmatprep.subr.mxu0 0.0
  %1409 = vmatpush1.msra.mxu0 0.0
  %1410 = vmatprep.subr.mxu0 0.0
  %1411 = vmatpush1.msra.mxu0 0.0
  %1412 = vmatprep.subr.mxu0 0.0
  %1413 = vmatpush1.msra.mxu0 0.0
  %1414 = vmatprep.subr.mxu0 0.0
  %1415 = vmatpush1.msra.mxu0 0.0
  %1416 = vmatprep.subr.mxu0 0.0
  %1417 = vmatpush1.msra.mxu0 0.0
  %1418 = vmatprep.subr.mxu0 0.0
  %1419 = vmatpush1.msra.mxu0 0.0
  %1420 = vmatprep.subr.mxu0 0.0
  %1421 = vmatpush1.msra.mxu0 0.0
  %1422 = vmatprep.subr.mxu0 0.0
  %1423 = vmatpush1.msra.mxu0 0.0
  %1424 = vmatprep.subr.mxu0 0.0
  %1425 = vmatpush1.msra.mxu0 0.0
  %1426 = vmatprep.subr.mxu0 0.0
  %1427 = vmatpush1.msra.mxu0 0.0
  %1428 = vmatprep.subr.mxu0 0.0
  %1429 = vmatpush1.msra.mxu0 0.0
  %1430 = vmatprep.subr.mxu0 0.0
  %1431 = vmatpush1.msra.mxu0 0.0
  %1432 = vmatprep.subr.mxu0 0.0
  %1433 = vmatpush1.msra.mxu0 0.0
  %1434 = vmatprep.mubr.f32.mxu0 0.0
  %1435 = vmatmul.mubr.f32.gmra.mrb[0].mxu0 %v1368
  %v1436 = vpop.f32.mrb[0].mxu0
  %v1437 = vadd.f32 0.0, %v1436
  %v1438 = vpop.f32.mrb[0].mxu0
  %1439 = vdwg.mxu0
  %1440 = vrot.lane.b32.xlu0 %v194, 40
  %v1441 = vpop.permute.xlu0 %1440
  %v1444 = vsel %vm200, %v1363, 0
  %1446 = vmatprep.subr.mxu0 0.0
  %1447 = vmatpush1.msra.mxu0 %v1441
  %1448 = vmatprep.subr.mxu0 0.0
  %1449 = vmatpush1.msra.mxu0 0.0
  %1450 = vmatprep.subr.mxu0 0.0
  %1451 = vmatpush1.msra.mxu0 0.0
  %1452 = vmatprep.subr.mxu0 0.0
  %1453 = vmatpush1.msra.mxu0 0.0
  %1454 = vmatprep.subr.mxu0 0.0
  %1455 = vmatpush1.msra.mxu0 0.0
  %1456 = vmatprep.subr.mxu0 0.0
  %1457 = vmatpush1.msra.mxu0 0.0
  %1458 = vmatprep.subr.mxu0 0.0
  %1459 = vmatpush1.msra.mxu0 0.0
  %1460 = vmatprep.subr.mxu0 0.0
  %1461 = vmatpush1.msra.mxu0 0.0
  %1462 = vmatprep.subr.mxu0 0.0
  %1463 = vmatpush1.msra.mxu0 0.0
  %1464 = vmatprep.subr.mxu0 0.0
  %1465 = vmatpush1.msra.mxu0 0.0
  %1466 = vmatprep.subr.mxu0 0.0
  %1467 = vmatpush1.msra.mxu0 0.0
  %1468 = vmatprep.subr.mxu0 0.0
  %1469 = vmatpush1.msra.mxu0 0.0
  %1470 = vmatprep.subr.mxu0 0.0
  %1471 = vmatpush1.msra.mxu0 0.0
  %1472 = vmatprep.subr.mxu0 0.0
  %1473 = vmatpush1.msra.mxu0 0.0
  %1474 = vmatprep.subr.mxu0 0.0
  %1475 = vmatpush1.msra.mxu0 0.0
  %1476 = vmatprep.subr.mxu0 0.0
  %1477 = vmatpush1.msra.mxu0 0.0
  %1478 = vmatprep.subr.mxu0 0.0
  %1479 = vmatpush1.msra.mxu0 0.0
  %1480 = vmatprep.subr.mxu0 0.0
  %1481 = vmatpush1.msra.mxu0 0.0
  %1482 = vmatprep.subr.mxu0 0.0
  %1483 = vmatpush1.msra.mxu0 0.0
  %1484 = vmatprep.subr.mxu0 0.0
  %1485 = vmatpush1.msra.mxu0 0.0
  %1486 = vmatprep.subr.mxu0 0.0
  %1487 = vmatpush1.msra.mxu0 0.0
  %1488 = vmatprep.subr.mxu0 0.0
  %1489 = vmatpush1.msra.mxu0 0.0
  %1490 = vmatprep.subr.mxu0 0.0
  %1491 = vmatpush1.msra.mxu0 0.0
  %1492 = vmatprep.subr.mxu0 0.0
  %1493 = vmatpush1.msra.mxu0 0.0
  %1494 = vmatprep.subr.mxu0 0.0
  %1495 = vmatpush1.msra.mxu0 0.0
  %1496 = vmatprep.subr.mxu0 0.0
  %1497 = vmatpush1.msra.mxu0 0.0
  %1498 = vmatprep.subr.mxu0 0.0
  %1499 = vmatpush1.msra.mxu0 0.0
  %1500 = vmatprep.subr.mxu0 0.0
  %1501 = vmatpush1.msra.mxu0 0.0
  %1502 = vmatprep.subr.mxu0 0.0
  %1503 = vmatpush1.msra.mxu0 0.0
  %1504 = vmatprep.subr.mxu0 0.0
  %1505 = vmatpush1.msra.mxu0 0.0
  %1506 = vmatprep.subr.mxu0 0.0
  %1507 = vmatpush1.msra.mxu0 0.0
  %1508 = vmatprep.subr.mxu0 0.0
  %1509 = vmatpush1.msra.mxu0 0.0
  %1510 = vmatprep.mubr.f32.mxu0 0.0
  %1511 = vmatmul.mubr.f32.gmra.mrb[0].mxu0 %v1444
  %v1512 = vpop.f32.mrb[0].mxu0
  %v1513 = vadd.f32 0.0, %v1512
  %v1514 = vpop.f32.mrb[0].mxu0
  %1515 = vdwg.mxu0
  %1518 = vrot.lane.b32.xlu0 %v777, 8
  %v1519 = vpop.permute.xlu0 %1518
  %1520 = vrot.lane.b32.xlu0 %v853, 8
  %v1521 = vpop.permute.xlu0 %1520
  %1526 = vrot.lane.b32.xlu0 %v1107, 16
  %v1527 = vpop.permute.xlu0 %1526
  %1528 = vrot.lane.b32.xlu0 %v1183, 16
  %v1529 = vpop.permute.xlu0 %1528
  %1534 = vrot.lane.b32.xlu0 %v1437, 24
  %v1535 = vpop.permute.xlu0 %1534
  %1536 = vrot.lane.b32.xlu0 %v1513, 24
  %v1537 = vpop.permute.xlu0 %1536
  %v1540 = vsel %vm200, %v447, %v1519
  %v1541 = vsel %vm200, %v523, %v1521
  %vm1542 = vcmask 130048
  %v1543 = vsel %vm1542, %v1540, %v1527
  %v1544 = vsel %vm1542, %v1541, %v1529
  %vm1545 = vcmask 195584
  %v1546 = vsel %vm1545, %v1543, %v1535
  %v1547 = vsel %vm1545, %v1544, %v1537
  %v1548 = vld [vmem:[%s5] sm:$0xff]
  %v1549 = vld [vmem:[%s5 + $0x8] sm:$0xff]
  %v1550 = vld [vmem:[%s5 + $0x10] sm:$0xff]
  %v1551 = vld [vmem:[%s5 + $0x18] sm:$0xff]
  %v1552 = vlaneseq
  %v1553 = vshrl.u32 %v1552, 7
  %v1554 = vsub.s32 0, %v1553
  %v1555 = vrot.slane %v104, %v1554
  %v1557 = vsel %vm50, %v1546, 0
  %v1560 = vsel %vm50, %v1547, 0
  %1562 = vmatprep.subr.mxu0 0.0
  %1563 = vmatpush1.msra.mxu0 %v1548
  %1564 = vmatprep.subr.mxu0 0.0
  %1565 = vmatpush1.msra.mxu0 %v1549
  %1566 = vmatprep.subr.mxu0 0.0
  %1567 = vmatpush1.msra.mxu0 %v1550
  %1568 = vmatprep.subr.mxu0 0.0
  %1569 = vmatpush1.msra.mxu0 %v1551
  %1570 = vmatprep.subr.mxu0 0.0
  %1571 = vmatpush1.msra.mxu0 0.0
  %1572 = vmatprep.subr.mxu0 0.0
  %1573 = vmatpush1.msra.mxu0 0.0
  %1574 = vmatprep.subr.mxu0 0.0
  %1575 = vmatpush1.msra.mxu0 0.0
  %1576 = vmatprep.subr.mxu0 0.0
  %1577 = vmatpush1.msra.mxu0 0.0
  %1578 = vmatprep.subr.mxu0 0.0
  %1579 = vmatpush1.msra.mxu0 0.0
  %1580 = vmatprep.subr.mxu0 0.0
  %1581 = vmatpush1.msra.mxu0 0.0
  %1582 = vmatprep.subr.mxu0 0.0
  %1583 = vmatpush1.msra.mxu0 0.0
  %1584 = vmatprep.subr.mxu0 0.0
  %1585 = vmatpush1.msra.mxu0 0.0
  %1586 = vmatprep.subr.mxu0 0.0
  %1587 = vmatpush1.msra.mxu0 0.0
  %1588 = vmatprep.subr.mxu0 0.0
  %1589 = vmatpush1.msra.mxu0 0.0
  %1590 = vmatprep.subr.mxu0 0.0
  %1591 = vmatpush1.msra.mxu0 0.0
  %1592 = vmatprep.subr.mxu0 0.0
  %1593 = vmatpush1.msra.mxu0 0.0
  %1594 = vmatprep.subr.mxu0 0.0
  %1595 = vmatpush1.msra.mxu0 0.0
  %1596 = vmatprep.subr.mxu0 0.0
  %1597 = vmatpush1.msra.mxu0 0.0
  %1598 = vmatprep.subr.mxu0 0.0
  %1599 = vmatpush1.msra.mxu0 0.0
  %1600 = vmatprep.subr.mxu0 0.0
  %1601 = vmatpush1.msra.mxu0 0.0
  %1602 = vmatprep.subr.mxu0 0.0
  %1603 = vmatpush1.msra.mxu0 0.0
  %1604 = vmatprep.subr.mxu0 0.0
  %1605 = vmatpush1.msra.mxu0 0.0
  %1606 = vmatprep.subr.mxu0 0.0
  %1607 = vmatpush1.msra.mxu0 0.0
  %1608 = vmatprep.subr.mxu0 0.0
  %1609 = vmatpush1.msra.mxu0 0.0
  %1610 = vmatprep.subr.mxu0 0.0
  %1611 = vmatpush1.msra.mxu0 0.0
  %1612 = vmatprep.subr.mxu0 0.0
  %1613 = vmatpush1.msra.mxu0 0.0
  %1614 = vmatprep.subr.mxu0 0.0
  %1615 = vmatpush1.msra.mxu0 0.0
  %1616 = vmatprep.subr.mxu0 0.0
  %1617 = vmatpush1.msra.mxu0 0.0
  %1618 = vmatprep.subr.mxu0 0.0
  %1619 = vmatpush1.msra.mxu0 0.0
  %1620 = vmatprep.subr.mxu0 0.0
  %1621 = vmatpush1.msra.mxu0 0.0
  %1622 = vmatprep.subr.mxu0 0.0
  %1623 = vmatpush1.msra.mxu0 0.0
  %1624 = vmatprep.subr.mxu0 0.0
  %1625 = vmatpush1.msra.mxu0 0.0
  %1626 = vmatprep.mubr.f32.mxu0 0.0
  %1627 = vmatmul.mubr.f32.gmra.mrb[0].mxu0 %v1557
  %v1628 = vpop.f32.mrb[0].mxu0
  %v1629 = vadd.f32 %v1555, %v1628
  %v1630 = vpop.f32.mrb[0].mxu0
  %1631 = vmatprep.mubr.f32.mxu0 0.0
  %1632 = vmatmul.mubr.f32.gmra.mrb[0].mxu0 %v1560
  %v1633 = vpop.f32.mrb[0].mxu0
  %v1634 = vadd.f32 %v1555, %v1633
  %v1635 = vpop.f32.mrb[0].mxu0
  %1636 = vdwg.mxu0
  %v1637 = vadd.f32 %v88, %v1629
  %v1638 = vadd.f32 %v89, %v1634
  %v1639 = vsel %vm50, %v1637, 0.0
  %1640 = vadd.xlane.f32.xlu0 %v1639
  %v1641 = vpop.xlane.xlu0 %1640
  %v1642 = vsel %vm50, %v1638, 0.0
  %1643 = vadd.xlane.f32.xlu0 %v1642
  %v1644 = vpop.xlane.xlu0 %1643
  %v1645 = vmul.f32 %v1641, %v57
  %v1646 = vmul.f32 %v1644, %v57
  %v1647 = vsub.f32 %v1637, %v1645
  %v1648 = vsub.f32 %v1638, %v1646
  %v1649 = vmul.f32 %v1647, %v1647
  %v1650 = vmul.f32 %v1648, %v1648
  %v1651 = vsel %vm50, %v1649, 0.0
  %1652 = vadd.xlane.f32.xlu0 %v1651
  %v1653 = vpop.xlane.xlu0 %1652
  %v1654 = vsel %vm50, %v1650, 0.0
  %1655 = vadd.xlane.f32.xlu0 %v1654
  %v1656 = vpop.xlane.xlu0 %1655
  %v1657 = vmul.f32 %v1653, %v57
  %v1658 = vmul.f32 %v1656, %v57
  %v1659 = vadd.f32 %v1657, 1e-12
  %v1660 = vadd.f32 %v1658, 1e-12
  %v1661 = vrsqrt.pop %v1659
  %v1662 = vrsqrt.pop %v1660
  %v1663 = vmul.f32 %v1647, %v1661
  %v1664 = vmul.f32 %v1648, %v1662
  %v1665 = vlaneseq
  %v1666 = vshrl.u32 %v1665, 7
  %v1667 = vsub.s32 1, %v1666
  %v1668 = vrot.slane %v104, %v1667
  %v1669 = vmul.f32 %v1663, %v1668
  %v1670 = vmul.f32 %v1664, %v1668
  %v1671 = vlaneseq
  %v1672 = vshrl.u32 %v1671, 7
  %v1673 = vsub.s32 2, %v1672
  %v1674 = vrot.slane %v104, %v1673
  %v1675 = vadd.f32 %v1669, %v1674
  %v1676 = vadd.f32 %v1670, %v1674
  %v1677 = vld [vmem:[%s7] sm:$0xff]
  %v1678 = vld [vmem:[%s7 + $0x8] sm:$0xff]
  %v1679 = vld [vmem:[%s7 + $0x10] sm:$0xff]
  %v1680 = vld [vmem:[%s7 + $0x18] sm:$0xff]
  %v1681 = vld [vmem:[%s8] sm:$0x1]
  %v1683 = vlaneseq
  %v1684 = vshrl.u32 %v1683, 7
  %v1685 = vsub.s32 0, %v1684
  %v1686 = vrot.slane %v1681, %v1685
  %v1689 = vsel %vm50, %v1675, 0
  %v1692 = vsel %vm50, %v1676, 0
  %1694 = vmatprep.subr.mxu0 0.0
  %1695 = vmatpush1.msra.mxu0 %v1677
  %1696 = vmatprep.subr.mxu0 0.0
  %1697 = vmatpush1.msra.mxu0 %v1678
  %1698 = vmatprep.subr.mxu0 0.0
  %1699 = vmatpush1.msra.mxu0 %v1679
  %1700 = vmatprep.subr.mxu0 0.0
  %1701 = vmatpush1.msra.mxu0 %v1680
  %1702 = vmatprep.subr.mxu0 0.0
  %1703 = vmatpush1.msra.mxu0 0.0
  %1704 = vmatprep.subr.mxu0 0.0
  %1705 = vmatpush1.msra.mxu0 0.0
  %1706 = vmatprep.subr.mxu0 0.0
  %1707 = vmatpush1.msra.mxu0 0.0
  %1708 = vmatprep.subr.mxu0 0.0
  %1709 = vmatpush1.msra.mxu0 0.0
  %1710 = vmatprep.subr.mxu0 0.0
  %1711 = vmatpush1.msra.mxu0 0.0
  %1712 = vmatprep.subr.mxu0 0.0
  %1713 = vmatpush1.msra.mxu0 0.0
  %1714 = vmatprep.subr.mxu0 0.0
  %1715 = vmatpush1.msra.mxu0 0.0
  %1716 = vmatprep.subr.mxu0 0.0
  %1717 = vmatpush1.msra.mxu0 0.0
  %1718 = vmatprep.subr.mxu0 0.0
  %1719 = vmatpush1.msra.mxu0 0.0
  %1720 = vmatprep.subr.mxu0 0.0
  %1721 = vmatpush1.msra.mxu0 0.0
  %1722 = vmatprep.subr.mxu0 0.0
  %1723 = vmatpush1.msra.mxu0 0.0
  %1724 = vmatprep.subr.mxu0 0.0
  %1725 = vmatpush1.msra.mxu0 0.0
  %1726 = vmatprep.subr.mxu0 0.0
  %1727 = vmatpush1.msra.mxu0 0.0
  %1728 = vmatprep.subr.mxu0 0.0
  %1729 = vmatpush1.msra.mxu0 0.0
  %1730 = vmatprep.subr.mxu0 0.0
  %1731 = vmatpush1.msra.mxu0 0.0
  %1732 = vmatprep.subr.mxu0 0.0
  %1733 = vmatpush1.msra.mxu0 0.0
  %1734 = vmatprep.subr.mxu0 0.0
  %1735 = vmatpush1.msra.mxu0 0.0
  %1736 = vmatprep.subr.mxu0 0.0
  %1737 = vmatpush1.msra.mxu0 0.0
  %1738 = vmatprep.subr.mxu0 0.0
  %1739 = vmatpush1.msra.mxu0 0.0
  %1740 = vmatprep.subr.mxu0 0.0
  %1741 = vmatpush1.msra.mxu0 0.0
  %1742 = vmatprep.subr.mxu0 0.0
  %1743 = vmatpush1.msra.mxu0 0.0
  %1744 = vmatprep.subr.mxu0 0.0
  %1745 = vmatpush1.msra.mxu0 0.0
  %1746 = vmatprep.subr.mxu0 0.0
  %1747 = vmatpush1.msra.mxu0 0.0
  %1748 = vmatprep.subr.mxu0 0.0
  %1749 = vmatpush1.msra.mxu0 0.0
  %1750 = vmatprep.subr.mxu0 0.0
  %1751 = vmatpush1.msra.mxu0 0.0
  %1752 = vmatprep.subr.mxu0 0.0
  %1753 = vmatpush1.msra.mxu0 0.0
  %1754 = vmatprep.subr.mxu0 0.0
  %1755 = vmatpush1.msra.mxu0 0.0
  %1756 = vmatprep.subr.mxu0 0.0
  %1757 = vmatpush1.msra.mxu0 0.0
  %1758 = vmatprep.mubr.f32.mxu0 0.0
  %1759 = vmatmul.mubr.f32.gmra.mrb[0].mxu0 %v1689
  %v1760 = vpop.f32.mrb[0].mxu0
  %v1761 = vadd.f32 %v1686, %v1760
  %v1762 = vpop.f32.mrb[0].mxu0
  %1763 = vmatprep.mubr.f32.mxu0 0.0
  %1764 = vmatmul.mubr.f32.gmra.mrb[0].mxu0 %v1692
  %v1765 = vpop.f32.mrb[0].mxu0
  %v1766 = vadd.f32 %v1686, %v1765
  %v1767 = vpop.f32.mrb[0].mxu0
  %1768 = vdwg.mxu0
  %v1769 = vmul.f32 %v1761, %v1761
  %v1770 = vmul.f32 %v1766, %v1766
  %v1771 = vmul.f32 %v1761, %v1769
  %v1772 = vmul.f32 %v1766, %v1770
  %v1773 = vmul.f32 %v1771, 0.044715
  %v1774 = vmul.f32 %v1772, 0.044715
  %v1775 = vadd.f32 %v1761, %v1773
  %v1776 = vadd.f32 %v1766, %v1774
  %v1777 = vmul.f32 %v1775, 0.7978846
  %v1778 = vmul.f32 %v1776, 0.7978846
  %v1779 = vtanh.pop %v1777
  %v1780 = vtanh.pop %v1778
  %v1781 = vadd.f32 %v1779, 1.0
  %v1782 = vadd.f32 %v1780, 1.0
  %v1783 = vmul.f32 %v1781, 0.5
  %v1784 = vmul.f32 %v1782, 0.5
  %v1785 = vmul.f32 %v1761, %v1783
  %v1786 = vmul.f32 %v1766, %v1784
  %v1787 = vld [vmem:[%s9] sm:$0xff]
  %v1788 = vld [vmem:[%s9 + $0x8] sm:$0xff]
  %v1789 = vld [vmem:[%s9 + $0x10] sm:$0xff]
  %v1790 = vld [vmem:[%s9 + $0x18] sm:$0xff]
  %v1791 = vld [vmem:[%s9 + $0x20] sm:$0xff]
  %v1792 = vld [vmem:[%s9 + $0x28] sm:$0xff]
  %v1793 = vld [vmem:[%s9 + $0x30] sm:$0xff]
  %v1794 = vld [vmem:[%s9 + $0x38] sm:$0xff]
  %v1795 = vlaneseq
  %v1796 = vshrl.u32 %v1795, 7
  %v1797 = vsub.s32 3, %v1796
  %v1798 = vrot.slane %v104, %v1797
  %vm1799 = vcmask 523264
  %v1801 = vsel %vm1799, %v1785, 0
  %v1804 = vsel %vm1799, %v1786, 0
  %1806 = vmatprep.subr.mxu0 0.0
  %1807 = vmatpush1.msra.mxu0 %v1787
  %1808 = vmatprep.subr.mxu0 0.0
  %1809 = vmatpush1.msra.mxu0 %v1788
  %1810 = vmatprep.subr.mxu0 0.0
  %1811 = vmatpush1.msra.mxu0 %v1789
  %1812 = vmatprep.subr.mxu0 0.0
  %1813 = vmatpush1.msra.mxu0 %v1790
  %1814 = vmatprep.subr.mxu0 0.0
  %1815 = vmatpush1.msra.mxu0 %v1791
  %1816 = vmatprep.subr.mxu0 0.0
  %1817 = vmatpush1.msra.mxu0 %v1792
  %1818 = vmatprep.subr.mxu0 0.0
  %1819 = vmatpush1.msra.mxu0 %v1793
  %1820 = vmatprep.subr.mxu0 0.0
  %1821 = vmatpush1.msra.mxu0 %v1794
  %1822 = vmatprep.subr.mxu0 0.0
  %1823 = vmatpush1.msra.mxu0 0.0
  %1824 = vmatprep.subr.mxu0 0.0
  %1825 = vmatpush1.msra.mxu0 0.0
  %1826 = vmatprep.subr.mxu0 0.0
  %1827 = vmatpush1.msra.mxu0 0.0
  %1828 = vmatprep.subr.mxu0 0.0
  %1829 = vmatpush1.msra.mxu0 0.0
  %1830 = vmatprep.subr.mxu0 0.0
  %1831 = vmatpush1.msra.mxu0 0.0
  %1832 = vmatprep.subr.mxu0 0.0
  %1833 = vmatpush1.msra.mxu0 0.0
  %1834 = vmatprep.subr.mxu0 0.0
  %1835 = vmatpush1.msra.mxu0 0.0
  %1836 = vmatprep.subr.mxu0 0.0
  %1837 = vmatpush1.msra.mxu0 0.0
  %1838 = vmatprep.subr.mxu0 0.0
  %1839 = vmatpush1.msra.mxu0 0.0
  %1840 = vmatprep.subr.mxu0 0.0
  %1841 = vmatpush1.msra.mxu0 0.0
  %1842 = vmatprep.subr.mxu0 0.0
  %1843 = vmatpush1.msra.mxu0 0.0
  %1844 = vmatprep.subr.mxu0 0.0
  %1845 = vmatpush1.msra.mxu0 0.0
  %1846 = vmatprep.subr.mxu0 0.0
  %1847 = vmatpush1.msra.mxu0 0.0
  %1848 = vmatprep.subr.mxu0 0.0
  %1849 = vmatpush1.msra.mxu0 0.0
  %1850 = vmatprep.subr.mxu0 0.0
  %1851 = vmatpush1.msra.mxu0 0.0
  %1852 = vmatprep.subr.mxu0 0.0
  %1853 = vmatpush1.msra.mxu0 0.0
  %1854 = vmatprep.subr.mxu0 0.0
  %1855 = vmatpush1.msra.mxu0 0.0
  %1856 = vmatprep.subr.mxu0 0.0
  %1857 = vmatpush1.msra.mxu0 0.0
  %1858 = vmatprep.subr.mxu0 0.0
  %1859 = vmatpush1.msra.mxu0 0.0
  %1860 = vmatprep.subr.mxu0 0.0
  %1861 = vmatpush1.msra.mxu0 0.0
  %1862 = vmatprep.subr.mxu0 0.0
  %1863 = vmatpush1.msra.mxu0 0.0
  %1864 = vmatprep.subr.mxu0 0.0
  %1865 = vmatpush1.msra.mxu0 0.0
  %1866 = vmatprep.subr.mxu0 0.0
  %1867 = vmatpush1.msra.mxu0 0.0
  %1868 = vmatprep.subr.mxu0 0.0
  %1869 = vmatpush1.msra.mxu0 0.0
  %1870 = vmatprep.mubr.f32.mxu0 0.0
  %1871 = vmatmul.mubr.f32.gmra.mrb[0].mxu0 %v1801
  %v1872 = vpop.f32.mrb[0].mxu0
  %v1873 = vadd.f32 %v1798, %v1872
  %v1874 = vpop.f32.mrb[0].mxu0
  %1875 = vmatprep.mubr.f32.mxu0 0.0
  %1876 = vmatmul.mubr.f32.gmra.mrb[0].mxu0 %v1804
  %v1877 = vpop.f32.mrb[0].mxu0
  %v1878 = vadd.f32 %v1798, %v1877
  %v1879 = vpop.f32.mrb[0].mxu0
  %1880 = vdwg.mxu0
  %v1881 = vadd.f32 %v1675, %v1873
  %v1882 = vadd.f32 %v1676, %v1878
  %v1883 = vsel %vm50, %v1881, 0.0
  %1884 = vadd.xlane.f32.xlu0 %v1883
  %v1885 = vpop.xlane.xlu0 %1884
  %v1886 = vsel %vm50, %v1882, 0.0
  %1887 = vadd.xlane.f32.xlu0 %v1886
  %v1888 = vpop.xlane.xlu0 %1887
  %v1889 = vmul.f32 %v1885, %v57
  %v1890 = vmul.f32 %v1888, %v57
  %v1891 = vsub.f32 %v1881, %v1889
  %v1892 = vsub.f32 %v1882, %v1890
  %v1893 = vmul.f32 %v1891, %v1891
  %v1894 = vmul.f32 %v1892, %v1892
  %v1895 = vsel %vm50, %v1893, 0.0
  %1896 = vadd.xlane.f32.xlu0 %v1895
  %v1897 = vpop.xlane.xlu0 %1896
  %v1898 = vsel %vm50, %v1894, 0.0
  %1899 = vadd.xlane.f32.xlu0 %v1898
  %v1900 = vpop.xlane.xlu0 %1899
  %v1901 = vmul.f32 %v1897, %v57
  %v1902 = vmul.f32 %v1900, %v57
  %v1903 = vadd.f32 %v1901, 1e-12
  %v1904 = vadd.f32 %v1902, 1e-12
  %v1905 = vrsqrt.pop %v1903
  %v1906 = vrsqrt.pop %v1904
  %v1907 = vmul.f32 %v1891, %v1905
  %v1908 = vmul.f32 %v1892, %v1906
  %v1909 = vlaneseq
  %v1910 = vshrl.u32 %v1909, 7
  %v1911 = vsub.s32 4, %v1910
  %v1912 = vrot.slane %v104, %v1911
  %v1913 = vmul.f32 %v1907, %v1912
  %v1914 = vmul.f32 %v1908, %v1912
  %v1915 = vlaneseq
  %v1916 = vshrl.u32 %v1915, 7
  %v1917 = vsub.s32 5, %v1916
  %v1918 = vrot.slane %v104, %v1917
  %v1919 = vadd.f32 %v1913, %v1918
  %v1920 = vadd.f32 %v1914, %v1918
  %s1921 = scalar_lea.vmem %s6, 8
  %v1922 = vld [vmem:[%s1921] sm:$0x3f]
  %s1923 = scalar_lea.vmem %s3, 32
  %v1924 = vld [vmem:[%s1923] sm:$0xff]
  %v1925 = vld [vmem:[%s1923 + $0x8] sm:$0xff]
  %v1926 = vld [vmem:[%s1923 + $0x10] sm:$0xff]
  %v1927 = vld [vmem:[%s1923 + $0x18] sm:$0xff]
  %s1928 = scalar_lea.vmem %s4, 1
  %v1929 = vld [vmem:[%s1928] sm:$0x1]
  %v1931 = vlaneseq
  %v1932 = vshrl.u32 %v1931, 7
  %v1933 = vsub.s32 0, %v1932
  %v1934 = vrot.slane %v1929, %v1933
  %v1937 = vsel %vm50, %v1919, 0
  %v1940 = vsel %vm50, %v1920, 0
  %1942 = vmatprep.subr.mxu0 0.0
  %1943 = vmatpush1.msra.mxu0 %v1924
  %1944 = vmatprep.subr.mxu0 0.0
  %1945 = vmatpush1.msra.mxu0 %v1925
  %1946 = vmatprep.subr.mxu0 0.0
  %1947 = vmatpush1.msra.mxu0 %v1926
  %1948 = vmatprep.subr.mxu0 0.0
  %1949 = vmatpush1.msra.mxu0 %v1927
  %1950 = vmatprep.subr.mxu0 0.0
  %1951 = vmatpush1.msra.mxu0 0.0
  %1952 = vmatprep.subr.mxu0 0.0
  %1953 = vmatpush1.msra.mxu0 0.0
  %1954 = vmatprep.subr.mxu0 0.0
  %1955 = vmatpush1.msra.mxu0 0.0
  %1956 = vmatprep.subr.mxu0 0.0
  %1957 = vmatpush1.msra.mxu0 0.0
  %1958 = vmatprep.subr.mxu0 0.0
  %1959 = vmatpush1.msra.mxu0 0.0
  %1960 = vmatprep.subr.mxu0 0.0
  %1961 = vmatpush1.msra.mxu0 0.0
  %1962 = vmatprep.subr.mxu0 0.0
  %1963 = vmatpush1.msra.mxu0 0.0
  %1964 = vmatprep.subr.mxu0 0.0
  %1965 = vmatpush1.msra.mxu0 0.0
  %1966 = vmatprep.subr.mxu0 0.0
  %1967 = vmatpush1.msra.mxu0 0.0
  %1968 = vmatprep.subr.mxu0 0.0
  %1969 = vmatpush1.msra.mxu0 0.0
  %1970 = vmatprep.subr.mxu0 0.0
  %1971 = vmatpush1.msra.mxu0 0.0
  %1972 = vmatprep.subr.mxu0 0.0
  %1973 = vmatpush1.msra.mxu0 0.0
  %1974 = vmatprep.subr.mxu0 0.0
  %1975 = vmatpush1.msra.mxu0 0.0
  %1976 = vmatprep.subr.mxu0 0.0
  %1977 = vmatpush1.msra.mxu0 0.0
  %1978 = vmatprep.subr.mxu0 0.0
  %1979 = vmatpush1.msra.mxu0 0.0
  %1980 = vmatprep.subr.mxu0 0.0
  %1981 = vmatpush1.msra.mxu0 0.0
  %1982 = vmatprep.subr.mxu0 0.0
  %1983 = vmatpush1.msra.mxu0 0.0
  %1984 = vmatprep.subr.mxu0 0.0
  %1985 = vmatpush1.msra.mxu0 0.0
  %1986 = vmatprep.subr.mxu0 0.0
  %1987 = vmatpush1.msra.mxu0 0.0
  %1988 = vmatprep.subr.mxu0 0.0
  %1989 = vmatpush1.msra.mxu0 0.0
  %1990 = vmatprep.subr.mxu0 0.0
  %1991 = vmatpush1.msra.mxu0 0.0
  %1992 = vmatprep.subr.mxu0 0.0
  %1993 = vmatpush1.msra.mxu0 0.0
  %1994 = vmatprep.subr.mxu0 0.0
  %1995 = vmatpush1.msra.mxu0 0.0
  %1996 = vmatprep.subr.mxu0 0.0
  %1997 = vmatpush1.msra.mxu0 0.0
  %1998 = vmatprep.subr.mxu0 0.0
  %1999 = vmatpush1.msra.mxu0 0.0
  %2000 = vmatprep.subr.mxu0 0.0
  %2001 = vmatpush1.msra.mxu0 0.0
  %2002 = vmatprep.subr.mxu0 0.0
  %2003 = vmatpush1.msra.mxu0 0.0
  %2004 = vmatprep.subr.mxu0 0.0
  %2005 = vmatpush1.msra.mxu0 0.0
  %2006 = vmatprep.mubr.f32.mxu0 0.0
  %2007 = vmatmul.mubr.f32.gmra.mrb[0].mxu0 %v1937
  %v2008 = vpop.f32.mrb[0].mxu0
  %v2009 = vadd.f32 %v1934, %v2008
  %v2010 = vpop.f32.mrb[0].mxu0
  %2011 = vmatprep.mubr.f32.mxu0 0.0
  %2012 = vmatmul.mubr.f32.gmra.mrb[0].mxu0 %v1940
  %v2013 = vpop.f32.mrb[0].mxu0
  %v2014 = vadd.f32 %v1934, %v2013
  %v2015 = vpop.f32.mrb[0].mxu0
  %2016 = vdwg.mxu0
  %2018 = vrot.lane.b32.xlu0 %v2009, 96
  %v2019 = vpop.permute.xlu0 %2018
  %v2020 = vsel %vm200, %v2009, 0
  %v2022 = vsel %vm200, %v2019, 0
  %2024 = vmatprep.subr.mxu0 0.0
  %2025 = vmatpush1.xpose.msra.mxu0 %v2022
  %2026 = vmatprep.subr.mxu0 0.0
  %2027 = vmatpush1.xpose.msra.mxu0 0.0
  %2028 = vmatprep.subr.mxu0 0.0
  %2029 = vmatpush1.xpose.msra.mxu0 0.0
  %2030 = vmatprep.subr.mxu0 0.0
  %2031 = vmatpush1.xpose.msra.mxu0 0.0
  %2032 = vmatprep.subr.mxu0 0.0
  %2033 = vmatpush1.xpose.msra.mxu0 0.0
  %2034 = vmatprep.subr.mxu0 0.0
  %2035 = vmatpush1.xpose.msra.mxu0 0.0
  %2036 = vmatprep.subr.mxu0 0.0
  %2037 = vmatpush1.xpose.msra.mxu0 0.0
  %2038 = vmatprep.subr.mxu0 0.0
  %2039 = vmatpush1.xpose.msra.mxu0 0.0
  %2040 = vmatprep.subr.mxu0 0.0
  %2041 = vmatpush1.xpose.msra.mxu0 0.0
  %2042 = vmatprep.subr.mxu0 0.0
  %2043 = vmatpush1.xpose.msra.mxu0 0.0
  %2044 = vmatprep.subr.mxu0 0.0
  %2045 = vmatpush1.xpose.msra.mxu0 0.0
  %2046 = vmatprep.subr.mxu0 0.0
  %2047 = vmatpush1.xpose.msra.mxu0 0.0
  %2048 = vmatprep.subr.mxu0 0.0
  %2049 = vmatpush1.xpose.msra.mxu0 0.0
  %2050 = vmatprep.subr.mxu0 0.0
  %2051 = vmatpush1.xpose.msra.mxu0 0.0
  %2052 = vmatprep.subr.mxu0 0.0
  %2053 = vmatpush1.xpose.msra.mxu0 0.0
  %2054 = vmatprep.subr.mxu0 0.0
  %2055 = vmatpush1.xpose.msra.mxu0 0.0
  %2056 = vmatprep.subr.mxu0 0.0
  %2057 = vmatpush1.xpose.msra.mxu0 0.0
  %2058 = vmatprep.subr.mxu0 0.0
  %2059 = vmatpush1.xpose.msra.mxu0 0.0
  %2060 = vmatprep.subr.mxu0 0.0
  %2061 = vmatpush1.xpose.msra.mxu0 0.0
  %2062 = vmatprep.subr.mxu0 0.0
  %2063 = vmatpush1.xpose.msra.mxu0 0.0
  %2064 = vmatprep.subr.mxu0 0.0
  %2065 = vmatpush1.xpose.msra.mxu0 0.0
  %2066 = vmatprep.subr.mxu0 0.0
  %2067 = vmatpush1.xpose.msra.mxu0 0.0
  %2068 = vmatprep.subr.mxu0 0.0
  %2069 = vmatpush1.xpose.msra.mxu0 0.0
  %2070 = vmatprep.subr.mxu0 0.0
  %2071 = vmatpush1.xpose.msra.mxu0 0.0
  %2072 = vmatprep.subr.mxu0 0.0
  %2073 = vmatpush1.xpose.msra.mxu0 0.0
  %2074 = vmatprep.subr.mxu0 0.0
  %2075 = vmatpush1.xpose.msra.mxu0 0.0
  %2076 = vmatprep.subr.mxu0 0.0
  %2077 = vmatpush1.xpose.msra.mxu0 0.0
  %2078 = vmatprep.subr.mxu0 0.0
  %2079 = vmatpush1.xpose.msra.mxu0 0.0
  %2080 = vmatprep.subr.mxu0 0.0
  %2081 = vmatpush1.xpose.msra.mxu0 0.0
  %2082 = vmatprep.subr.mxu0 0.0
  %2083 = vmatpush1.xpose.msra.mxu0 0.0
  %2084 = vmatprep.subr.mxu0 0.0
  %2085 = vmatpush1.xpose.msra.mxu0 0.0
  %2086 = vmatprep.subr.mxu0 0.0
  %2087 = vmatpush1.xpose.msra.mxu0 0.0
  %2088 = vmatprep.mubr.f32.mxu0 0.0
  %2089 = vmatmul.mubr.f32.gmra.mrb[0].mxu0 %v2020
  %v2090 = vpop.f32.mrb[0].mxu0
  %v2091 = vadd.f32 %v97, %v2090
  %v2092 = vpop.f32.mrb[0].mxu0
  %2093 = vdwg.mxu0
  %2095 = vrot.lane.b32.xlu0 %v2014, 96
  %v2096 = vpop.permute.xlu0 %2095
  %v2097 = vsel %vm200, %v2014, 0
  %v2099 = vsel %vm200, %v2096, 0
  %2101 = vmatprep.subr.mxu0 0.0
  %2102 = vmatpush1.xpose.msra.mxu0 %v2099
  %2103 = vmatprep.subr.mxu0 0.0
  %2104 = vmatpush1.xpose.msra.mxu0 0.0
  %2105 = vmatprep.subr.mxu0 0.0
  %2106 = vmatpush1.xpose.msra.mxu0 0.0
  %2107 = vmatprep.subr.mxu0 0.0
  %2108 = vmatpush1.xpose.msra.mxu0 0.0
  %2109 = vmatprep.subr.mxu0 0.0
  %2110 = vmatpush1.xpose.msra.mxu0 0.0
  %2111 = vmatprep.subr.mxu0 0.0
  %2112 = vmatpush1.xpose.msra.mxu0 0.0
  %2113 = vmatprep.subr.mxu0 0.0
  %2114 = vmatpush1.xpose.msra.mxu0 0.0
  %2115 = vmatprep.subr.mxu0 0.0
  %2116 = vmatpush1.xpose.msra.mxu0 0.0
  %2117 = vmatprep.subr.mxu0 0.0
  %2118 = vmatpush1.xpose.msra.mxu0 0.0
  %2119 = vmatprep.subr.mxu0 0.0
  %2120 = vmatpush1.xpose.msra.mxu0 0.0
  %2121 = vmatprep.subr.mxu0 0.0
  %2122 = vmatpush1.xpose.msra.mxu0 0.0
  %2123 = vmatprep.subr.mxu0 0.0
  %2124 = vmatpush1.xpose.msra.mxu0 0.0
  %2125 = vmatprep.subr.mxu0 0.0
  %2126 = vmatpush1.xpose.msra.mxu0 0.0
  %2127 = vmatprep.subr.mxu0 0.0
  %2128 = vmatpush1.xpose.msra.mxu0 0.0
  %2129 = vmatprep.subr.mxu0 0.0
  %2130 = vmatpush1.xpose.msra.mxu0 0.0
  %2131 = vmatprep.subr.mxu0 0.0
  %2132 = vmatpush1.xpose.msra.mxu0 0.0
  %2133 = vmatprep.subr.mxu0 0.0
  %2134 = vmatpush1.xpose.msra.mxu0 0.0
  %2135 = vmatprep.subr.mxu0 0.0
  %2136 = vmatpush1.xpose.msra.mxu0 0.0
  %2137 = vmatprep.subr.mxu0 0.0
  %2138 = vmatpush1.xpose.msra.mxu0 0.0
  %2139 = vmatprep.subr.mxu0 0.0
  %2140 = vmatpush1.xpose.msra.mxu0 0.0
  %2141 = vmatprep.subr.mxu0 0.0
  %2142 = vmatpush1.xpose.msra.mxu0 0.0
  %2143 = vmatprep.subr.mxu0 0.0
  %2144 = vmatpush1.xpose.msra.mxu0 0.0
  %2145 = vmatprep.subr.mxu0 0.0
  %2146 = vmatpush1.xpose.msra.mxu0 0.0
  %2147 = vmatprep.subr.mxu0 0.0
  %2148 = vmatpush1.xpose.msra.mxu0 0.0
  %2149 = vmatprep.subr.mxu0 0.0
  %2150 = vmatpush1.xpose.msra.mxu0 0.0
  %2151 = vmatprep.subr.mxu0 0.0
  %2152 = vmatpush1.xpose.msra.mxu0 0.0
  %2153 = vmatprep.subr.mxu0 0.0
  %2154 = vmatpush1.xpose.msra.mxu0 0.0
  %2155 = vmatprep.subr.mxu0 0.0
  %2156 = vmatpush1.xpose.msra.mxu0 0.0
  %2157 = vmatprep.subr.mxu0 0.0
  %2158 = vmatpush1.xpose.msra.mxu0 0.0
  %2159 = vmatprep.subr.mxu0 0.0
  %2160 = vmatpush1.xpose.msra.mxu0 0.0
  %2161 = vmatprep.subr.mxu0 0.0
  %2162 = vmatpush1.xpose.msra.mxu0 0.0
  %2163 = vmatprep.subr.mxu0 0.0
  %2164 = vmatpush1.xpose.msra.mxu0 0.0
  %2165 = vmatprep.mubr.f32.mxu0 0.0
  %2166 = vmatmul.mubr.f32.gmra.mrb[0].mxu0 %v2097
  %v2167 = vpop.f32.mrb[0].mxu0
  %v2168 = vadd.f32 %v101, %v2167
  %v2169 = vpop.f32.mrb[0].mxu0
  %2170 = vdwg.mxu0
  %v2171 = vsel %vm200, %v2091, -inf
  %2172 = vmax.xlane.f32.xlu0 %v2171
  %v2173 = vpop.xlane.xlu0 %2172
  %v2174 = vsel %vm200, %v2168, -inf
  %2175 = vmax.xlane.f32.xlu0 %v2174
  %v2176 = vpop.xlane.xlu0 %2175
  %v2177 = vsub.f32 %v2091, %v2173
  %v2178 = vsub.f32 %v2168, %v2176
  %v2179 = vmul.f32 %v2177, 1.442695
  %v2180 = vpow.pop %v2179
  %v2181 = vmul.f32 %v2178, 1.442695
  %v2182 = vpow.pop %v2181
  %v2183 = vsel %vm200, %v2180, 0.0
  %2184 = vadd.xlane.f32.xlu0 %v2183
  %v2185 = vpop.xlane.xlu0 %2184
  %v2186 = vsel %vm200, %v2182, 0.0
  %2187 = vadd.xlane.f32.xlu0 %v2186
  %v2188 = vpop.xlane.xlu0 %2187
  %v2189 = vrcp.pop %v2185
  %v2190 = vrcp.pop %v2188
  %v2191 = vmul.f32 %v2180, %v2189
  %v2192 = vmul.f32 %v2182, %v2190
  %2193 = vrot.lane.b32.xlu0 %v2009, 64
  %v2194 = vpop.permute.xlu0 %2193
  %v2197 = vsel %vm200, %v2191, 0
  %2199 = vmatprep.subr.mxu0 0.0
  %2200 = vmatpush1.msra.mxu0 %v2194
  %2201 = vmatprep.subr.mxu0 0.0
  %2202 = vmatpush1.msra.mxu0 0.0
  %2203 = vmatprep.subr.mxu0 0.0
  %2204 = vmatpush1.msra.mxu0 0.0
  %2205 = vmatprep.subr.mxu0 0.0
  %2206 = vmatpush1.msra.mxu0 0.0
  %2207 = vmatprep.subr.mxu0 0.0
  %2208 = vmatpush1.msra.mxu0 0.0
  %2209 = vmatprep.subr.mxu0 0.0
  %2210 = vmatpush1.msra.mxu0 0.0
  %2211 = vmatprep.subr.mxu0 0.0
  %2212 = vmatpush1.msra.mxu0 0.0
  %2213 = vmatprep.subr.mxu0 0.0
  %2214 = vmatpush1.msra.mxu0 0.0
  %2215 = vmatprep.subr.mxu0 0.0
  %2216 = vmatpush1.msra.mxu0 0.0
  %2217 = vmatprep.subr.mxu0 0.0
  %2218 = vmatpush1.msra.mxu0 0.0
  %2219 = vmatprep.subr.mxu0 0.0
  %2220 = vmatpush1.msra.mxu0 0.0
  %2221 = vmatprep.subr.mxu0 0.0
  %2222 = vmatpush1.msra.mxu0 0.0
  %2223 = vmatprep.subr.mxu0 0.0
  %2224 = vmatpush1.msra.mxu0 0.0
  %2225 = vmatprep.subr.mxu0 0.0
  %2226 = vmatpush1.msra.mxu0 0.0
  %2227 = vmatprep.subr.mxu0 0.0
  %2228 = vmatpush1.msra.mxu0 0.0
  %2229 = vmatprep.subr.mxu0 0.0
  %2230 = vmatpush1.msra.mxu0 0.0
  %2231 = vmatprep.subr.mxu0 0.0
  %2232 = vmatpush1.msra.mxu0 0.0
  %2233 = vmatprep.subr.mxu0 0.0
  %2234 = vmatpush1.msra.mxu0 0.0
  %2235 = vmatprep.subr.mxu0 0.0
  %2236 = vmatpush1.msra.mxu0 0.0
  %2237 = vmatprep.subr.mxu0 0.0
  %2238 = vmatpush1.msra.mxu0 0.0
  %2239 = vmatprep.subr.mxu0 0.0
  %2240 = vmatpush1.msra.mxu0 0.0
  %2241 = vmatprep.subr.mxu0 0.0
  %2242 = vmatpush1.msra.mxu0 0.0
  %2243 = vmatprep.subr.mxu0 0.0
  %2244 = vmatpush1.msra.mxu0 0.0
  %2245 = vmatprep.subr.mxu0 0.0
  %2246 = vmatpush1.msra.mxu0 0.0
  %2247 = vmatprep.subr.mxu0 0.0
  %2248 = vmatpush1.msra.mxu0 0.0
  %2249 = vmatprep.subr.mxu0 0.0
  %2250 = vmatpush1.msra.mxu0 0.0
  %2251 = vmatprep.subr.mxu0 0.0
  %2252 = vmatpush1.msra.mxu0 0.0
  %2253 = vmatprep.subr.mxu0 0.0
  %2254 = vmatpush1.msra.mxu0 0.0
  %2255 = vmatprep.subr.mxu0 0.0
  %2256 = vmatpush1.msra.mxu0 0.0
  %2257 = vmatprep.subr.mxu0 0.0
  %2258 = vmatpush1.msra.mxu0 0.0
  %2259 = vmatprep.subr.mxu0 0.0
  %2260 = vmatpush1.msra.mxu0 0.0
  %2261 = vmatprep.subr.mxu0 0.0
  %2262 = vmatpush1.msra.mxu0 0.0
  %2263 = vmatprep.mubr.f32.mxu0 0.0
  %2264 = vmatmul.mubr.f32.gmra.mrb[0].mxu0 %v2197
  %v2265 = vpop.f32.mrb[0].mxu0
  %v2266 = vadd.f32 0.0, %v2265
  %v2267 = vpop.f32.mrb[0].mxu0
  %2268 = vdwg.mxu0
  %2269 = vrot.lane.b32.xlu0 %v2014, 64
  %v2270 = vpop.permute.xlu0 %2269
  %v2273 = vsel %vm200, %v2192, 0
  %2275 = vmatprep.subr.mxu0 0.0
  %2276 = vmatpush1.msra.mxu0 %v2270
  %2277 = vmatprep.subr.mxu0 0.0
  %2278 = vmatpush1.msra.mxu0 0.0
  %2279 = vmatprep.subr.mxu0 0.0
  %2280 = vmatpush1.msra.mxu0 0.0
  %2281 = vmatprep.subr.mxu0 0.0
  %2282 = vmatpush1.msra.mxu0 0.0
  %2283 = vmatprep.subr.mxu0 0.0
  %2284 = vmatpush1.msra.mxu0 0.0
  %2285 = vmatprep.subr.mxu0 0.0
  %2286 = vmatpush1.msra.mxu0 0.0
  %2287 = vmatprep.subr.mxu0 0.0
  %2288 = vmatpush1.msra.mxu0 0.0
  %2289 = vmatprep.subr.mxu0 0.0
  %2290 = vmatpush1.msra.mxu0 0.0
  %2291 = vmatprep.subr.mxu0 0.0
  %2292 = vmatpush1.msra.mxu0 0.0
  %2293 = vmatprep.subr.mxu0 0.0
  %2294 = vmatpush1.msra.mxu0 0.0
  %2295 = vmatprep.subr.mxu0 0.0
  %2296 = vmatpush1.msra.mxu0 0.0
  %2297 = vmatprep.subr.mxu0 0.0
  %2298 = vmatpush1.msra.mxu0 0.0
  %2299 = vmatprep.subr.mxu0 0.0
  %2300 = vmatpush1.msra.mxu0 0.0
  %2301 = vmatprep.subr.mxu0 0.0
  %2302 = vmatpush1.msra.mxu0 0.0
  %2303 = vmatprep.subr.mxu0 0.0
  %2304 = vmatpush1.msra.mxu0 0.0
  %2305 = vmatprep.subr.mxu0 0.0
  %2306 = vmatpush1.msra.mxu0 0.0
  %2307 = vmatprep.subr.mxu0 0.0
  %2308 = vmatpush1.msra.mxu0 0.0
  %2309 = vmatprep.subr.mxu0 0.0
  %2310 = vmatpush1.msra.mxu0 0.0
  %2311 = vmatprep.subr.mxu0 0.0
  %2312 = vmatpush1.msra.mxu0 0.0
  %2313 = vmatprep.subr.mxu0 0.0
  %2314 = vmatpush1.msra.mxu0 0.0
  %2315 = vmatprep.subr.mxu0 0.0
  %2316 = vmatpush1.msra.mxu0 0.0
  %2317 = vmatprep.subr.mxu0 0.0
  %2318 = vmatpush1.msra.mxu0 0.0
  %2319 = vmatprep.subr.mxu0 0.0
  %2320 = vmatpush1.msra.mxu0 0.0
  %2321 = vmatprep.subr.mxu0 0.0
  %2322 = vmatpush1.msra.mxu0 0.0
  %2323 = vmatprep.subr.mxu0 0.0
  %2324 = vmatpush1.msra.mxu0 0.0
  %2325 = vmatprep.subr.mxu0 0.0
  %2326 = vmatpush1.msra.mxu0 0.0
  %2327 = vmatprep.subr.mxu0 0.0
  %2328 = vmatpush1.msra.mxu0 0.0
  %2329 = vmatprep.subr.mxu0 0.0
  %2330 = vmatpush1.msra.mxu0 0.0
  %2331 = vmatprep.subr.mxu0 0.0
  %2332 = vmatpush1.msra.mxu0 0.0
  %2333 = vmatprep.subr.mxu0 0.0
  %2334 = vmatpush1.msra.mxu0 0.0
  %2335 = vmatprep.subr.mxu0 0.0
  %2336 = vmatpush1.msra.mxu0 0.0
  %2337 = vmatprep.subr.mxu0 0.0
  %2338 = vmatpush1.msra.mxu0 0.0
  %2339 = vmatprep.mubr.f32.mxu0 0.0
  %2340 = vmatmul.mubr.f32.gmra.mrb[0].mxu0 %v2273
  %v2341 = vpop.f32.mrb[0].mxu0
  %v2342 = vadd.f32 0.0, %v2341
  %v2343 = vpop.f32.mrb[0].mxu0
  %2344 = vdwg.mxu0
  %2345 = vrot.lane.b32.xlu0 %v2009, 120
  %v2346 = vpop.permute.xlu0 %2345
  %2347 = vrot.lane.b32.xlu0 %v2009, 88
  %v2348 = vpop.permute.xlu0 %2347
  %v2349 = vsel %vm200, %v2346, 0
  %v2351 = vsel %vm200, %v2348, 0
  %2353 = vmatprep.subr.mxu0 0.0
  %2354 = vmatpush1.xpose.msra.mxu0 %v2351
  %2355 = vmatprep.subr.mxu0 0.0
  %2356 = vmatpush1.xpose.msra.mxu0 0.0
  %2357 = vmatprep.subr.mxu0 0.0
  %2358 = vmatpush1.xpose.msra.mxu0 0.0
  %2359 = vmatprep.subr.mxu0 0.0
  %2360 = vmatpush1.xpose.msra.mxu0 0.0
  %2361 = vmatprep.subr.mxu0 0.0
  %2362 = vmatpush1.xpose.msra.mxu0 0.0
  %2363 = vmatprep.subr.mxu0 0.0
  %2364 = vmatpush1.xpose.msra.mxu0 0.0
  %2365 = vmatprep.subr.mxu0 0.0
  %2366 = vmatpush1.xpose.msra.mxu0 0.0
  %2367 = vmatprep.subr.mxu0 0.0
  %2368 = vmatpush1.xpose.msra.mxu0 0.0
  %2369 = vmatprep.subr.mxu0 0.0
  %2370 = vmatpush1.xpose.msra.mxu0 0.0
  %2371 = vmatprep.subr.mxu0 0.0
  %2372 = vmatpush1.xpose.msra.mxu0 0.0
  %2373 = vmatprep.subr.mxu0 0.0
  %2374 = vmatpush1.xpose.msra.mxu0 0.0
  %2375 = vmatprep.subr.mxu0 0.0
  %2376 = vmatpush1.xpose.msra.mxu0 0.0
  %2377 = vmatprep.subr.mxu0 0.0
  %2378 = vmatpush1.xpose.msra.mxu0 0.0
  %2379 = vmatprep.subr.mxu0 0.0
  %2380 = vmatpush1.xpose.msra.mxu0 0.0
  %2381 = vmatprep.subr.mxu0 0.0
  %2382 = vmatpush1.xpose.msra.mxu0 0.0
  %2383 = vmatprep.subr.mxu0 0.0
  %2384 = vmatpush1.xpose.msra.mxu0 0.0
  %2385 = vmatprep.subr.mxu0 0.0
  %2386 = vmatpush1.xpose.msra.mxu0 0.0
  %2387 = vmatprep.subr.mxu0 0.0
  %2388 = vmatpush1.xpose.msra.mxu0 0.0
  %2389 = vmatprep.subr.mxu0 0.0
  %2390 = vmatpush1.xpose.msra.mxu0 0.0
  %2391 = vmatprep.subr.mxu0 0.0
  %2392 = vmatpush1.xpose.msra.mxu0 0.0
  %2393 = vmatprep.subr.mxu0 0.0
  %2394 = vmatpush1.xpose.msra.mxu0 0.0
  %2395 = vmatprep.subr.mxu0 0.0
  %2396 = vmatpush1.xpose.msra.mxu0 0.0
  %2397 = vmatprep.subr.mxu0 0.0
  %2398 = vmatpush1.xpose.msra.mxu0 0.0
  %2399 = vmatprep.subr.mxu0 0.0
  %2400 = vmatpush1.xpose.msra.mxu0 0.0
  %2401 = vmatprep.subr.mxu0 0.0
  %2402 = vmatpush1.xpose.msra.mxu0 0.0
  %2403 = vmatprep.subr.mxu0 0.0
  %2404 = vmatpush1.xpose.msra.mxu0 0.0
  %2405 = vmatprep.subr.mxu0 0.0
  %2406 = vmatpush1.xpose.msra.mxu0 0.0
  %2407 = vmatprep.subr.mxu0 0.0
  %2408 = vmatpush1.xpose.msra.mxu0 0.0
  %2409 = vmatprep.subr.mxu0 0.0
  %2410 = vmatpush1.xpose.msra.mxu0 0.0
  %2411 = vmatprep.subr.mxu0 0.0
  %2412 = vmatpush1.xpose.msra.mxu0 0.0
  %2413 = vmatprep.subr.mxu0 0.0
  %2414 = vmatpush1.xpose.msra.mxu0 0.0
  %2415 = vmatprep.subr.mxu0 0.0
  %2416 = vmatpush1.xpose.msra.mxu0 0.0
  %2417 = vmatprep.mubr.f32.mxu0 0.0
  %2418 = vmatmul.mubr.f32.gmra.mrb[0].mxu0 %v2349
  %v2419 = vpop.f32.mrb[0].mxu0
  %v2420 = vadd.f32 %v97, %v2419
  %v2421 = vpop.f32.mrb[0].mxu0
  %2422 = vdwg.mxu0
  %2423 = vrot.lane.b32.xlu0 %v2014, 120
  %v2424 = vpop.permute.xlu0 %2423
  %2425 = vrot.lane.b32.xlu0 %v2014, 88
  %v2426 = vpop.permute.xlu0 %2425
  %v2427 = vsel %vm200, %v2424, 0
  %v2429 = vsel %vm200, %v2426, 0
  %2431 = vmatprep.subr.mxu0 0.0
  %2432 = vmatpush1.xpose.msra.mxu0 %v2429
  %2433 = vmatprep.subr.mxu0 0.0
  %2434 = vmatpush1.xpose.msra.mxu0 0.0
  %2435 = vmatprep.subr.mxu0 0.0
  %2436 = vmatpush1.xpose.msra.mxu0 0.0
  %2437 = vmatprep.subr.mxu0 0.0
  %2438 = vmatpush1.xpose.msra.mxu0 0.0
  %2439 = vmatprep.subr.mxu0 0.0
  %2440 = vmatpush1.xpose.msra.mxu0 0.0
  %2441 = vmatprep.subr.mxu0 0.0
  %2442 = vmatpush1.xpose.msra.mxu0 0.0
  %2443 = vmatprep.subr.mxu0 0.0
  %2444 = vmatpush1.xpose.msra.mxu0 0.0
  %2445 = vmatprep.subr.mxu0 0.0
  %2446 = vmatpush1.xpose.msra.mxu0 0.0
  %2447 = vmatprep.subr.mxu0 0.0
  %2448 = vmatpush1.xpose.msra.mxu0 0.0
  %2449 = vmatprep.subr.mxu0 0.0
  %2450 = vmatpush1.xpose.msra.mxu0 0.0
  %2451 = vmatprep.subr.mxu0 0.0
  %2452 = vmatpush1.xpose.msra.mxu0 0.0
  %2453 = vmatprep.subr.mxu0 0.0
  %2454 = vmatpush1.xpose.msra.mxu0 0.0
  %2455 = vmatprep.subr.mxu0 0.0
  %2456 = vmatpush1.xpose.msra.mxu0 0.0
  %2457 = vmatprep.subr.mxu0 0.0
  %2458 = vmatpush1.xpose.msra.mxu0 0.0
  %2459 = vmatprep.subr.mxu0 0.0
  %2460 = vmatpush1.xpose.msra.mxu0 0.0
  %2461 = vmatprep.subr.mxu0 0.0
  %2462 = vmatpush1.xpose.msra.mxu0 0.0
  %2463 = vmatprep.subr.mxu0 0.0
  %2464 = vmatpush1.xpose.msra.mxu0 0.0
  %2465 = vmatprep.subr.mxu0 0.0
  %2466 = vmatpush1.xpose.msra.mxu0 0.0
  %2467 = vmatprep.subr.mxu0 0.0
  %2468 = vmatpush1.xpose.msra.mxu0 0.0
  %2469 = vmatprep.subr.mxu0 0.0
  %2470 = vmatpush1.xpose.msra.mxu0 0.0
  %2471 = vmatprep.subr.mxu0 0.0
  %2472 = vmatpush1.xpose.msra.mxu0 0.0
  %2473 = vmatprep.subr.mxu0 0.0
  %2474 = vmatpush1.xpose.msra.mxu0 0.0
  %2475 = vmatprep.subr.mxu0 0.0
  %2476 = vmatpush1.xpose.msra.mxu0 0.0
  %2477 = vmatprep.subr.mxu0 0.0
  %2478 = vmatpush1.xpose.msra.mxu0 0.0
  %2479 = vmatprep.subr.mxu0 0.0
  %2480 = vmatpush1.xpose.msra.mxu0 0.0
  %2481 = vmatprep.subr.mxu0 0.0
  %2482 = vmatpush1.xpose.msra.mxu0 0.0
  %2483 = vmatprep.subr.mxu0 0.0
  %2484 = vmatpush1.xpose.msra.mxu0 0.0
  %2485 = vmatprep.subr.mxu0 0.0
  %2486 = vmatpush1.xpose.msra.mxu0 0.0
  %2487 = vmatprep.subr.mxu0 0.0
  %2488 = vmatpush1.xpose.msra.mxu0 0.0
  %2489 = vmatprep.subr.mxu0 0.0
  %2490 = vmatpush1.xpose.msra.mxu0 0.0
  %2491 = vmatprep.subr.mxu0 0.0
  %2492 = vmatpush1.xpose.msra.mxu0 0.0
  %2493 = vmatprep.subr.mxu0 0.0
  %2494 = vmatpush1.xpose.msra.mxu0 0.0
  %2495 = vmatprep.mubr.f32.mxu0 0.0
  %2496 = vmatmul.mubr.f32.gmra.mrb[0].mxu0 %v2427
  %v2497 = vpop.f32.mrb[0].mxu0
  %v2498 = vadd.f32 %v101, %v2497
  %v2499 = vpop.f32.mrb[0].mxu0
  %2500 = vdwg.mxu0
  %v2501 = vsel %vm200, %v2420, -inf
  %2502 = vmax.xlane.f32.xlu0 %v2501
  %v2503 = vpop.xlane.xlu0 %2502
  %v2504 = vsel %vm200, %v2498, -inf
  %2505 = vmax.xlane.f32.xlu0 %v2504
  %v2506 = vpop.xlane.xlu0 %2505
  %v2507 = vsub.f32 %v2420, %v2503
  %v2508 = vsub.f32 %v2498, %v2506
  %v2509 = vmul.f32 %v2507, 1.442695
  %v2510 = vpow.pop %v2509
  %v2511 = vmul.f32 %v2508, 1.442695
  %v2512 = vpow.pop %v2511
  %v2513 = vsel %vm200, %v2510, 0.0
  %2514 = vadd.xlane.f32.xlu0 %v2513
  %v2515 = vpop.xlane.xlu0 %2514
  %v2516 = vsel %vm200, %v2512, 0.0
  %2517 = vadd.xlane.f32.xlu0 %v2516
  %v2518 = vpop.xlane.xlu0 %2517
  %v2519 = vrcp.pop %v2515
  %v2520 = vrcp.pop %v2518
  %v2521 = vmul.f32 %v2510, %v2519
  %v2522 = vmul.f32 %v2512, %v2520
  %2523 = vrot.lane.b32.xlu0 %v2009, 56
  %v2524 = vpop.permute.xlu0 %2523
  %v2527 = vsel %vm200, %v2521, 0
  %2529 = vmatprep.subr.mxu0 0.0
  %2530 = vmatpush1.msra.mxu0 %v2524
  %2531 = vmatprep.subr.mxu0 0.0
  %2532 = vmatpush1.msra.mxu0 0.0
  %2533 = vmatprep.subr.mxu0 0.0
  %2534 = vmatpush1.msra.mxu0 0.0
  %2535 = vmatprep.subr.mxu0 0.0
  %2536 = vmatpush1.msra.mxu0 0.0
  %2537 = vmatprep.subr.mxu0 0.0
  %2538 = vmatpush1.msra.mxu0 0.0
  %2539 = vmatprep.subr.mxu0 0.0
  %2540 = vmatpush1.msra.mxu0 0.0
  %2541 = vmatprep.subr.mxu0 0.0
  %2542 = vmatpush1.msra.mxu0 0.0
  %2543 = vmatprep.subr.mxu0 0.0
  %2544 = vmatpush1.msra.mxu0 0.0
  %2545 = vmatprep.subr.mxu0 0.0
  %2546 = vmatpush1.msra.mxu0 0.0
  %2547 = vmatprep.subr.mxu0 0.0
  %2548 = vmatpush1.msra.mxu0 0.0
  %2549 = vmatprep.subr.mxu0 0.0
  %2550 = vmatpush1.msra.mxu0 0.0
  %2551 = vmatprep.subr.mxu0 0.0
  %2552 = vmatpush1.msra.mxu0 0.0
  %2553 = vmatprep.subr.mxu0 0.0
  %2554 = vmatpush1.msra.mxu0 0.0
  %2555 = vmatprep.subr.mxu0 0.0
  %2556 = vmatpush1.msra.mxu0 0.0
  %2557 = vmatprep.subr.mxu0 0.0
  %2558 = vmatpush1.msra.mxu0 0.0
  %2559 = vmatprep.subr.mxu0 0.0
  %2560 = vmatpush1.msra.mxu0 0.0
  %2561 = vmatprep.subr.mxu0 0.0
  %2562 = vmatpush1.msra.mxu0 0.0
  %2563 = vmatprep.subr.mxu0 0.0
  %2564 = vmatpush1.msra.mxu0 0.0
  %2565 = vmatprep.subr.mxu0 0.0
  %2566 = vmatpush1.msra.mxu0 0.0
  %2567 = vmatprep.subr.mxu0 0.0
  %2568 = vmatpush1.msra.mxu0 0.0
  %2569 = vmatprep.subr.mxu0 0.0
  %2570 = vmatpush1.msra.mxu0 0.0
  %2571 = vmatprep.subr.mxu0 0.0
  %2572 = vmatpush1.msra.mxu0 0.0
  %2573 = vmatprep.subr.mxu0 0.0
  %2574 = vmatpush1.msra.mxu0 0.0
  %2575 = vmatprep.subr.mxu0 0.0
  %2576 = vmatpush1.msra.mxu0 0.0
  %2577 = vmatprep.subr.mxu0 0.0
  %2578 = vmatpush1.msra.mxu0 0.0
  %2579 = vmatprep.subr.mxu0 0.0
  %2580 = vmatpush1.msra.mxu0 0.0
  %2581 = vmatprep.subr.mxu0 0.0
  %2582 = vmatpush1.msra.mxu0 0.0
  %2583 = vmatprep.subr.mxu0 0.0
  %2584 = vmatpush1.msra.mxu0 0.0
  %2585 = vmatprep.subr.mxu0 0.0
  %2586 = vmatpush1.msra.mxu0 0.0
  %2587 = vmatprep.subr.mxu0 0.0
  %2588 = vmatpush1.msra.mxu0 0.0
  %2589 = vmatprep.subr.mxu0 0.0
  %2590 = vmatpush1.msra.mxu0 0.0
  %2591 = vmatprep.subr.mxu0 0.0
  %2592 = vmatpush1.msra.mxu0 0.0
  %2593 = vmatprep.mubr.f32.mxu0 0.0
  %2594 = vmatmul.mubr.f32.gmra.mrb[0].mxu0 %v2527
  %v2595 = vpop.f32.mrb[0].mxu0
  %v2596 = vadd.f32 0.0, %v2595
  %v2597 = vpop.f32.mrb[0].mxu0
  %2598 = vdwg.mxu0
  %2599 = vrot.lane.b32.xlu0 %v2014, 56
  %v2600 = vpop.permute.xlu0 %2599
  %v2603 = vsel %vm200, %v2522, 0
  %2605 = vmatprep.subr.mxu0 0.0
  %2606 = vmatpush1.msra.mxu0 %v2600
  %2607 = vmatprep.subr.mxu0 0.0
  %2608 = vmatpush1.msra.mxu0 0.0
  %2609 = vmatprep.subr.mxu0 0.0
  %2610 = vmatpush1.msra.mxu0 0.0
  %2611 = vmatprep.subr.mxu0 0.0
  %2612 = vmatpush1.msra.mxu0 0.0
  %2613 = vmatprep.subr.mxu0 0.0
  %2614 = vmatpush1.msra.mxu0 0.0
  %2615 = vmatprep.subr.mxu0 0.0
  %2616 = vmatpush1.msra.mxu0 0.0
  %2617 = vmatprep.subr.mxu0 0.0
  %2618 = vmatpush1.msra.mxu0 0.0
  %2619 = vmatprep.subr.mxu0 0.0
  %2620 = vmatpush1.msra.mxu0 0.0
  %2621 = vmatprep.subr.mxu0 0.0
  %2622 = vmatpush1.msra.mxu0 0.0
  %2623 = vmatprep.subr.mxu0 0.0
  %2624 = vmatpush1.msra.mxu0 0.0
  %2625 = vmatprep.subr.mxu0 0.0
  %2626 = vmatpush1.msra.mxu0 0.0
  %2627 = vmatprep.subr.mxu0 0.0
  %2628 = vmatpush1.msra.mxu0 0.0
  %2629 = vmatprep.subr.mxu0 0.0
  %2630 = vmatpush1.msra.mxu0 0.0
  %2631 = vmatprep.subr.mxu0 0.0
  %2632 = vmatpush1.msra.mxu0 0.0
  %2633 = vmatprep.subr.mxu0 0.0
  %2634 = vmatpush1.msra.mxu0 0.0
  %2635 = vmatprep.subr.mxu0 0.0
  %2636 = vmatpush1.msra.mxu0 0.0
  %2637 = vmatprep.subr.mxu0 0.0
  %2638 = vmatpush1.msra.mxu0 0.0
  %2639 = vmatprep.subr.mxu0 0.0
  %2640 = vmatpush1.msra.mxu0 0.0
  %2641 = vmatprep.subr.mxu0 0.0
  %2642 = vmatpush1.msra.mxu0 0.0
  %2643 = vmatprep.subr.mxu0 0.0
  %2644 = vmatpush1.msra.mxu0 0.0
  %2645 = vmatprep.subr.mxu0 0.0
  %2646 = vmatpush1.msra.mxu0 0.0
  %2647 = vmatprep.subr.mxu0 0.0
  %2648 = vmatpush1.msra.mxu0 0.0
  %2649 = vmatprep.subr.mxu0 0.0
  %2650 = vmatpush1.msra.mxu0 0.0
  %2651 = vmatprep.subr.mxu0 0.0
  %2652 = vmatpush1.msra.mxu0 0.0
  %2653 = vmatprep.subr.mxu0 0.0
  %2654 = vmatpush1.msra.mxu0 0.0
  %2655 = vmatprep.subr.mxu0 0.0
  %2656 = vmatpush1.msra.mxu0 0.0
  %2657 = vmatprep.subr.mxu0 0.0
  %2658 = vmatpush1.msra.mxu0 0.0
  %2659 = vmatprep.subr.mxu0 0.0
  %2660 = vmatpush1.msra.mxu0 0.0
  %2661 = vmatprep.subr.mxu0 0.0
  %2662 = vmatpush1.msra.mxu0 0.0
  %2663 = vmatprep.subr.mxu0 0.0
  %2664 = vmatpush1.msra.mxu0 0.0
  %2665 = vmatprep.subr.mxu0 0.0
  %2666 = vmatpush1.msra.mxu0 0.0
  %2667 = vmatprep.subr.mxu0 0.0
  %2668 = vmatpush1.msra.mxu0 0.0
  %2669 = vmatprep.mubr.f32.mxu0 0.0
  %2670 = vmatmul.mubr.f32.gmra.mrb[0].mxu0 %v2603
  %v2671 = vpop.f32.mrb[0].mxu0
  %v2672 = vadd.f32 0.0, %v2671
  %v2673 = vpop.f32.mrb[0].mxu0
  %2674 = vdwg.mxu0
  %2675 = vrot.lane.b32.xlu0 %v2009, 112
  %v2676 = vpop.permute.xlu0 %2675
  %2677 = vrot.lane.b32.xlu0 %v2009, 80
  %v2678 = vpop.permute.xlu0 %2677
  %v2679 = vsel %vm200, %v2676, 0
  %v2681 = vsel %vm200, %v2678, 0
  %2683 = vmatprep.subr.mxu0 0.0
  %2684 = vmatpush1.xpose.msra.mxu0 %v2681
  %2685 = vmatprep.subr.mxu0 0.0
  %2686 = vmatpush1.xpose.msra.mxu0 0.0
  %2687 = vmatprep.subr.mxu0 0.0
  %2688 = vmatpush1.xpose.msra.mxu0 0.0
  %2689 = vmatprep.subr.mxu0 0.0
  %2690 = vmatpush1.xpose.msra.mxu0 0.0
  %2691 = vmatprep.subr.mxu0 0.0
  %2692 = vmatpush1.xpose.msra.mxu0 0.0
  %2693 = vmatprep.subr.mxu0 0.0
  %2694 = vmatpush1.xpose.msra.mxu0 0.0
  %2695 = vmatprep.subr.mxu0 0.0
  %2696 = vmatpush1.xpose.msra.mxu0 0.0
  %2697 = vmatprep.subr.mxu0 0.0
  %2698 = vmatpush1.xpose.msra.mxu0 0.0
  %2699 = vmatprep.subr.mxu0 0.0
  %2700 = vmatpush1.xpose.msra.mxu0 0.0
  %2701 = vmatprep.subr.mxu0 0.0
  %2702 = vmatpush1.xpose.msra.mxu0 0.0
  %2703 = vmatprep.subr.mxu0 0.0
  %2704 = vmatpush1.xpose.msra.mxu0 0.0
  %2705 = vmatprep.subr.mxu0 0.0
  %2706 = vmatpush1.xpose.msra.mxu0 0.0
  %2707 = vmatprep.subr.mxu0 0.0
  %2708 = vmatpush1.xpose.msra.mxu0 0.0
  %2709 = vmatprep.subr.mxu0 0.0
  %2710 = vmatpush1.xpose.msra.mxu0 0.0
  %2711 = vmatprep.subr.mxu0 0.0
  %2712 = vmatpush1.xpose.msra.mxu0 0.0
  %2713 = vmatprep.subr.mxu0 0.0
  %2714 = vmatpush1.xpose.msra.mxu0 0.0
  %2715 = vmatprep.subr.mxu0 0.0
  %2716 = vmatpush1.xpose.msra.mxu0 0.0
  %2717 = vmatprep.subr.mxu0 0.0
  %2718 = vmatpush1.xpose.msra.mxu0 0.0
  %2719 = vmatprep.subr.mxu0 0.0
  %2720 = vmatpush1.xpose.msra.mxu0 0.0
  %2721 = vmatprep.subr.mxu0 0.0
  %2722 = vmatpush1.xpose.msra.mxu0 0.0
  %2723 = vmatprep.subr.mxu0 0.0
  %2724 = vmatpush1.xpose.msra.mxu0 0.0
  %2725 = vmatprep.subr.mxu0 0.0
  %2726 = vmatpush1.xpose.msra.mxu0 0.0
  %2727 = vmatprep.subr.mxu0 0.0
  %2728 = vmatpush1.xpose.msra.mxu0 0.0
  %2729 = vmatprep.subr.mxu0 0.0
  %2730 = vmatpush1.xpose.msra.mxu0 0.0
  %2731 = vmatprep.subr.mxu0 0.0
  %2732 = vmatpush1.xpose.msra.mxu0 0.0
  %2733 = vmatprep.subr.mxu0 0.0
  %2734 = vmatpush1.xpose.msra.mxu0 0.0
  %2735 = vmatprep.subr.mxu0 0.0
  %2736 = vmatpush1.xpose.msra.mxu0 0.0
  %2737 = vmatprep.subr.mxu0 0.0
  %2738 = vmatpush1.xpose.msra.mxu0 0.0
  %2739 = vmatprep.subr.mxu0 0.0
  %2740 = vmatpush1.xpose.msra.mxu0 0.0
  %2741 = vmatprep.subr.mxu0 0.0
  %2742 = vmatpush1.xpose.msra.mxu0 0.0
  %2743 = vmatprep.subr.mxu0 0.0
  %2744 = vmatpush1.xpose.msra.mxu0 0.0
  %2745 = vmatprep.subr.mxu0 0.0
  %2746 = vmatpush1.xpose.msra.mxu0 0.0
  %2747 = vmatprep.mubr.f32.mxu0 0.0
  %2748 = vmatmul.mubr.f32.gmra.mrb[0].mxu0 %v2679
  %v2749 = vpop.f32.mrb[0].mxu0
  %v2750 = vadd.f32 %v97, %v2749
  %v2751 = vpop.f32.mrb[0].mxu0
  %2752 = vdwg.mxu0
  %2753 = vrot.lane.b32.xlu0 %v2014, 112
  %v2754 = vpop.permute.xlu0 %2753
  %2755 = vrot.lane.b32.xlu0 %v2014, 80
  %v2756 = vpop.permute.xlu0 %2755
  %v2757 = vsel %vm200, %v2754, 0
  %v2759 = vsel %vm200, %v2756, 0
  %2761 = vmatprep.subr.mxu0 0.0
  %2762 = vmatpush1.xpose.msra.mxu0 %v2759
  %2763 = vmatprep.subr.mxu0 0.0
  %2764 = vmatpush1.xpose.msra.mxu0 0.0
  %2765 = vmatprep.subr.mxu0 0.0
  %2766 = vmatpush1.xpose.msra.mxu0 0.0
  %2767 = vmatprep.subr.mxu0 0.0
  %2768 = vmatpush1.xpose.msra.mxu0 0.0
  %2769 = vmatprep.subr.mxu0 0.0
  %2770 = vmatpush1.xpose.msra.mxu0 0.0
  %2771 = vmatprep.subr.mxu0 0.0
  %2772 = vmatpush1.xpose.msra.mxu0 0.0
  %2773 = vmatprep.subr.mxu0 0.0
  %2774 = vmatpush1.xpose.msra.mxu0 0.0
  %2775 = vmatprep.subr.mxu0 0.0
  %2776 = vmatpush1.xpose.msra.mxu0 0.0
  %2777 = vmatprep.subr.mxu0 0.0
  %2778 = vmatpush1.xpose.msra.mxu0 0.0
  %2779 = vmatprep.subr.mxu0 0.0
  %2780 = vmatpush1.xpose.msra.mxu0 0.0
  %2781 = vmatprep.subr.mxu0 0.0
  %2782 = vmatpush1.xpose.msra.mxu0 0.0
  %2783 = vmatprep.subr.mxu0 0.0
  %2784 = vmatpush1.xpose.msra.mxu0 0.0
  %2785 = vmatprep.subr.mxu0 0.0
  %2786 = vmatpush1.xpose.msra.mxu0 0.0
  %2787 = vmatprep.subr.mxu0 0.0
  %2788 = vmatpush1.xpose.msra.mxu0 0.0
  %2789 = vmatprep.subr.mxu0 0.0
  %2790 = vmatpush1.xpose.msra.mxu0 0.0
  %2791 = vmatprep.subr.mxu0 0.0
  %2792 = vmatpush1.xpose.msra.mxu0 0.0
  %2793 = vmatprep.subr.mxu0 0.0
  %2794 = vmatpush1.xpose.msra.mxu0 0.0
  %2795 = vmatprep.subr.mxu0 0.0
  %2796 = vmatpush1.xpose.msra.mxu0 0.0
  %2797 = vmatprep.subr.mxu0 0.0
  %2798 = vmatpush1.xpose.msra.mxu0 0.0
  %2799 = vmatprep.subr.mxu0 0.0
  %2800 = vmatpush1.xpose.msra.mxu0 0.0
  %2801 = vmatprep.subr.mxu0 0.0
  %2802 = vmatpush1.xpose.msra.mxu0 0.0
  %2803 = vmatprep.subr.mxu0 0.0
  %2804 = vmatpush1.xpose.msra.mxu0 0.0
  %2805 = vmatprep.subr.mxu0 0.0
  %2806 = vmatpush1.xpose.msra.mxu0 0.0
  %2807 = vmatprep.subr.mxu0 0.0
  %2808 = vmatpush1.xpose.msra.mxu0 0.0
  %2809 = vmatprep.subr.mxu0 0.0
  %2810 = vmatpush1.xpose.msra.mxu0 0.0
  %2811 = vmatprep.subr.mxu0 0.0
  %2812 = vmatpush1.xpose.msra.mxu0 0.0
  %2813 = vmatprep.subr.mxu0 0.0
  %2814 = vmatpush1.xpose.msra.mxu0 0.0
  %2815 = vmatprep.subr.mxu0 0.0
  %2816 = vmatpush1.xpose.msra.mxu0 0.0
  %2817 = vmatprep.subr.mxu0 0.0
  %2818 = vmatpush1.xpose.msra.mxu0 0.0
  %2819 = vmatprep.subr.mxu0 0.0
  %2820 = vmatpush1.xpose.msra.mxu0 0.0
  %2821 = vmatprep.subr.mxu0 0.0
  %2822 = vmatpush1.xpose.msra.mxu0 0.0
  %2823 = vmatprep.subr.mxu0 0.0
  %2824 = vmatpush1.xpose.msra.mxu0 0.0
  %2825 = vmatprep.mubr.f32.mxu0 0.0
  %2826 = vmatmul.mubr.f32.gmra.mrb[0].mxu0 %v2757
  %v2827 = vpop.f32.mrb[0].mxu0
  %v2828 = vadd.f32 %v101, %v2827
  %v2829 = vpop.f32.mrb[0].mxu0
  %2830 = vdwg.mxu0
  %v2831 = vsel %vm200, %v2750, -inf
  %2832 = vmax.xlane.f32.xlu0 %v2831
  %v2833 = vpop.xlane.xlu0 %2832
  %v2834 = vsel %vm200, %v2828, -inf
  %2835 = vmax.xlane.f32.xlu0 %v2834
  %v2836 = vpop.xlane.xlu0 %2835
  %v2837 = vsub.f32 %v2750, %v2833
  %v2838 = vsub.f32 %v2828, %v2836
  %v2839 = vmul.f32 %v2837, 1.442695
  %v2840 = vpow.pop %v2839
  %v2841 = vmul.f32 %v2838, 1.442695
  %v2842 = vpow.pop %v2841
  %v2843 = vsel %vm200, %v2840, 0.0
  %2844 = vadd.xlane.f32.xlu0 %v2843
  %v2845 = vpop.xlane.xlu0 %2844
  %v2846 = vsel %vm200, %v2842, 0.0
  %2847 = vadd.xlane.f32.xlu0 %v2846
  %v2848 = vpop.xlane.xlu0 %2847
  %v2849 = vrcp.pop %v2845
  %v2850 = vrcp.pop %v2848
  %v2851 = vmul.f32 %v2840, %v2849
  %v2852 = vmul.f32 %v2842, %v2850
  %2853 = vrot.lane.b32.xlu0 %v2009, 48
  %v2854 = vpop.permute.xlu0 %2853
  %v2857 = vsel %vm200, %v2851, 0
  %2859 = vmatprep.subr.mxu0 0.0
  %2860 = vmatpush1.msra.mxu0 %v2854
  %2861 = vmatprep.subr.mxu0 0.0
  %2862 = vmatpush1.msra.mxu0 0.0
  %2863 = vmatprep.subr.mxu0 0.0
  %2864 = vmatpush1.msra.mxu0 0.0
  %2865 = vmatprep.subr.mxu0 0.0
  %2866 = vmatpush1.msra.mxu0 0.0
  %2867 = vmatprep.subr.mxu0 0.0
  %2868 = vmatpush1.msra.mxu0 0.0
  %2869 = vmatprep.subr.mxu0 0.0
  %2870 = vmatpush1.msra.mxu0 0.0
  %2871 = vmatprep.subr.mxu0 0.0
  %2872 = vmatpush1.msra.mxu0 0.0
  %2873 = vmatprep.subr.mxu0 0.0
  %2874 = vmatpush1.msra.mxu0 0.0
  %2875 = vmatprep.subr.mxu0 0.0
  %2876 = vmatpush1.msra.mxu0 0.0
  %2877 = vmatprep.subr.mxu0 0.0
  %2878 = vmatpush1.msra.mxu0 0.0
  %2879 = vmatprep.subr.mxu0 0.0
  %2880 = vmatpush1.msra.mxu0 0.0
  %2881 = vmatprep.subr.mxu0 0.0
  %2882 = vmatpush1.msra.mxu0 0.0
  %2883 = vmatprep.subr.mxu0 0.0
  %2884 = vmatpush1.msra.mxu0 0.0
  %2885 = vmatprep.subr.mxu0 0.0
  %2886 = vmatpush1.msra.mxu0 0.0
  %2887 = vmatprep.subr.mxu0 0.0
  %2888 = vmatpush1.msra.mxu0 0.0
  %2889 = vmatprep.subr.mxu0 0.0
  %2890 = vmatpush1.msra.mxu0 0.0
  %2891 = vmatprep.subr.mxu0 0.0
  %2892 = vmatpush1.msra.mxu0 0.0
  %2893 = vmatprep.subr.mxu0 0.0
  %2894 = vmatpush1.msra.mxu0 0.0
  %2895 = vmatprep.subr.mxu0 0.0
  %2896 = vmatpush1.msra.mxu0 0.0
  %2897 = vmatprep.subr.mxu0 0.0
  %2898 = vmatpush1.msra.mxu0 0.0
  %2899 = vmatprep.subr.mxu0 0.0
  %2900 = vmatpush1.msra.mxu0 0.0
  %2901 = vmatprep.subr.mxu0 0.0
  %2902 = vmatpush1.msra.mxu0 0.0
  %2903 = vmatprep.subr.mxu0 0.0
  %2904 = vmatpush1.msra.mxu0 0.0
  %2905 = vmatprep.subr.mxu0 0.0
  %2906 = vmatpush1.msra.mxu0 0.0
  %2907 = vmatprep.subr.mxu0 0.0
  %2908 = vmatpush1.msra.mxu0 0.0
  %2909 = vmatprep.subr.mxu0 0.0
  %2910 = vmatpush1.msra.mxu0 0.0
  %2911 = vmatprep.subr.mxu0 0.0
  %2912 = vmatpush1.msra.mxu0 0.0
  %2913 = vmatprep.subr.mxu0 0.0
  %2914 = vmatpush1.msra.mxu0 0.0
  %2915 = vmatprep.subr.mxu0 0.0
  %2916 = vmatpush1.msra.mxu0 0.0
  %2917 = vmatprep.subr.mxu0 0.0
  %2918 = vmatpush1.msra.mxu0 0.0
  %2919 = vmatprep.subr.mxu0 0.0
  %2920 = vmatpush1.msra.mxu0 0.0
  %2921 = vmatprep.subr.mxu0 0.0
  %2922 = vmatpush1.msra.mxu0 0.0
  %2923 = vmatprep.mubr.f32.mxu0 0.0
  %2924 = vmatmul.mubr.f32.gmra.mrb[0].mxu0 %v2857
  %v2925 = vpop.f32.mrb[0].mxu0
  %v2926 = vadd.f32 0.0, %v2925
  %v2927 = vpop.f32.mrb[0].mxu0
  %2928 = vdwg.mxu0
  %2929 = vrot.lane.b32.xlu0 %v2014, 48
  %v2930 = vpop.permute.xlu0 %2929
  %v2933 = vsel %vm200, %v2852, 0
  %2935 = vmatprep.subr.mxu0 0.0
  %2936 = vmatpush1.msra.mxu0 %v2930
  %2937 = vmatprep.subr.mxu0 0.0
  %2938 = vmatpush1.msra.mxu0 0.0
  %2939 = vmatprep.subr.mxu0 0.0
  %2940 = vmatpush1.msra.mxu0 0.0
  %2941 = vmatprep.subr.mxu0 0.0
  %2942 = vmatpush1.msra.mxu0 0.0
  %2943 = vmatprep.subr.mxu0 0.0
  %2944 = vmatpush1.msra.mxu0 0.0
  %2945 = vmatprep.subr.mxu0 0.0
  %2946 = vmatpush1.msra.mxu0 0.0
  %2947 = vmatprep.subr.mxu0 0.0
  %2948 = vmatpush1.msra.mxu0 0.0
  %2949 = vmatprep.subr.mxu0 0.0
  %2950 = vmatpush1.msra.mxu0 0.0
  %2951 = vmatprep.subr.mxu0 0.0
  %2952 = vmatpush1.msra.mxu0 0.0
  %2953 = vmatprep.subr.mxu0 0.0
  %2954 = vmatpush1.msra.mxu0 0.0
  %2955 = vmatprep.subr.mxu0 0.0
  %2956 = vmatpush1.msra.mxu0 0.0
  %2957 = vmatprep.subr.mxu0 0.0
  %2958 = vmatpush1.msra.mxu0 0.0
  %2959 = vmatprep.subr.mxu0 0.0
  %2960 = vmatpush1.msra.mxu0 0.0
  %2961 = vmatprep.subr.mxu0 0.0
  %2962 = vmatpush1.msra.mxu0 0.0
  %2963 = vmatprep.subr.mxu0 0.0
  %2964 = vmatpush1.msra.mxu0 0.0
  %2965 = vmatprep.subr.mxu0 0.0
  %2966 = vmatpush1.msra.mxu0 0.0
  %2967 = vmatprep.subr.mxu0 0.0
  %2968 = vmatpush1.msra.mxu0 0.0
  %2969 = vmatprep.subr.mxu0 0.0
  %2970 = vmatpush1.msra.mxu0 0.0
  %2971 = vmatprep.subr.mxu0 0.0
  %2972 = vmatpush1.msra.mxu0 0.0
  %2973 = vmatprep.subr.mxu0 0.0
  %2974 = vmatpush1.msra.mxu0 0.0
  %2975 = vmatprep.subr.mxu0 0.0
  %2976 = vmatpush1.msra.mxu0 0.0
  %2977 = vmatprep.subr.mxu0 0.0
  %2978 = vmatpush1.msra.mxu0 0.0
  %2979 = vmatprep.subr.mxu0 0.0
  %2980 = vmatpush1.msra.mxu0 0.0
  %2981 = vmatprep.subr.mxu0 0.0
  %2982 = vmatpush1.msra.mxu0 0.0
  %2983 = vmatprep.subr.mxu0 0.0
  %2984 = vmatpush1.msra.mxu0 0.0
  %2985 = vmatprep.subr.mxu0 0.0
  %2986 = vmatpush1.msra.mxu0 0.0
  %2987 = vmatprep.subr.mxu0 0.0
  %2988 = vmatpush1.msra.mxu0 0.0
  %2989 = vmatprep.subr.mxu0 0.0
  %2990 = vmatpush1.msra.mxu0 0.0
  %2991 = vmatprep.subr.mxu0 0.0
  %2992 = vmatpush1.msra.mxu0 0.0
  %2993 = vmatprep.subr.mxu0 0.0
  %2994 = vmatpush1.msra.mxu0 0.0
  %2995 = vmatprep.subr.mxu0 0.0
  %2996 = vmatpush1.msra.mxu0 0.0
  %2997 = vmatprep.subr.mxu0 0.0
  %2998 = vmatpush1.msra.mxu0 0.0
  %2999 = vmatprep.mubr.f32.mxu0 0.0
  %3000 = vmatmul.mubr.f32.gmra.mrb[0].mxu0 %v2933
  %v3001 = vpop.f32.mrb[0].mxu0
  %v3002 = vadd.f32 0.0, %v3001
  %v3003 = vpop.f32.mrb[0].mxu0
  %3004 = vdwg.mxu0
  %3005 = vrot.lane.b32.xlu0 %v2009, 104
  %v3006 = vpop.permute.xlu0 %3005
  %3007 = vrot.lane.b32.xlu0 %v2009, 72
  %v3008 = vpop.permute.xlu0 %3007
  %v3009 = vsel %vm200, %v3006, 0
  %v3011 = vsel %vm200, %v3008, 0
  %3013 = vmatprep.subr.mxu0 0.0
  %3014 = vmatpush1.xpose.msra.mxu0 %v3011
  %3015 = vmatprep.subr.mxu0 0.0
  %3016 = vmatpush1.xpose.msra.mxu0 0.0
  %3017 = vmatprep.subr.mxu0 0.0
  %3018 = vmatpush1.xpose.msra.mxu0 0.0
  %3019 = vmatprep.subr.mxu0 0.0
  %3020 = vmatpush1.xpose.msra.mxu0 0.0
  %3021 = vmatprep.subr.mxu0 0.0
  %3022 = vmatpush1.xpose.msra.mxu0 0.0
  %3023 = vmatprep.subr.mxu0 0.0
  %3024 = vmatpush1.xpose.msra.mxu0 0.0
  %3025 = vmatprep.subr.mxu0 0.0
  %3026 = vmatpush1.xpose.msra.mxu0 0.0
  %3027 = vmatprep.subr.mxu0 0.0
  %3028 = vmatpush1.xpose.msra.mxu0 0.0
  %3029 = vmatprep.subr.mxu0 0.0
  %3030 = vmatpush1.xpose.msra.mxu0 0.0
  %3031 = vmatprep.subr.mxu0 0.0
  %3032 = vmatpush1.xpose.msra.mxu0 0.0
  %3033 = vmatprep.subr.mxu0 0.0
  %3034 = vmatpush1.xpose.msra.mxu0 0.0
  %3035 = vmatprep.subr.mxu0 0.0
  %3036 = vmatpush1.xpose.msra.mxu0 0.0
  %3037 = vmatprep.subr.mxu0 0.0
  %3038 = vmatpush1.xpose.msra.mxu0 0.0
  %3039 = vmatprep.subr.mxu0 0.0
  %3040 = vmatpush1.xpose.msra.mxu0 0.0
  %3041 = vmatprep.subr.mxu0 0.0
  %3042 = vmatpush1.xpose.msra.mxu0 0.0
  %3043 = vmatprep.subr.mxu0 0.0
  %3044 = vmatpush1.xpose.msra.mxu0 0.0
  %3045 = vmatprep.subr.mxu0 0.0
  %3046 = vmatpush1.xpose.msra.mxu0 0.0
  %3047 = vmatprep.subr.mxu0 0.0
  %3048 = vmatpush1.xpose.msra.mxu0 0.0
  %3049 = vmatprep.subr.mxu0 0.0
  %3050 = vmatpush1.xpose.msra.mxu0 0.0
  %3051 = vmatprep.subr.mxu0 0.0
  %3052 = vmatpush1.xpose.msra.mxu0 0.0
  %3053 = vmatprep.subr.mxu0 0.0
  %3054 = vmatpush1.xpose.msra.mxu0 0.0
  %3055 = vmatprep.subr.mxu0 0.0
  %3056 = vmatpush1.xpose.msra.mxu0 0.0
  %3057 = vmatprep.subr.mxu0 0.0
  %3058 = vmatpush1.xpose.msra.mxu0 0.0
  %3059 = vmatprep.subr.mxu0 0.0
  %3060 = vmatpush1.xpose.msra.mxu0 0.0
  %3061 = vmatprep.subr.mxu0 0.0
  %3062 = vmatpush1.xpose.msra.mxu0 0.0
  %3063 = vmatprep.subr.mxu0 0.0
  %3064 = vmatpush1.xpose.msra.mxu0 0.0
  %3065 = vmatprep.subr.mxu0 0.0
  %3066 = vmatpush1.xpose.msra.mxu0 0.0
  %3067 = vmatprep.subr.mxu0 0.0
  %3068 = vmatpush1.xpose.msra.mxu0 0.0
  %3069 = vmatprep.subr.mxu0 0.0
  %3070 = vmatpush1.xpose.msra.mxu0 0.0
  %3071 = vmatprep.subr.mxu0 0.0
  %3072 = vmatpush1.xpose.msra.mxu0 0.0
  %3073 = vmatprep.subr.mxu0 0.0
  %3074 = vmatpush1.xpose.msra.mxu0 0.0
  %3075 = vmatprep.subr.mxu0 0.0
  %3076 = vmatpush1.xpose.msra.mxu0 0.0
  %3077 = vmatprep.mubr.f32.mxu0 0.0
  %3078 = vmatmul.mubr.f32.gmra.mrb[0].mxu0 %v3009
  %v3079 = vpop.f32.mrb[0].mxu0
  %v3080 = vadd.f32 %v97, %v3079
  %v3081 = vpop.f32.mrb[0].mxu0
  %3082 = vdwg.mxu0
  %3083 = vrot.lane.b32.xlu0 %v2014, 104
  %v3084 = vpop.permute.xlu0 %3083
  %3085 = vrot.lane.b32.xlu0 %v2014, 72
  %v3086 = vpop.permute.xlu0 %3085
  %v3087 = vsel %vm200, %v3084, 0
  %v3089 = vsel %vm200, %v3086, 0
  %3091 = vmatprep.subr.mxu0 0.0
  %3092 = vmatpush1.xpose.msra.mxu0 %v3089
  %3093 = vmatprep.subr.mxu0 0.0
  %3094 = vmatpush1.xpose.msra.mxu0 0.0
  %3095 = vmatprep.subr.mxu0 0.0
  %3096 = vmatpush1.xpose.msra.mxu0 0.0
  %3097 = vmatprep.subr.mxu0 0.0
  %3098 = vmatpush1.xpose.msra.mxu0 0.0
  %3099 = vmatprep.subr.mxu0 0.0
  %3100 = vmatpush1.xpose.msra.mxu0 0.0
  %3101 = vmatprep.subr.mxu0 0.0
  %3102 = vmatpush1.xpose.msra.mxu0 0.0
  %3103 = vmatprep.subr.mxu0 0.0
  %3104 = vmatpush1.xpose.msra.mxu0 0.0
  %3105 = vmatprep.subr.mxu0 0.0
  %3106 = vmatpush1.xpose.msra.mxu0 0.0
  %3107 = vmatprep.subr.mxu0 0.0
  %3108 = vmatpush1.xpose.msra.mxu0 0.0
  %3109 = vmatprep.subr.mxu0 0.0
  %3110 = vmatpush1.xpose.msra.mxu0 0.0
  %3111 = vmatprep.subr.mxu0 0.0
  %3112 = vmatpush1.xpose.msra.mxu0 0.0
  %3113 = vmatprep.subr.mxu0 0.0
  %3114 = vmatpush1.xpose.msra.mxu0 0.0
  %3115 = vmatprep.subr.mxu0 0.0
  %3116 = vmatpush1.xpose.msra.mxu0 0.0
  %3117 = vmatprep.subr.mxu0 0.0
  %3118 = vmatpush1.xpose.msra.mxu0 0.0
  %3119 = vmatprep.subr.mxu0 0.0
  %3120 = vmatpush1.xpose.msra.mxu0 0.0
  %3121 = vmatprep.subr.mxu0 0.0
  %3122 = vmatpush1.xpose.msra.mxu0 0.0
  %3123 = vmatprep.subr.mxu0 0.0
  %3124 = vmatpush1.xpose.msra.mxu0 0.0
  %3125 = vmatprep.subr.mxu0 0.0
  %3126 = vmatpush1.xpose.msra.mxu0 0.0
  %3127 = vmatprep.subr.mxu0 0.0
  %3128 = vmatpush1.xpose.msra.mxu0 0.0
  %3129 = vmatprep.subr.mxu0 0.0
  %3130 = vmatpush1.xpose.msra.mxu0 0.0
  %3131 = vmatprep.subr.mxu0 0.0
  %3132 = vmatpush1.xpose.msra.mxu0 0.0
  %3133 = vmatprep.subr.mxu0 0.0
  %3134 = vmatpush1.xpose.msra.mxu0 0.0
  %3135 = vmatprep.subr.mxu0 0.0
  %3136 = vmatpush1.xpose.msra.mxu0 0.0
  %3137 = vmatprep.subr.mxu0 0.0
  %3138 = vmatpush1.xpose.msra.mxu0 0.0
  %3139 = vmatprep.subr.mxu0 0.0
  %3140 = vmatpush1.xpose.msra.mxu0 0.0
  %3141 = vmatprep.subr.mxu0 0.0
  %3142 = vmatpush1.xpose.msra.mxu0 0.0
  %3143 = vmatprep.subr.mxu0 0.0
  %3144 = vmatpush1.xpose.msra.mxu0 0.0
  %3145 = vmatprep.subr.mxu0 0.0
  %3146 = vmatpush1.xpose.msra.mxu0 0.0
  %3147 = vmatprep.subr.mxu0 0.0
  %3148 = vmatpush1.xpose.msra.mxu0 0.0
  %3149 = vmatprep.subr.mxu0 0.0
  %3150 = vmatpush1.xpose.msra.mxu0 0.0
  %3151 = vmatprep.subr.mxu0 0.0
  %3152 = vmatpush1.xpose.msra.mxu0 0.0
  %3153 = vmatprep.subr.mxu0 0.0
  %3154 = vmatpush1.xpose.msra.mxu0 0.0
  %3155 = vmatprep.mubr.f32.mxu0 0.0
  %3156 = vmatmul.mubr.f32.gmra.mrb[0].mxu0 %v3087
  %v3157 = vpop.f32.mrb[0].mxu0
  %v3158 = vadd.f32 %v101, %v3157
  %v3159 = vpop.f32.mrb[0].mxu0
  %3160 = vdwg.mxu0
  %v3161 = vsel %vm200, %v3080, -inf
  %3162 = vmax.xlane.f32.xlu0 %v3161
  %v3163 = vpop.xlane.xlu0 %3162
  %v3164 = vsel %vm200, %v3158, -inf
  %3165 = vmax.xlane.f32.xlu0 %v3164
  %v3166 = vpop.xlane.xlu0 %3165
  %v3167 = vsub.f32 %v3080, %v3163
  %v3168 = vsub.f32 %v3158, %v3166
  %v3169 = vmul.f32 %v3167, 1.442695
  %v3170 = vpow.pop %v3169
  %v3171 = vmul.f32 %v3168, 1.442695
  %v3172 = vpow.pop %v3171
  %v3173 = vsel %vm200, %v3170, 0.0
  %3174 = vadd.xlane.f32.xlu0 %v3173
  %v3175 = vpop.xlane.xlu0 %3174
  %v3176 = vsel %vm200, %v3172, 0.0
  %3177 = vadd.xlane.f32.xlu0 %v3176
  %v3178 = vpop.xlane.xlu0 %3177
  %v3179 = vrcp.pop %v3175
  %v3180 = vrcp.pop %v3178
  %v3181 = vmul.f32 %v3170, %v3179
  %v3182 = vmul.f32 %v3172, %v3180
  %3183 = vrot.lane.b32.xlu0 %v2009, 40
  %v3184 = vpop.permute.xlu0 %3183
  %v3187 = vsel %vm200, %v3181, 0
  %3189 = vmatprep.subr.mxu0 0.0
  %3190 = vmatpush1.msra.mxu0 %v3184
  %3191 = vmatprep.subr.mxu0 0.0
  %3192 = vmatpush1.msra.mxu0 0.0
  %3193 = vmatprep.subr.mxu0 0.0
  %3194 = vmatpush1.msra.mxu0 0.0
  %3195 = vmatprep.subr.mxu0 0.0
  %3196 = vmatpush1.msra.mxu0 0.0
  %3197 = vmatprep.subr.mxu0 0.0
  %3198 = vmatpush1.msra.mxu0 0.0
  %3199 = vmatprep.subr.mxu0 0.0
  %3200 = vmatpush1.msra.mxu0 0.0
  %3201 = vmatprep.subr.mxu0 0.0
  %3202 = vmatpush1.msra.mxu0 0.0
  %3203 = vmatprep.subr.mxu0 0.0
  %3204 = vmatpush1.msra.mxu0 0.0
  %3205 = vmatprep.subr.mxu0 0.0
  %3206 = vmatpush1.msra.mxu0 0.0
  %3207 = vmatprep.subr.mxu0 0.0
  %3208 = vmatpush1.msra.mxu0 0.0
  %3209 = vmatprep.subr.mxu0 0.0
  %3210 = vmatpush1.msra.mxu0 0.0
  %3211 = vmatprep.subr.mxu0 0.0
  %3212 = vmatpush1.msra.mxu0 0.0
  %3213 = vmatprep.subr.mxu0 0.0
  %3214 = vmatpush1.msra.mxu0 0.0
  %3215 = vmatprep.subr.mxu0 0.0
  %3216 = vmatpush1.msra.mxu0 0.0
  %3217 = vmatprep.subr.mxu0 0.0
  %3218 = vmatpush1.msra.mxu0 0.0
  %3219 = vmatprep.subr.mxu0 0.0
  %3220 = vmatpush1.msra.mxu0 0.0
  %3221 = vmatprep.subr.mxu0 0.0
  %3222 = vmatpush1.msra.mxu0 0.0
  %3223 = vmatprep.subr.mxu0 0.0
  %3224 = vmatpush1.msra.mxu0 0.0
  %3225 = vmatprep.subr.mxu0 0.0
  %3226 = vmatpush1.msra.mxu0 0.0
  %3227 = vmatprep.subr.mxu0 0.0
  %3228 = vmatpush1.msra.mxu0 0.0
  %3229 = vmatprep.subr.mxu0 0.0
  %3230 = vmatpush1.msra.mxu0 0.0
  %3231 = vmatprep.subr.mxu0 0.0
  %3232 = vmatpush1.msra.mxu0 0.0
  %3233 = vmatprep.subr.mxu0 0.0
  %3234 = vmatpush1.msra.mxu0 0.0
  %3235 = vmatprep.subr.mxu0 0.0
  %3236 = vmatpush1.msra.mxu0 0.0
  %3237 = vmatprep.subr.mxu0 0.0
  %3238 = vmatpush1.msra.mxu0 0.0
  %3239 = vmatprep.subr.mxu0 0.0
  %3240 = vmatpush1.msra.mxu0 0.0
  %3241 = vmatprep.subr.mxu0 0.0
  %3242 = vmatpush1.msra.mxu0 0.0
  %3243 = vmatprep.subr.mxu0 0.0
  %3244 = vmatpush1.msra.mxu0 0.0
  %3245 = vmatprep.subr.mxu0 0.0
  %3246 = vmatpush1.msra.mxu0 0.0
  %3247 = vmatprep.subr.mxu0 0.0
  %3248 = vmatpush1.msra.mxu0 0.0
  %3249 = vmatprep.subr.mxu0 0.0
  %3250 = vmatpush1.msra.mxu0 0.0
  %3251 = vmatprep.subr.mxu0 0.0
  %3252 = vmatpush1.msra.mxu0 0.0
  %3253 = vmatprep.mubr.f32.mxu0 0.0
  %3254 = vmatmul.mubr.f32.gmra.mrb[0].mxu0 %v3187
  %v3255 = vpop.f32.mrb[0].mxu0
  %v3256 = vadd.f32 0.0, %v3255
  %v3257 = vpop.f32.mrb[0].mxu0
  %3258 = vdwg.mxu0
  %3259 = vrot.lane.b32.xlu0 %v2014, 40
  %v3260 = vpop.permute.xlu0 %3259
  %v3263 = vsel %vm200, %v3182, 0
  %3265 = vmatprep.subr.mxu0 0.0
  %3266 = vmatpush1.msra.mxu0 %v3260
  %3267 = vmatprep.subr.mxu0 0.0
  %3268 = vmatpush1.msra.mxu0 0.0
  %3269 = vmatprep.subr.mxu0 0.0
  %3270 = vmatpush1.msra.mxu0 0.0
  %3271 = vmatprep.subr.mxu0 0.0
  %3272 = vmatpush1.msra.mxu0 0.0
  %3273 = vmatprep.subr.mxu0 0.0
  %3274 = vmatpush1.msra.mxu0 0.0
  %3275 = vmatprep.subr.mxu0 0.0
  %3276 = vmatpush1.msra.mxu0 0.0
  %3277 = vmatprep.subr.mxu0 0.0
  %3278 = vmatpush1.msra.mxu0 0.0
  %3279 = vmatprep.subr.mxu0 0.0
  %3280 = vmatpush1.msra.mxu0 0.0
  %3281 = vmatprep.subr.mxu0 0.0
  %3282 = vmatpush1.msra.mxu0 0.0
  %3283 = vmatprep.subr.mxu0 0.0
  %3284 = vmatpush1.msra.mxu0 0.0
  %3285 = vmatprep.subr.mxu0 0.0
  %3286 = vmatpush1.msra.mxu0 0.0
  %3287 = vmatprep.subr.mxu0 0.0
  %3288 = vmatpush1.msra.mxu0 0.0
  %3289 = vmatprep.subr.mxu0 0.0
  %3290 = vmatpush1.msra.mxu0 0.0
  %3291 = vmatprep.subr.mxu0 0.0
  %3292 = vmatpush1.msra.mxu0 0.0
  %3293 = vmatprep.subr.mxu0 0.0
  %3294 = vmatpush1.msra.mxu0 0.0
  %3295 = vmatprep.subr.mxu0 0.0
  %3296 = vmatpush1.msra.mxu0 0.0
  %3297 = vmatprep.subr.mxu0 0.0
  %3298 = vmatpush1.msra.mxu0 0.0
  %3299 = vmatprep.subr.mxu0 0.0
  %3300 = vmatpush1.msra.mxu0 0.0
  %3301 = vmatprep.subr.mxu0 0.0
  %3302 = vmatpush1.msra.mxu0 0.0
  %3303 = vmatprep.subr.mxu0 0.0
  %3304 = vmatpush1.msra.mxu0 0.0
  %3305 = vmatprep.subr.mxu0 0.0
  %3306 = vmatpush1.msra.mxu0 0.0
  %3307 = vmatprep.subr.mxu0 0.0
  %3308 = vmatpush1.msra.mxu0 0.0
  %3309 = vmatprep.subr.mxu0 0.0
  %3310 = vmatpush1.msra.mxu0 0.0
  %3311 = vmatprep.subr.mxu0 0.0
  %3312 = vmatpush1.msra.mxu0 0.0
  %3313 = vmatprep.subr.mxu0 0.0
  %3314 = vmatpush1.msra.mxu0 0.0
  %3315 = vmatprep.subr.mxu0 0.0
  %3316 = vmatpush1.msra.mxu0 0.0
  %3317 = vmatprep.subr.mxu0 0.0
  %3318 = vmatpush1.msra.mxu0 0.0
  %3319 = vmatprep.subr.mxu0 0.0
  %3320 = vmatpush1.msra.mxu0 0.0
  %3321 = vmatprep.subr.mxu0 0.0
  %3322 = vmatpush1.msra.mxu0 0.0
  %3323 = vmatprep.subr.mxu0 0.0
  %3324 = vmatpush1.msra.mxu0 0.0
  %3325 = vmatprep.subr.mxu0 0.0
  %3326 = vmatpush1.msra.mxu0 0.0
  %3327 = vmatprep.subr.mxu0 0.0
  %3328 = vmatpush1.msra.mxu0 0.0
  %3329 = vmatprep.mubr.f32.mxu0 0.0
  %3330 = vmatmul.mubr.f32.gmra.mrb[0].mxu0 %v3263
  %v3331 = vpop.f32.mrb[0].mxu0
  %v3332 = vadd.f32 0.0, %v3331
  %v3333 = vpop.f32.mrb[0].mxu0
  %3334 = vdwg.mxu0
  %3337 = vrot.lane.b32.xlu0 %v2596, 8
  %v3338 = vpop.permute.xlu0 %3337
  %3339 = vrot.lane.b32.xlu0 %v2672, 8
  %v3340 = vpop.permute.xlu0 %3339
  %3345 = vrot.lane.b32.xlu0 %v2926, 16
  %v3346 = vpop.permute.xlu0 %3345
  %3347 = vrot.lane.b32.xlu0 %v3002, 16
  %v3348 = vpop.permute.xlu0 %3347
  %3353 = vrot.lane.b32.xlu0 %v3256, 24
  %v3354 = vpop.permute.xlu0 %3353
  %3355 = vrot.lane.b32.xlu0 %v3332, 24
  %v3356 = vpop.permute.xlu0 %3355
  %v3359 = vsel %vm200, %v2266, %v3338
  %v3360 = vsel %vm200, %v2342, %v3340
  %v3361 = vsel %vm1542, %v3359, %v3346
  %v3362 = vsel %vm1542, %v3360, %v3348
  %v3363 = vsel %vm1545, %v3361, %v3354
  %v3364 = vsel %vm1545, %v3362, %v3356
  %s3365 = scalar_lea.vmem %s5, 32
  %v3366 = vld [vmem:[%s3365] sm:$0xff]
  %v3367 = vld [vmem:[%s3365 + $0x8] sm:$0xff]
  %v3368 = vld [vmem:[%s3365 + $0x10] sm:$0xff]
  %v3369 = vld [vmem:[%s3365 + $0x18] sm:$0xff]
  %v3370 = vlaneseq
  %v3371 = vshrl.u32 %v3370, 7
  %v3372 = vsub.s32 0, %v3371
  %v3373 = vrot.slane %v1922, %v3372
  %v3375 = vsel %vm50, %v3363, 0
  %v3378 = vsel %vm50, %v3364, 0
  %3380 = vmatprep.subr.mxu0 0.0
  %3381 = vmatpush1.msra.mxu0 %v3366
  %3382 = vmatprep.subr.mxu0 0.0
  %3383 = vmatpush1.msra.mxu0 %v3367
  %3384 = vmatprep.subr.mxu0 0.0
  %3385 = vmatpush1.msra.mxu0 %v3368
  %3386 = vmatprep.subr.mxu0 0.0
  %3387 = vmatpush1.msra.mxu0 %v3369
  %3388 = vmatprep.subr.mxu0 0.0
  %3389 = vmatpush1.msra.mxu0 0.0
  %3390 = vmatprep.subr.mxu0 0.0
  %3391 = vmatpush1.msra.mxu0 0.0
  %3392 = vmatprep.subr.mxu0 0.0
  %3393 = vmatpush1.msra.mxu0 0.0
  %3394 = vmatprep.subr.mxu0 0.0
  %3395 = vmatpush1.msra.mxu0 0.0
  %3396 = vmatprep.subr.mxu0 0.0
  %3397 = vmatpush1.msra.mxu0 0.0
  %3398 = vmatprep.subr.mxu0 0.0
  %3399 = vmatpush1.msra.mxu0 0.0
  %3400 = vmatprep.subr.mxu0 0.0
  %3401 = vmatpush1.msra.mxu0 0.0
  %3402 = vmatprep.subr.mxu0 0.0
  %3403 = vmatpush1.msra.mxu0 0.0
  %3404 = vmatprep.subr.mxu0 0.0
  %3405 = vmatpush1.msra.mxu0 0.0
  %3406 = vmatprep.subr.mxu0 0.0
  %3407 = vmatpush1.msra.mxu0 0.0
  %3408 = vmatprep.subr.mxu0 0.0
  %3409 = vmatpush1.msra.mxu0 0.0
  %3410 = vmatprep.subr.mxu0 0.0
  %3411 = vmatpush1.msra.mxu0 0.0
  %3412 = vmatprep.subr.mxu0 0.0
  %3413 = vmatpush1.msra.mxu0 0.0
  %3414 = vmatprep.subr.mxu0 0.0
  %3415 = vmatpush1.msra.mxu0 0.0
  %3416 = vmatprep.subr.mxu0 0.0
  %3417 = vmatpush1.msra.mxu0 0.0
  %3418 = vmatprep.subr.mxu0 0.0
  %3419 = vmatpush1.msra.mxu0 0.0
  %3420 = vmatprep.subr.mxu0 0.0
  %3421 = vmatpush1.msra.mxu0 0.0
  %3422 = vmatprep.subr.mxu0 0.0
  %3423 = vmatpush1.msra.mxu0 0.0
  %3424 = vmatprep.subr.mxu0 0.0
  %3425 = vmatpush1.msra.mxu0 0.0
  %3426 = vmatprep.subr.mxu0 0.0
  %3427 = vmatpush1.msra.mxu0 0.0
  %3428 = vmatprep.subr.mxu0 0.0
  %3429 = vmatpush1.msra.mxu0 0.0
  %3430 = vmatprep.subr.mxu0 0.0
  %3431 = vmatpush1.msra.mxu0 0.0
  %3432 = vmatprep.subr.mxu0 0.0
  %3433 = vmatpush1.msra.mxu0 0.0
  %3434 = vmatprep.subr.mxu0 0.0
  %3435 = vmatpush1.msra.mxu0 0.0
  %3436 = vmatprep.subr.mxu0 0.0
  %3437 = vmatpush1.msra.mxu0 0.0
  %3438 = vmatprep.subr.mxu0 0.0
  %3439 = vmatpush1.msra.mxu0 0.0
  %3440 = vmatprep.subr.mxu0 0.0
  %3441 = vmatpush1.msra.mxu0 0.0
  %3442 = vmatprep.subr.mxu0 0.0
  %3443 = vmatpush1.msra.mxu0 0.0
  %3444 = vmatprep.mubr.f32.mxu0 0.0
  %3445 = vmatmul.mubr.f32.gmra.mrb[0].mxu0 %v3375
  %v3446 = vpop.f32.mrb[0].mxu0
  %v3447 = vadd.f32 %v3373, %v3446
  %v3448 = vpop.f32.mrb[0].mxu0
  %3449 = vmatprep.mubr.f32.mxu0 0.0
  %3450 = vmatmul.mubr.f32.gmra.mrb[0].mxu0 %v3378
  %v3451 = vpop.f32.mrb[0].mxu0
  %v3452 = vadd.f32 %v3373, %v3451
  %v3453 = vpop.f32.mrb[0].mxu0
  %3454 = vdwg.mxu0
  %v3455 = vadd.f32 %v1919, %v3447
  %v3456 = vadd.f32 %v1920, %v3452
  %v3457 = vsel %vm50, %v3455, 0.0
  %3458 = vadd.xlane.f32.xlu0 %v3457
  %v3459 = vpop.xlane.xlu0 %3458
  %v3460 = vsel %vm50, %v3456, 0.0
  %3461 = vadd.xlane.f32.xlu0 %v3460
  %v3462 = vpop.xlane.xlu0 %3461
  %v3463 = vmul.f32 %v3459, %v57
  %v3464 = vmul.f32 %v3462, %v57
  %v3465 = vsub.f32 %v3455, %v3463
  %v3466 = vsub.f32 %v3456, %v3464
  %v3467 = vmul.f32 %v3465, %v3465
  %v3468 = vmul.f32 %v3466, %v3466
  %v3469 = vsel %vm50, %v3467, 0.0
  %3470 = vadd.xlane.f32.xlu0 %v3469
  %v3471 = vpop.xlane.xlu0 %3470
  %v3472 = vsel %vm50, %v3468, 0.0
  %3473 = vadd.xlane.f32.xlu0 %v3472
  %v3474 = vpop.xlane.xlu0 %3473
  %v3475 = vmul.f32 %v3471, %v57
  %v3476 = vmul.f32 %v3474, %v57
  %v3477 = vadd.f32 %v3475, 1e-12
  %v3478 = vadd.f32 %v3476, 1e-12
  %v3479 = vrsqrt.pop %v3477
  %v3480 = vrsqrt.pop %v3478
  %v3481 = vmul.f32 %v3465, %v3479
  %v3482 = vmul.f32 %v3466, %v3480
  %v3483 = vlaneseq
  %v3484 = vshrl.u32 %v3483, 7
  %v3485 = vsub.s32 1, %v3484
  %v3486 = vrot.slane %v1922, %v3485
  %v3487 = vmul.f32 %v3481, %v3486
  %v3488 = vmul.f32 %v3482, %v3486
  %v3489 = vlaneseq
  %v3490 = vshrl.u32 %v3489, 7
  %v3491 = vsub.s32 2, %v3490
  %v3492 = vrot.slane %v1922, %v3491
  %v3493 = vadd.f32 %v3487, %v3492
  %v3494 = vadd.f32 %v3488, %v3492
  %s3495 = scalar_lea.vmem %s7, 32
  %v3496 = vld [vmem:[%s3495] sm:$0xff]
  %v3497 = vld [vmem:[%s3495 + $0x8] sm:$0xff]
  %v3498 = vld [vmem:[%s3495 + $0x10] sm:$0xff]
  %v3499 = vld [vmem:[%s3495 + $0x18] sm:$0xff]
  %s3500 = scalar_lea.vmem %s8, 1
  %v3501 = vld [vmem:[%s3500] sm:$0x1]
  %v3503 = vlaneseq
  %v3504 = vshrl.u32 %v3503, 7
  %v3505 = vsub.s32 0, %v3504
  %v3506 = vrot.slane %v3501, %v3505
  %v3509 = vsel %vm50, %v3493, 0
  %v3512 = vsel %vm50, %v3494, 0
  %3514 = vmatprep.subr.mxu0 0.0
  %3515 = vmatpush1.msra.mxu0 %v3496
  %3516 = vmatprep.subr.mxu0 0.0
  %3517 = vmatpush1.msra.mxu0 %v3497
  %3518 = vmatprep.subr.mxu0 0.0
  %3519 = vmatpush1.msra.mxu0 %v3498
  %3520 = vmatprep.subr.mxu0 0.0
  %3521 = vmatpush1.msra.mxu0 %v3499
  %3522 = vmatprep.subr.mxu0 0.0
  %3523 = vmatpush1.msra.mxu0 0.0
  %3524 = vmatprep.subr.mxu0 0.0
  %3525 = vmatpush1.msra.mxu0 0.0
  %3526 = vmatprep.subr.mxu0 0.0
  %3527 = vmatpush1.msra.mxu0 0.0
  %3528 = vmatprep.subr.mxu0 0.0
  %3529 = vmatpush1.msra.mxu0 0.0
  %3530 = vmatprep.subr.mxu0 0.0
  %3531 = vmatpush1.msra.mxu0 0.0
  %3532 = vmatprep.subr.mxu0 0.0
  %3533 = vmatpush1.msra.mxu0 0.0
  %3534 = vmatprep.subr.mxu0 0.0
  %3535 = vmatpush1.msra.mxu0 0.0
  %3536 = vmatprep.subr.mxu0 0.0
  %3537 = vmatpush1.msra.mxu0 0.0
  %3538 = vmatprep.subr.mxu0 0.0
  %3539 = vmatpush1.msra.mxu0 0.0
  %3540 = vmatprep.subr.mxu0 0.0
  %3541 = vmatpush1.msra.mxu0 0.0
  %3542 = vmatprep.subr.mxu0 0.0
  %3543 = vmatpush1.msra.mxu0 0.0
  %3544 = vmatprep.subr.mxu0 0.0
  %3545 = vmatpush1.msra.mxu0 0.0
  %3546 = vmatprep.subr.mxu0 0.0
  %3547 = vmatpush1.msra.mxu0 0.0
  %3548 = vmatprep.subr.mxu0 0.0
  %3549 = vmatpush1.msra.mxu0 0.0
  %3550 = vmatprep.subr.mxu0 0.0
  %3551 = vmatpush1.msra.mxu0 0.0
  %3552 = vmatprep.subr.mxu0 0.0
  %3553 = vmatpush1.msra.mxu0 0.0
  %3554 = vmatprep.subr.mxu0 0.0
  %3555 = vmatpush1.msra.mxu0 0.0
  %3556 = vmatprep.subr.mxu0 0.0
  %3557 = vmatpush1.msra.mxu0 0.0
  %3558 = vmatprep.subr.mxu0 0.0
  %3559 = vmatpush1.msra.mxu0 0.0
  %3560 = vmatprep.subr.mxu0 0.0
  %3561 = vmatpush1.msra.mxu0 0.0
  %3562 = vmatprep.subr.mxu0 0.0
  %3563 = vmatpush1.msra.mxu0 0.0
  %3564 = vmatprep.subr.mxu0 0.0
  %3565 = vmatpush1.msra.mxu0 0.0
  %3566 = vmatprep.subr.mxu0 0.0
  %3567 = vmatpush1.msra.mxu0 0.0
  %3568 = vmatprep.subr.mxu0 0.0
  %3569 = vmatpush1.msra.mxu0 0.0
  %3570 = vmatprep.subr.mxu0 0.0
  %3571 = vmatpush1.msra.mxu0 0.0
  %3572 = vmatprep.subr.mxu0 0.0
  %3573 = vmatpush1.msra.mxu0 0.0
  %3574 = vmatprep.subr.mxu0 0.0
  %3575 = vmatpush1.msra.mxu0 0.0
  %3576 = vmatprep.subr.mxu0 0.0
  %3577 = vmatpush1.msra.mxu0 0.0
  %3578 = vmatprep.mubr.f32.mxu0 0.0
  %3579 = vmatmul.mubr.f32.gmra.mrb[0].mxu0 %v3509
  %v3580 = vpop.f32.mrb[0].mxu0
  %v3581 = vadd.f32 %v3506, %v3580
  %v3582 = vpop.f32.mrb[0].mxu0
  %3583 = vmatprep.mubr.f32.mxu0 0.0
  %3584 = vmatmul.mubr.f32.gmra.mrb[0].mxu0 %v3512
  %v3585 = vpop.f32.mrb[0].mxu0
  %v3586 = vadd.f32 %v3506, %v3585
  %v3587 = vpop.f32.mrb[0].mxu0
  %3588 = vdwg.mxu0
  %v3589 = vmul.f32 %v3581, %v3581
  %v3590 = vmul.f32 %v3586, %v3586
  %v3591 = vmul.f32 %v3581, %v3589
  %v3592 = vmul.f32 %v3586, %v3590
  %v3593 = vmul.f32 %v3591, 0.044715
  %v3594 = vmul.f32 %v3592, 0.044715
  %v3595 = vadd.f32 %v3581, %v3593
  %v3596 = vadd.f32 %v3586, %v3594
  %v3597 = vmul.f32 %v3595, 0.7978846
  %v3598 = vmul.f32 %v3596, 0.7978846
  %v3599 = vtanh.pop %v3597
  %v3600 = vtanh.pop %v3598
  %v3601 = vadd.f32 %v3599, 1.0
  %v3602 = vadd.f32 %v3600, 1.0
  %v3603 = vmul.f32 %v3601, 0.5
  %v3604 = vmul.f32 %v3602, 0.5
  %v3605 = vmul.f32 %v3581, %v3603
  %v3606 = vmul.f32 %v3586, %v3604
  %s3607 = scalar_lea.vmem %s9, 64
  %v3608 = vld [vmem:[%s3607] sm:$0xff]
  %v3609 = vld [vmem:[%s3607 + $0x8] sm:$0xff]
  %v3610 = vld [vmem:[%s3607 + $0x10] sm:$0xff]
  %v3611 = vld [vmem:[%s3607 + $0x18] sm:$0xff]
  %v3612 = vld [vmem:[%s3607 + $0x20] sm:$0xff]
  %v3613 = vld [vmem:[%s3607 + $0x28] sm:$0xff]
  %v3614 = vld [vmem:[%s3607 + $0x30] sm:$0xff]
  %v3615 = vld [vmem:[%s3607 + $0x38] sm:$0xff]
  %v3616 = vlaneseq
  %v3617 = vshrl.u32 %v3616, 7
  %v3618 = vsub.s32 3, %v3617
  %v3619 = vrot.slane %v1922, %v3618
  %v3621 = vsel %vm1799, %v3605, 0
  %v3624 = vsel %vm1799, %v3606, 0
  %3626 = vmatprep.subr.mxu0 0.0
  %3627 = vmatpush1.msra.mxu0 %v3608
  %3628 = vmatprep.subr.mxu0 0.0
  %3629 = vmatpush1.msra.mxu0 %v3609
  %3630 = vmatprep.subr.mxu0 0.0
  %3631 = vmatpush1.msra.mxu0 %v3610
  %3632 = vmatprep.subr.mxu0 0.0
  %3633 = vmatpush1.msra.mxu0 %v3611
  %3634 = vmatprep.subr.mxu0 0.0
  %3635 = vmatpush1.msra.mxu0 %v3612
  %3636 = vmatprep.subr.mxu0 0.0
  %3637 = vmatpush1.msra.mxu0 %v3613
  %3638 = vmatprep.subr.mxu0 0.0
  %3639 = vmatpush1.msra.mxu0 %v3614
  %3640 = vmatprep.subr.mxu0 0.0
  %3641 = vmatpush1.msra.mxu0 %v3615
  %3642 = vmatprep.subr.mxu0 0.0
  %3643 = vmatpush1.msra.mxu0 0.0
  %3644 = vmatprep.subr.mxu0 0.0
  %3645 = vmatpush1.msra.mxu0 0.0
  %3646 = vmatprep.subr.mxu0 0.0
  %3647 = vmatpush1.msra.mxu0 0.0
  %3648 = vmatprep.subr.mxu0 0.0
  %3649 = vmatpush1.msra.mxu0 0.0
  %3650 = vmatprep.subr.mxu0 0.0
  %3651 = vmatpush1.msra.mxu0 0.0
  %3652 = vmatprep.subr.mxu0 0.0
  %3653 = vmatpush1.msra.mxu0 0.0
  %3654 = vmatprep.subr.mxu0 0.0
  %3655 = vmatpush1.msra.mxu0 0.0
  %3656 = vmatprep.subr.mxu0 0.0
  %3657 = vmatpush1.msra.mxu0 0.0
  %3658 = vmatprep.subr.mxu0 0.0
  %3659 = vmatpush1.msra.mxu0 0.0
  %3660 = vmatprep.subr.mxu0 0.0
  %3661 = vmatpush1.msra.mxu0 0.0
  %3662 = vmatprep.subr.mxu0 0.0
  %3663 = vmatpush1.msra.mxu0 0.0
  %3664 = vmatprep.subr.mxu0 0.0
  %3665 = vmatpush1.msra.mxu0 0.0
  %3666 = vmatprep.subr.mxu0 0.0
  %3667 = vmatpush1.msra.mxu0 0.0
  %3668 = vmatprep.subr.mxu0 0.0
  %3669 = vmatpush1.msra.mxu0 0.0
  %3670 = vmatprep.subr.mxu0 0.0
  %3671 = vmatpush1.msra.mxu0 0.0
  %3672 = vmatprep.subr.mxu0 0.0
  %3673 = vmatpush1.msra.mxu0 0.0
  %3674 = vmatprep.subr.mxu0 0.0
  %3675 = vmatpush1.msra.mxu0 0.0
  %3676 = vmatprep.subr.mxu0 0.0
  %3677 = vmatpush1.msra.mxu0 0.0
  %3678 = vmatprep.subr.mxu0 0.0
  %3679 = vmatpush1.msra.mxu0 0.0
  %3680 = vmatprep.subr.mxu0 0.0
  %3681 = vmatpush1.msra.mxu0 0.0
  %3682 = vmatprep.subr.mxu0 0.0
  %3683 = vmatpush1.msra.mxu0 0.0
  %3684 = vmatprep.subr.mxu0 0.0
  %3685 = vmatpush1.msra.mxu0 0.0
  %3686 = vmatprep.subr.mxu0 0.0
  %3687 = vmatpush1.msra.mxu0 0.0
  %3688 = vmatprep.subr.mxu0 0.0
  %3689 = vmatpush1.msra.mxu0 0.0
  %3690 = vmatprep.mubr.f32.mxu0 0.0
  %3691 = vmatmul.mubr.f32.gmra.mrb[0].mxu0 %v3621
  %v3692 = vpop.f32.mrb[0].mxu0
  %v3693 = vadd.f32 %v3619, %v3692
  %v3694 = vpop.f32.mrb[0].mxu0
  %3695 = vmatprep.mubr.f32.mxu0 0.0
  %3696 = vmatmul.mubr.f32.gmra.mrb[0].mxu0 %v3624
  %v3697 = vpop.f32.mrb[0].mxu0
  %v3698 = vadd.f32 %v3619, %v3697
  %v3699 = vpop.f32.mrb[0].mxu0
  %3700 = vdwg.mxu0
  %v3701 = vadd.f32 %v3493, %v3693
  %v3702 = vadd.f32 %v3494, %v3698
  %v3703 = vsel %vm50, %v3701, 0.0
  %3704 = vadd.xlane.f32.xlu0 %v3703
  %v3705 = vpop.xlane.xlu0 %3704
  %v3706 = vsel %vm50, %v3702, 0.0
  %3707 = vadd.xlane.f32.xlu0 %v3706
  %v3708 = vpop.xlane.xlu0 %3707
  %v3709 = vmul.f32 %v3705, %v57
  %v3710 = vmul.f32 %v3708, %v57
  %v3711 = vsub.f32 %v3701, %v3709
  %v3712 = vsub.f32 %v3702, %v3710
  %v3713 = vmul.f32 %v3711, %v3711
  %v3714 = vmul.f32 %v3712, %v3712
  %v3715 = vsel %vm50, %v3713, 0.0
  %3716 = vadd.xlane.f32.xlu0 %v3715
  %v3717 = vpop.xlane.xlu0 %3716
  %v3718 = vsel %vm50, %v3714, 0.0
  %3719 = vadd.xlane.f32.xlu0 %v3718
  %v3720 = vpop.xlane.xlu0 %3719
  %v3721 = vmul.f32 %v3717, %v57
  %v3722 = vmul.f32 %v3720, %v57
  %v3723 = vadd.f32 %v3721, 1e-12
  %v3724 = vadd.f32 %v3722, 1e-12
  %v3725 = vrsqrt.pop %v3723
  %v3726 = vrsqrt.pop %v3724
  %v3727 = vmul.f32 %v3711, %v3725
  %v3728 = vmul.f32 %v3712, %v3726
  %v3729 = vlaneseq
  %v3730 = vshrl.u32 %v3729, 7
  %v3731 = vsub.s32 4, %v3730
  %v3732 = vrot.slane %v1922, %v3731
  %v3733 = vmul.f32 %v3727, %v3732
  %v3734 = vmul.f32 %v3728, %v3732
  %v3735 = vlaneseq
  %v3736 = vshrl.u32 %v3735, 7
  %v3737 = vsub.s32 5, %v3736
  %v3738 = vrot.slane %v1922, %v3737
  %v3739 = vadd.f32 %v3733, %v3738
  %v3740 = vadd.f32 %v3734, %v3738
  %v3741 = vld [vmem:[%s11] sm:$0x7]
  %v3742 = vld [vmem:[%s10] sm:$0xff]
  %v3743 = vld [vmem:[%s10 + $0x8] sm:$0xff]
  %v3744 = vld [vmem:[%s10 + $0x10] sm:$0xff]
  %v3745 = vld [vmem:[%s10 + $0x18] sm:$0xff]
  %v3746 = vlaneseq
  %v3747 = vshrl.u32 %v3746, 7
  %v3748 = vsub.s32 0, %v3747
  %v3749 = vrot.slane %v3741, %v3748
  %v3751 = vsel %vm50, %v3739, 0
  %v3754 = vsel %vm50, %v3740, 0
  %3756 = vmatprep.subr.mxu0 0.0
  %3757 = vmatpush1.msra.mxu0 %v3742
  %3758 = vmatprep.subr.mxu0 0.0
  %3759 = vmatpush1.msra.mxu0 %v3743
  %3760 = vmatprep.subr.mxu0 0.0
  %3761 = vmatpush1.msra.mxu0 %v3744
  %3762 = vmatprep.subr.mxu0 0.0
  %3763 = vmatpush1.msra.mxu0 %v3745
  %3764 = vmatprep.subr.mxu0 0.0
  %3765 = vmatpush1.msra.mxu0 0.0
  %3766 = vmatprep.subr.mxu0 0.0
  %3767 = vmatpush1.msra.mxu0 0.0
  %3768 = vmatprep.subr.mxu0 0.0
  %3769 = vmatpush1.msra.mxu0 0.0
  %3770 = vmatprep.subr.mxu0 0.0
  %3771 = vmatpush1.msra.mxu0 0.0
  %3772 = vmatprep.subr.mxu0 0.0
  %3773 = vmatpush1.msra.mxu0 0.0
  %3774 = vmatprep.subr.mxu0 0.0
  %3775 = vmatpush1.msra.mxu0 0.0
  %3776 = vmatprep.subr.mxu0 0.0
  %3777 = vmatpush1.msra.mxu0 0.0
  %3778 = vmatprep.subr.mxu0 0.0
  %3779 = vmatpush1.msra.mxu0 0.0
  %3780 = vmatprep.subr.mxu0 0.0
  %3781 = vmatpush1.msra.mxu0 0.0
  %3782 = vmatprep.subr.mxu0 0.0
  %3783 = vmatpush1.msra.mxu0 0.0
  %3784 = vmatprep.subr.mxu0 0.0
  %3785 = vmatpush1.msra.mxu0 0.0
  %3786 = vmatprep.subr.mxu0 0.0
  %3787 = vmatpush1.msra.mxu0 0.0
  %3788 = vmatprep.subr.mxu0 0.0
  %3789 = vmatpush1.msra.mxu0 0.0
  %3790 = vmatprep.subr.mxu0 0.0
  %3791 = vmatpush1.msra.mxu0 0.0
  %3792 = vmatprep.subr.mxu0 0.0
  %3793 = vmatpush1.msra.mxu0 0.0
  %3794 = vmatprep.subr.mxu0 0.0
  %3795 = vmatpush1.msra.mxu0 0.0
  %3796 = vmatprep.subr.mxu0 0.0
  %3797 = vmatpush1.msra.mxu0 0.0
  %3798 = vmatprep.subr.mxu0 0.0
  %3799 = vmatpush1.msra.mxu0 0.0
  %3800 = vmatprep.subr.mxu0 0.0
  %3801 = vmatpush1.msra.mxu0 0.0
  %3802 = vmatprep.subr.mxu0 0.0
  %3803 = vmatpush1.msra.mxu0 0.0
  %3804 = vmatprep.subr.mxu0 0.0
  %3805 = vmatpush1.msra.mxu0 0.0
  %3806 = vmatprep.subr.mxu0 0.0
  %3807 = vmatpush1.msra.mxu0 0.0
  %3808 = vmatprep.subr.mxu0 0.0
  %3809 = vmatpush1.msra.mxu0 0.0
  %3810 = vmatprep.subr.mxu0 0.0
  %3811 = vmatpush1.msra.mxu0 0.0
  %3812 = vmatprep.subr.mxu0 0.0
  %3813 = vmatpush1.msra.mxu0 0.0
  %3814 = vmatprep.subr.mxu0 0.0
  %3815 = vmatpush1.msra.mxu0 0.0
  %3816 = vmatprep.subr.mxu0 0.0
  %3817 = vmatpush1.msra.mxu0 0.0
  %3818 = vmatprep.subr.mxu0 0.0
  %3819 = vmatpush1.msra.mxu0 0.0
  %3820 = vmatprep.mubr.f32.mxu0 0.0
  %3821 = vmatmul.mubr.f32.gmra.mrb[0].mxu0 %v3751
  %v3822 = vpop.f32.mrb[0].mxu0
  %v3823 = vadd.f32 %v3749, %v3822
  %v3824 = vpop.f32.mrb[0].mxu0
  %3825 = vmatprep.mubr.f32.mxu0 0.0
  %3826 = vmatmul.mubr.f32.gmra.mrb[0].mxu0 %v3754
  %v3827 = vpop.f32.mrb[0].mxu0
  %v3828 = vadd.f32 %v3749, %v3827
  %v3829 = vpop.f32.mrb[0].mxu0
  %3830 = vdwg.mxu0
  %v3831 = vtanh.pop %v3823
  %v3832 = vtanh.pop %v3828
  %v3833 = vsel %vm50, %v3831, 0.0
  %3834 = vadd.xlane.f32.xlu0 %v3833
  %v3835 = vpop.xlane.xlu0 %3834
  %v3836 = vsel %vm50, %v3832, 0.0
  %3837 = vadd.xlane.f32.xlu0 %v3836
  %v3838 = vpop.xlane.xlu0 %3837
  %v3839 = vmul.f32 %v3835, %v57
  %v3840 = vmul.f32 %v3838, %v57
  %v3841 = vsub.f32 %v3831, %v3839
  %v3842 = vsub.f32 %v3832, %v3840
  %v3843 = vmul.f32 %v3841, %v3841
  %v3844 = vmul.f32 %v3842, %v3842
  %v3845 = vsel %vm50, %v3843, 0.0
  %3846 = vadd.xlane.f32.xlu0 %v3845
  %v3847 = vpop.xlane.xlu0 %3846
  %v3848 = vsel %vm50, %v3844, 0.0
  %3849 = vadd.xlane.f32.xlu0 %v3848
  %v3850 = vpop.xlane.xlu0 %3849
  %v3851 = vmul.f32 %v3847, %v57
  %v3852 = vmul.f32 %v3850, %v57
  %v3853 = vadd.f32 %v3851, 1e-05
  %v3854 = vadd.f32 %v3852, 1e-05
  %v3855 = vrsqrt.pop %v3853
  %v3856 = vrsqrt.pop %v3854
  %v3857 = vmul.f32 %v3841, %v3855
  %v3858 = vmul.f32 %v3842, %v3856
  %v3859 = vlaneseq
  %v3860 = vshrl.u32 %v3859, 7
  %v3861 = vsub.s32 1, %v3860
  %v3862 = vrot.slane %v3741, %v3861
  %v3863 = vmul.f32 %v3857, %v3862
  %v3864 = vmul.f32 %v3858, %v3862
  %v3865 = vlaneseq
  %v3866 = vshrl.u32 %v3865, 7
  %v3867 = vsub.s32 2, %v3866
  %v3868 = vrot.slane %v3741, %v3867
  %v3869 = vadd.f32 %v3863, %v3868
  %v3870 = vadd.f32 %v3864, %v3868
  %v3871 = vld [vmem:[%s12] sm:$0xff]
  %v3872 = vld [vmem:[%s12 + $0x8] sm:$0xff]
  %v3873 = vld [vmem:[%s12 + $0x10] sm:$0xff]
  %v3874 = vld [vmem:[%s12 + $0x18] sm:$0xff]
  %v3875 = vld [vmem:[%s13] sm:$0x1]
  %v3877 = vlaneseq
  %v3878 = vshrl.u32 %v3877, 7
  %v3879 = vsub.s32 0, %v3878
  %v3880 = vrot.slane %v3875, %v3879
  %v3883 = vsel %vm50, %v3869, 0
  %v3886 = vsel %vm50, %v3870, 0
  %3888 = vmatprep.subr.mxu0 0.0
  %3889 = vmatpush1.msra.mxu0 %v3871
  %3890 = vmatprep.subr.mxu0 0.0
  %3891 = vmatpush1.msra.mxu0 %v3872
  %3892 = vmatprep.subr.mxu0 0.0
  %3893 = vmatpush1.msra.mxu0 %v3873
  %3894 = vmatprep.subr.mxu0 0.0
  %3895 = vmatpush1.msra.mxu0 %v3874
  %3896 = vmatprep.subr.mxu0 0.0
  %3897 = vmatpush1.msra.mxu0 0.0
  %3898 = vmatprep.subr.mxu0 0.0
  %3899 = vmatpush1.msra.mxu0 0.0
  %3900 = vmatprep.subr.mxu0 0.0
  %3901 = vmatpush1.msra.mxu0 0.0
  %3902 = vmatprep.subr.mxu0 0.0
  %3903 = vmatpush1.msra.mxu0 0.0
  %3904 = vmatprep.subr.mxu0 0.0
  %3905 = vmatpush1.msra.mxu0 0.0
  %3906 = vmatprep.subr.mxu0 0.0
  %3907 = vmatpush1.msra.mxu0 0.0
  %3908 = vmatprep.subr.mxu0 0.0
  %3909 = vmatpush1.msra.mxu0 0.0
  %3910 = vmatprep.subr.mxu0 0.0
  %3911 = vmatpush1.msra.mxu0 0.0
  %3912 = vmatprep.subr.mxu0 0.0
  %3913 = vmatpush1.msra.mxu0 0.0
  %3914 = vmatprep.subr.mxu0 0.0
  %3915 = vmatpush1.msra.mxu0 0.0
  %3916 = vmatprep.subr.mxu0 0.0
  %3917 = vmatpush1.msra.mxu0 0.0
  %3918 = vmatprep.subr.mxu0 0.0
  %3919 = vmatpush1.msra.mxu0 0.0
  %3920 = vmatprep.subr.mxu0 0.0
  %3921 = vmatpush1.msra.mxu0 0.0
  %3922 = vmatprep.subr.mxu0 0.0
  %3923 = vmatpush1.msra.mxu0 0.0
  %3924 = vmatprep.subr.mxu0 0.0
  %3925 = vmatpush1.msra.mxu0 0.0
  %3926 = vmatprep.subr.mxu0 0.0
  %3927 = vmatpush1.msra.mxu0 0.0
  %3928 = vmatprep.subr.mxu0 0.0
  %3929 = vmatpush1.msra.mxu0 0.0
  %3930 = vmatprep.subr.mxu0 0.0
  %3931 = vmatpush1.msra.mxu0 0.0
  %3932 = vmatprep.subr.mxu0 0.0
  %3933 = vmatpush1.msra.mxu0 0.0
  %3934 = vmatprep.subr.mxu0 0.0
  %3935 = vmatpush1.msra.mxu0 0.0
  %3936 = vmatprep.subr.mxu0 0.0
  %3937 = vmatpush1.msra.mxu0 0.0
  %3938 = vmatprep.subr.mxu0 0.0
  %3939 = vmatpush1.msra.mxu0 0.0
  %3940 = vmatprep.subr.mxu0 0.0
  %3941 = vmatpush1.msra.mxu0 0.0
  %3942 = vmatprep.subr.mxu0 0.0
  %3943 = vmatpush1.msra.mxu0 0.0
  %3944 = vmatprep.subr.mxu0 0.0
  %3945 = vmatpush1.msra.mxu0 0.0
  %3946 = vmatprep.subr.mxu0 0.0
  %3947 = vmatpush1.msra.mxu0 0.0
  %3948 = vmatprep.subr.mxu0 0.0
  %3949 = vmatpush1.msra.mxu0 0.0
  %3950 = vmatprep.subr.mxu0 0.0
  %3951 = vmatpush1.msra.mxu0 0.0
  %3952 = vmatprep.mubr.f32.mxu0 0.0
  %3953 = vmatmul.mubr.f32.gmra.mrb[0].mxu0 %v3883
  %v3954 = vpop.f32.mrb[0].mxu0
  %v3955 = vadd.f32 %v3880, %v3954
  %v3956 = vpop.f32.mrb[0].mxu0
  %3957 = vmatprep.mubr.f32.mxu0 0.0
  %3958 = vmatmul.mubr.f32.gmra.mrb[0].mxu0 %v3886
  %v3959 = vpop.f32.mrb[0].mxu0
  %v3960 = vadd.f32 %v3880, %v3959
  %v3961 = vpop.f32.mrb[0].mxu0
  %3962 = vdwg.mxu0
  %3963 = vst [vmem:[%s14] sm:$0xff] %v3955
  %3964 = vst [vmem:[%s14 + $0x8] sm:$0xff] %v3960
  // Predicated region
  $region58: #{forward.1} parent=0 // pred_check
    _
  $region59: #{forward.1} parent=0 // pred_check_branch
    %3966 = sbr.rel (0) target = $region61
  $region60: #{forward.1} parent=0 // pred_region
    _
  $region61: #{forward.1} parent=0 // pred_fallthru
    _
  // Predicated region
  $region62: #{forward.1} parent=0 // pred_check
    _
  $region63: #{forward.1} parent=0 // pred_check_branch
    %3968 = sbr.rel (0) target = $region65
  $region64: #{forward.1} parent=0 // pred_region
    _
  $region65: #{forward.1} parent=0 // pred_fallthru
    _

</llo_original>
